<compile_context>
chip_gen: v6e
topology: v6e:2x2x1
jax: 0.10.0
libtpu: 0.0.40
codegen_flags: <defaults>
</compile_context>

<pallas_src>
import math

import jax
import jax.numpy as jnp
from jax.experimental import pallas as pl
from jax.experimental.pallas import tpu as pltpu


def _sigmoid(z):
    # logistic(z) == 0.5 * (1 + tanh(z / 2)); tanh is an EUP op (separate VLIW
    # slot) and this form never overflows exp for large |z|.
    return 0.5 * (jnp.tanh(0.5 * z) + 1.0)


def _make_fused_kernel(num_layers, seq_chunk, hidden):
    """Builds the fused multi-layer peephole-LSTM kernel for static L / Tc / H."""
    L, Tc, H = num_layers, seq_chunk, hidden

    def kernel(*refs):
        x_ref = refs[0]                               # (TB, Tc, I)
        w = refs[1:1 + 3 * L]                         # per layer: wx, wh, packed(bias/peep)
        h0_ref, c0_ref = refs[1 + 3 * L], refs[2 + 3 * L]
        y_ref, hn_ref, cn_ref = refs[3 + 3 * L], refs[4 + 3 * L], refs[5 + 3 * L]

        t = pl.program_id(1)                          # time-chunk axis (sequential)

        # h/c carries live in the grid-resident hn/cn output blocks.
        @pl.when(t == 0)
        def _init():
            hn_ref[...] = h0_ref[...]
            cn_ref[...] = c0_ref[...]

        xin = x_ref[...]                              # (TB, Tc, I)
        TB = xin.shape[0]
        # Per-timestep inputs for layer 0 (time-major list of (TB, in)).
        seq_in = [xin[:, tt, :] for tt in range(Tc)]

        for l in range(L):
            wx_ref, wh_ref, pk_ref = w[3 * l], w[3 * l + 1], w[3 * l + 2]
            bias = pk_ref[0:1, :]                     # (1, 4H)
            wci = pk_ref[1:2, :H]                     # (1, H)
            wcf = pk_ref[2:3, :H]
            wco = pk_ref[3:4, :H]
            wh = wh_ref[...]                          # (H, 4H), VMEM-resident

            h = hn_ref[l]                             # (TB, H) carry from prev chunk
            c = cn_ref[l]

            # ---- hoisted input projection: ONE big matmul for the whole chunk.
            in_flat = jnp.concatenate(seq_in, axis=0)                 # (Tc*TB, in)
            gx = jnp.dot(in_flat, wx_ref[...],
                         preferred_element_type=jnp.float32) + bias   # (Tc*TB, 4H)

            # ---- serial recurrence: only h @ Wh + gate math per timestep.
            outs = []
            for tt in range(Tc):
                g = gx[tt * TB:(tt + 1) * TB] + jnp.dot(
                    h, wh, preferred_element_type=jnp.float32)        # (TB, 4H)
                zi = g[:, 0 * H:1 * H]
                zf = g[:, 1 * H:2 * H]
                zg = g[:, 2 * H:3 * H]
                zo = g[:, 3 * H:4 * H]
                i_g = _sigmoid(zi + wci * c)
                f_g = _sigmoid(zf + wcf * c)
                g_g = jnp.tanh(zg)
                c = f_g * c + i_g * g_g
                o_g = _sigmoid(zo + wco * c)
                h = o_g * jnp.tanh(c)
                outs.append(h)

            hn_ref[l] = h
            cn_ref[l] = c
            seq_in = outs                             # next layer consumes this h-seq

        # Lane-dense output slab: column tt*H + j <-> (time tt, feature j).
        y_ref[...] = jnp.concatenate(seq_in, axis=-1).astype(y_ref.dtype)

    return kernel


def peephole_lstm_forward(x, params, init_states=None, batch_first=True,
                          seq_chunk=None, batch_tile=None):
    """Pallas equivalent of PeepholeLSTM.forward(x, init_states)."""
    if not batch_first:
        x = jnp.transpose(x, (1, 0, 2))               # module works internally batch-first
    x = x.astype(jnp.float32)
    B, S, I = x.shape
    L = len(params)
    H = params[0][1].shape[0]                         # wh: (H, 4H)

    # Time-chunk size (Tc) and batch tile (TB).
    if seq_chunk is not None:
        Tc = seq_chunk
    elif S <= 32:
        Tc = S
    elif S % 16 == 0:
        Tc = 16
    elif S % 8 == 0:
        Tc = 8
    else:
        Tc = S
    TB = B if batch_tile is None else batch_tile

    if S % Tc != 0:
        raise ValueError(f"seq_chunk {Tc} must divide seq length {S}")
    if B % TB != 0:
        raise ValueError(f"batch_tile {TB} must divide batch {B}")
    if not (Tc == S or Tc % 8 == 0):
        raise ValueError("time chunk must be a multiple of 8 (or the full sequence)")
    if not (TB == B or TB % 8 == 0):
        raise ValueError("batch tile must be a multiple of 8 (or the full batch)")
    if not (Tc == S or (Tc * H) % 128 == 0):
        raise ValueError("Tc*H must be a multiple of 128 for the lane-dense output")

    if init_states is None:
        h0 = jnp.zeros((L, B, H), jnp.float32)
        c0 = jnp.zeros((L, B, H), jnp.float32)
    else:
        h_init, c_init = init_states
        h0 = jnp.stack([jnp.asarray(h_init[l], jnp.float32) for l in range(L)], axis=0)
        c0 = jnp.stack([jnp.asarray(c_init[l], jnp.float32) for l in range(L)], axis=0)

    # Pack per-layer bias + peephole vectors into a single (8, 4H) block.
    weight_args = []
    weight_specs = []
    for l in range(L):
        wx, wh, b, wci, wcf, wco = params[l]
        in_l = wx.shape[0]
        pk = jnp.zeros((8, 4 * H), jnp.float32)
        pk = pk.at[0, :].set(jnp.asarray(b, jnp.float32).reshape(4 * H))
        pk = pk.at[1, :H].set(jnp.asarray(wci, jnp.float32).reshape(H))
        pk = pk.at[2, :H].set(jnp.asarray(wcf, jnp.float32).reshape(H))
        pk = pk.at[3, :H].set(jnp.asarray(wco, jnp.float32).reshape(H))
        weight_args += [jnp.asarray(wx, jnp.float32),
                        jnp.asarray(wh, jnp.float32), pk]
        weight_specs += [
            pl.BlockSpec((in_l, 4 * H), lambda bb, tt: (0, 0)),   # Wx  (VMEM-resident)
            pl.BlockSpec((H, 4 * H), lambda bb, tt: (0, 0)),      # Wh  (VMEM-resident)
            pl.BlockSpec((8, 4 * H), lambda bb, tt: (0, 0)),      # bias+peepholes
        ]

    grid = (B // TB, S // Tc)
    kernel = _make_fused_kernel(L, Tc, H)

    y_flat, h_n, c_n = pl.pallas_call(
        kernel,
        grid=grid,
        in_specs=(
            [pl.BlockSpec((TB, Tc, I), lambda bb, tt: (bb, tt, 0))]   # x chunk
            + weight_specs
            + [pl.BlockSpec((L, TB, H), lambda bb, tt: (0, bb, 0)),   # h0
               pl.BlockSpec((L, TB, H), lambda bb, tt: (0, bb, 0))]   # c0
        ),
        out_specs=[
            pl.BlockSpec((TB, Tc * H), lambda bb, tt: (bb, tt)),      # lane-dense y slab
            pl.BlockSpec((L, TB, H), lambda bb, tt: (0, bb, 0)),      # h_n (resident carry)
            pl.BlockSpec((L, TB, H), lambda bb, tt: (0, bb, 0)),      # c_n (resident carry)
        ],
        out_shape=[
            jax.ShapeDtypeStruct((B, S * H), x.dtype),
            jax.ShapeDtypeStruct((L, B, H), jnp.float32),
            jax.ShapeDtypeStruct((L, B, H), jnp.float32),
        ],
        compiler_params=pltpu.CompilerParams(
            dimension_semantics=("parallel", "arbitrary")),           # batch || , time serial
    )(x, *weight_args, h0, c0)

    output = y_flat.reshape(B, S, H)                  # free: splits the minor dim back out
    if not batch_first:
        output = jnp.transpose(output, (1, 0, 2))
    return output, (h_n, c_n)


def init_peephole_lstm_params(key, input_size, hidden_size, num_layers=1,
                              dtype=jnp.float32):
    """Per-layer params: (Wx (I,4H), Wh (H,4H), b (1,4H), W_ci, W_cf, W_co (1,H)).

    Linear weights/biases ~ U(-1/sqrt(fan_in), 1/sqrt(fan_in)) (nn.Linear default),
    peephole vectors ~ N(0,1) (torch.randn). Gate order along 4H: [i, f, g, o].
    """
    params = []
    for l in range(num_layers):
        in_sz = input_size if l == 0 else hidden_size
        key, k0, k1, k2, k3, k4, k5, k6 = jax.random.split(key, 8)
        bx = 1.0 / math.sqrt(in_sz)
        bh = 1.0 / math.sqrt(hidden_size)
        wx = jax.random.uniform(k0, (in_sz, 4 * hidden_size), dtype, -bx, bx)
        b_x = jax.random.uniform(k1, (1, 4 * hidden_size), dtype, -bx, bx)
        wh = jax.random.uniform(k2, (hidden_size, 4 * hidden_size), dtype, -bh, bh)
        b_h = jax.random.uniform(k3, (1, 4 * hidden_size), dtype, -bh, bh)
        b = b_x + b_h                                 # x- and h-Linear biases fold together
        wci = jax.random.normal(k4, (1, hidden_size), dtype)
        wcf = jax.random.normal(k5, (1, hidden_size), dtype)
        wco = jax.random.normal(k6, (1, hidden_size), dtype)
        params.append((wx, wh, b, wci, wcf, wco))
    return params


def peephole_lstm_reference(x, params, init_states=None, batch_first=True):
    """Pure-JAX reference mirroring PeepholeLSTM.forward."""
    if batch_first:
        x = jnp.transpose(x, (1, 0, 2))
    S, B, _ = x.shape
    num_layers = len(params)
    H = params[0][1].shape[0]
    if init_states is None:
        h = [jnp.zeros((B, H), jnp.float32) for _ in range(num_layers)]
        c = [jnp.zeros((B, H), jnp.float32) for _ in range(num_layers)]
    else:
        h0, c0 = init_states
        h = [h0[l] for l in range(num_layers)]
        c = [c0[l] for l in range(num_layers)]
    outs = []
    for t in range(S):
        x_t = x[t]
        for l in range(num_layers):
            if l > 0:
                x_t = h[l - 1]
            wx, wh, b, wci, wcf, wco = params[l]
            gates = x_t @ wx + h[l] @ wh + b
            zi, zf, zg, zo = jnp.split(gates, 4, axis=-1)
            i_g = jax.nn.sigmoid(zi + wci * c[l])
            f_g = jax.nn.sigmoid(zf + wcf * c[l])
            g_g = jnp.tanh(zg)
            c_nx = f_g * c[l] + i_g * g_g
            o_g = jax.nn.sigmoid(zo + wco * c_nx)
            h[l] = o_g * jnp.tanh(c_nx)
            c[l] = c_nx
        outs.append(h[-1])
    output = jnp.stack(outs, axis=0)
    if batch_first:
        output = jnp.transpose(output, (1, 0, 2))
    return output, (jnp.stack(h, 0), jnp.stack(c, 0))


if __name__ == "__main__":
    key = jax.random.PRNGKey(0)
    kp, kx = jax.random.split(key)

    input_size = 16
    hidden_size = 32
    num_layers = 2
    batch = 8
    seq = 8

    params = init_peephole_lstm_params(kp, input_size, hidden_size, num_layers)
    x = jax.random.normal(kx, (batch, seq, input_size), dtype=jnp.float32)

    out, (h_n, c_n) = peephole_lstm_forward(x, params)   # init_states=None, batch_first
    out = jax.block_until_ready(out)
    h_n = jax.block_until_ready(h_n)
    c_n = jax.block_until_ready(c_n)

    ref_out, (ref_h, ref_c) = peephole_lstm_reference(x, params)

    assert out.shape == (batch, seq, hidden_size), out.shape
    assert h_n.shape == (num_layers, batch, hidden_size), h_n.shape
    assert c_n.shape == (num_layers, batch, hidden_size), c_n.shape
    assert jnp.allclose(out, ref_out, atol=1e-4, rtol=1e-4), \
        float(jnp.max(jnp.abs(out - ref_out)))
    assert jnp.allclose(h_n, ref_h, atol=1e-4, rtol=1e-4), \
        float(jnp.max(jnp.abs(h_n - ref_h)))
    assert jnp.allclose(c_n, ref_c, atol=1e-4, rtol=1e-4), \
        float(jnp.max(jnp.abs(c_n - ref_c)))

    print("KERNEL_OK")
</pallas_src>

<mosaic_0001>
module attributes {stable_mosaic.version = 11 : i64} {
  func.func @kernel(%arg0: i32, %arg1: i32, %arg2: memref<8x8x16xf32, #tpu.memory_space<vmem>>, %arg3: memref<16x128xf32, #tpu.memory_space<vmem>>, %arg4: memref<32x128xf32, #tpu.memory_space<vmem>>, %arg5: memref<8x128xf32, #tpu.memory_space<vmem>>, %arg6: memref<32x128xf32, #tpu.memory_space<vmem>>, %arg7: memref<32x128xf32, #tpu.memory_space<vmem>>, %arg8: memref<8x128xf32, #tpu.memory_space<vmem>>, %arg9: memref<2x8x32xf32, #tpu.memory_space<vmem>>, %arg10: memref<2x8x32xf32, #tpu.memory_space<vmem>>, %arg11: memref<8x256xf32, #tpu.memory_space<vmem>>, %arg12: memref<2x8x32xf32, #tpu.memory_space<vmem>>, %arg13: memref<2x8x32xf32, #tpu.memory_space<vmem>>) attributes {dimension_semantics = [#tpu.dimension_semantics<parallel>, #tpu.dimension_semantics<arbitrary>], iteration_bounds = array<i64: 1, 1>, scalar_prefetch = 0 : i64, scratch_operands = 0 : i64, tpu.core_type = #tpu.core_type<tc>, window_params = [{transform_indices = @transform_0, window_bounds = array<i64: 8, 8, 16>}, {pipeline_mode = #tpu.pipeline_mode<synchronous>, transform_indices = @transform_1, window_bounds = array<i64: 16, 128>}, {pipeline_mode = #tpu.pipeline_mode<synchronous>, transform_indices = @transform_2, window_bounds = array<i64: 32, 128>}, {pipeline_mode = #tpu.pipeline_mode<synchronous>, transform_indices = @transform_3, window_bounds = array<i64: 8, 128>}, {pipeline_mode = #tpu.pipeline_mode<synchronous>, transform_indices = @transform_4, window_bounds = array<i64: 32, 128>}, {pipeline_mode = #tpu.pipeline_mode<synchronous>, transform_indices = @transform_5, window_bounds = array<i64: 32, 128>}, {pipeline_mode = #tpu.pipeline_mode<synchronous>, transform_indices = @transform_6, window_bounds = array<i64: 8, 128>}, {transform_indices = @transform_7, window_bounds = array<i64: 2, 8, 32>}, {transform_indices = @transform_8, window_bounds = array<i64: 2, 8, 32>}, {transform_indices = @transform_9, window_bounds = array<i64: 8, 256>}, {transform_indices = @transform_10, window_bounds = array<i64: 2, 8, 32>}, {transform_indices = @transform_11, window_bounds = array<i64: 2, 8, 32>}]} {
    %c0_i32 = arith.constant 0 : i32
    %0 = arith.cmpi eq, %arg1, %c0_i32 : i32
    %1 = arith.extui %0 : i1 to i32
    %c0_i32_0 = arith.constant 0 : i32
    %2 = arith.cmpi ne, %1, %c0_i32_0 : i32
    scf.if %2 {
      %c0_211 = arith.constant 0 : index
      %c0_212 = arith.constant 0 : index
      %c0_213 = arith.constant 0 : index
      %750 = vector.load %arg9[%c0_211, %c0_212, %c0_213] : memref<2x8x32xf32, #tpu.memory_space<vmem>>, vector<2x8x32xf32>
      %c0_214 = arith.constant 0 : index
      %c0_215 = arith.constant 0 : index
      %c0_216 = arith.constant 0 : index
      %751 = vector.load %arg12[%c0_214, %c0_215, %c0_216] : memref<2x8x32xf32, #tpu.memory_space<vmem>>, vector<2x8x32xf32>
      tpu.vector_store %arg12[%c0_214, %c0_215, %c0_216], %750 {strides = array<i32>} : memref<2x8x32xf32, #tpu.memory_space<vmem>>, vector<2x8x32xf32>,
      %c0_217 = arith.constant 0 : index
      %c0_218 = arith.constant 0 : index
      %c0_219 = arith.constant 0 : index
      %752 = vector.load %arg10[%c0_217, %c0_218, %c0_219] : memref<2x8x32xf32, #tpu.memory_space<vmem>>, vector<2x8x32xf32>
      %c0_220 = arith.constant 0 : index
      %c0_221 = arith.constant 0 : index
      %c0_222 = arith.constant 0 : index
      %753 = vector.load %arg13[%c0_220, %c0_221, %c0_222] : memref<2x8x32xf32, #tpu.memory_space<vmem>>, vector<2x8x32xf32>
      tpu.vector_store %arg13[%c0_220, %c0_221, %c0_222], %752 {strides = array<i32>} : memref<2x8x32xf32, #tpu.memory_space<vmem>>, vector<2x8x32xf32>,
    } else {
    }
    %c0 = arith.constant 0 : index
    %c0_1 = arith.constant 0 : index
    %c0_2 = arith.constant 0 : index
    %3 = vector.load %arg2[%c0, %c0_1, %c0_2] : memref<8x8x16xf32, #tpu.memory_space<vmem>>, vector<8x8x16xf32>
    %4 = vector.extract_strided_slice %3 {offsets = [0, 0, 0], sizes = [8, 1, 16], strides = [1, 1, 1]} : vector<8x8x16xf32> to vector<8x1x16xf32>
    %5 = vector.shape_cast %4 : vector<8x1x16xf32> to vector<8x16xf32>
    %6 = vector.extract_strided_slice %3 {offsets = [0, 1, 0], sizes = [8, 1, 16], strides = [1, 1, 1]} : vector<8x8x16xf32> to vector<8x1x16xf32>
    %7 = vector.shape_cast %6 : vector<8x1x16xf32> to vector<8x16xf32>
    %8 = vector.extract_strided_slice %3 {offsets = [0, 2, 0], sizes = [8, 1, 16], strides = [1, 1, 1]} : vector<8x8x16xf32> to vector<8x1x16xf32>
    %9 = vector.shape_cast %8 : vector<8x1x16xf32> to vector<8x16xf32>
    %10 = vector.extract_strided_slice %3 {offsets = [0, 3, 0], sizes = [8, 1, 16], strides = [1, 1, 1]} : vector<8x8x16xf32> to vector<8x1x16xf32>
    %11 = vector.shape_cast %10 : vector<8x1x16xf32> to vector<8x16xf32>
    %12 = vector.extract_strided_slice %3 {offsets = [0, 4, 0], sizes = [8, 1, 16], strides = [1, 1, 1]} : vector<8x8x16xf32> to vector<8x1x16xf32>
    %13 = vector.shape_cast %12 : vector<8x1x16xf32> to vector<8x16xf32>
    %14 = vector.extract_strided_slice %3 {offsets = [0, 5, 0], sizes = [8, 1, 16], strides = [1, 1, 1]} : vector<8x8x16xf32> to vector<8x1x16xf32>
    %15 = vector.shape_cast %14 : vector<8x1x16xf32> to vector<8x16xf32>
    %16 = vector.extract_strided_slice %3 {offsets = [0, 6, 0], sizes = [8, 1, 16], strides = [1, 1, 1]} : vector<8x8x16xf32> to vector<8x1x16xf32>
    %17 = vector.shape_cast %16 : vector<8x1x16xf32> to vector<8x16xf32>
    %18 = vector.extract_strided_slice %3 {offsets = [0, 7, 0], sizes = [8, 1, 16], strides = [1, 1, 1]} : vector<8x8x16xf32> to vector<8x1x16xf32>
    %19 = vector.shape_cast %18 : vector<8x1x16xf32> to vector<8x16xf32>
    %c0_3 = arith.constant 0 : index
    %c0_4 = arith.constant 0 : index
    %20 = vector.load %arg5[%c0_3, %c0_4] : memref<8x128xf32, #tpu.memory_space<vmem>>, vector<1x128xf32>
    %c1 = arith.constant 1 : index
    %c0_5 = arith.constant 0 : index
    %21 = vector.load %arg5[%c1, %c0_5] : memref<8x128xf32, #tpu.memory_space<vmem>>, vector<1x32xf32>
    %c2 = arith.constant 2 : index
    %c0_6 = arith.constant 0 : index
    %22 = vector.load %arg5[%c2, %c0_6] : memref<8x128xf32, #tpu.memory_space<vmem>>, vector<1x32xf32>
    %c3 = arith.constant 3 : index
    %c0_7 = arith.constant 0 : index
    %23 = vector.load %arg5[%c3, %c0_7] : memref<8x128xf32, #tpu.memory_space<vmem>>, vector<1x32xf32>
    %c0_8 = arith.constant 0 : index
    %c0_9 = arith.constant 0 : index
    %24 = vector.load %arg4[%c0_8, %c0_9] : memref<32x128xf32, #tpu.memory_space<vmem>>, vector<32x128xf32>
    %c0_10 = arith.constant 0 : index
    %c0_11 = arith.constant 0 : index
    %c0_12 = arith.constant 0 : index
    %25 = vector.load %arg12[%c0_10, %c0_11, %c0_12] : memref<2x8x32xf32, #tpu.memory_space<vmem>>, vector<1x8x32xf32>
    %26 = vector.shape_cast %25 : vector<1x8x32xf32> to vector<8x32xf32>
    %c0_13 = arith.constant 0 : index
    %c0_14 = arith.constant 0 : index
    %c0_15 = arith.constant 0 : index
    %27 = vector.load %arg13[%c0_13, %c0_14, %c0_15] : memref<2x8x32xf32, #tpu.memory_space<vmem>>, vector<1x8x32xf32>
    %28 = vector.shape_cast %27 : vector<1x8x32xf32> to vector<8x32xf32>
    %29 = tpu.concatenate %5, %7, %9, %11, %13, %15, %17, %19 in 0 : vector<8x16xf32>, vector<8x16xf32>, vector<8x16xf32>, vector<8x16xf32>, vector<8x16xf32>, vector<8x16xf32>, vector<8x16xf32>, vector<8x16xf32> -> vector<64x16xf32>
    %c0_16 = arith.constant 0 : index
    %c0_17 = arith.constant 0 : index
    %30 = vector.load %arg3[%c0_16, %c0_17] : memref<16x128xf32, #tpu.memory_space<vmem>>, vector<16x128xf32>
    %cst = arith.constant dense<0.000000e+00> : vector<64x128xf32>
    %31 = tpu.matmul %29, %30, %cst {dimension_numbers = #tpu.dot_dimension_numbers<[1], [0], [0], [1], [0, 0, 1, 1], [], []>} : vector<64x16xf32>, vector<16x128xf32>, vector<64x128xf32> -> vector<64x128xf32>
    %32 = vector.broadcast %20 : vector<1x128xf32> to vector<64x128xf32>
    %33 = arith.addf %31, %32 : vector<64x128xf32>
    %34 = vector.extract_strided_slice %33 {offsets = [0, 0], sizes = [8, 128], strides = [1, 1]} : vector<64x128xf32> to vector<8x128xf32>
    %cst_18 = arith.constant dense<0.000000e+00> : vector<8x128xf32>
    %35 = tpu.matmul %26, %24, %cst_18 {dimension_numbers = #tpu.dot_dimension_numbers<[1], [0], [0], [1], [0, 0, 1, 1], [], []>} : vector<8x32xf32>, vector<32x128xf32>, vector<8x128xf32> -> vector<8x128xf32>
    %36 = arith.addf %34, %35 : vector<8x128xf32>
    %37 = vector.extract_strided_slice %36 {offsets = [0, 0], sizes = [8, 32], strides = [1, 1]} : vector<8x128xf32> to vector<8x32xf32>
    %38 = vector.extract_strided_slice %36 {offsets = [0, 32], sizes = [8, 32], strides = [1, 1]} : vector<8x128xf32> to vector<8x32xf32>
    %39 = vector.extract_strided_slice %36 {offsets = [0, 64], sizes = [8, 32], strides = [1, 1]} : vector<8x128xf32> to vector<8x32xf32>
    %40 = vector.extract_strided_slice %36 {offsets = [0, 96], sizes = [8, 32], strides = [1, 1]} : vector<8x128xf32> to vector<8x32xf32>
    %41 = vector.broadcast %21 : vector<1x32xf32> to vector<8x32xf32>
    %42 = arith.mulf %41, %28 : vector<8x32xf32>
    %43 = arith.addf %37, %42 : vector<8x32xf32>
    %cst_19 = arith.constant 5.000000e-01 : f32
    %44 = vector.broadcast %cst_19 : f32 to vector<8x32xf32>
    %45 = arith.mulf %44, %43 : vector<8x32xf32>
    %46 = math.tanh %45 : vector<8x32xf32>
    %cst_20 = arith.constant 1.000000e+00 : f32
    %47 = vector.broadcast %cst_20 : f32 to vector<8x32xf32>
    %48 = arith.addf %46, %47 : vector<8x32xf32>
    %cst_21 = arith.constant 5.000000e-01 : f32
    %49 = vector.broadcast %cst_21 : f32 to vector<8x32xf32>
    %50 = arith.mulf %49, %48 : vector<8x32xf32>
    %51 = vector.broadcast %22 : vector<1x32xf32> to vector<8x32xf32>
    %52 = arith.mulf %51, %28 : vector<8x32xf32>
    %53 = arith.addf %38, %52 : vector<8x32xf32>
    %cst_22 = arith.constant 5.000000e-01 : f32
    %54 = vector.broadcast %cst_22 : f32 to vector<8x32xf32>
    %55 = arith.mulf %54, %53 : vector<8x32xf32>
    %56 = math.tanh %55 : vector<8x32xf32>
    %cst_23 = arith.constant 1.000000e+00 : f32
    %57 = vector.broadcast %cst_23 : f32 to vector<8x32xf32>
    %58 = arith.addf %56, %57 : vector<8x32xf32>
    %cst_24 = arith.constant 5.000000e-01 : f32
    %59 = vector.broadcast %cst_24 : f32 to vector<8x32xf32>
    %60 = arith.mulf %59, %58 : vector<8x32xf32>
    %61 = math.tanh %39 : vector<8x32xf32>
    %62 = arith.mulf %60, %28 : vector<8x32xf32>
    %63 = arith.mulf %50, %61 : vector<8x32xf32>
    %64 = arith.addf %62, %63 : vector<8x32xf32>
    %65 = vector.broadcast %23 : vector<1x32xf32> to vector<8x32xf32>
    %66 = arith.mulf %65, %64 : vector<8x32xf32>
    %67 = arith.addf %40, %66 : vector<8x32xf32>
    %cst_25 = arith.constant 5.000000e-01 : f32
    %68 = vector.broadcast %cst_25 : f32 to vector<8x32xf32>
    %69 = arith.mulf %68, %67 : vector<8x32xf32>
    %70 = math.tanh %69 : vector<8x32xf32>
    %cst_26 = arith.constant 1.000000e+00 : f32
    %71 = vector.broadcast %cst_26 : f32 to vector<8x32xf32>
    %72 = arith.addf %70, %71 : vector<8x32xf32>
    %cst_27 = arith.constant 5.000000e-01 : f32
    %73 = vector.broadcast %cst_27 : f32 to vector<8x32xf32>
    %74 = arith.mulf %73, %72 : vector<8x32xf32>
    %75 = math.tanh %64 : vector<8x32xf32>
    %76 = arith.mulf %74, %75 : vector<8x32xf32>
    %77 = vector.extract_strided_slice %33 {offsets = [8, 0], sizes = [8, 128], strides = [1, 1]} : vector<64x128xf32> to vector<8x128xf32>
    %cst_28 = arith.constant dense<0.000000e+00> : vector<8x128xf32>
    %78 = tpu.matmul %76, %24, %cst_28 {dimension_numbers = #tpu.dot_dimension_numbers<[1], [0], [0], [1], [0, 0, 1, 1], [], []>} : vector<8x32xf32>, vector<32x128xf32>, vector<8x128xf32> -> vector<8x128xf32>
    %79 = arith.addf %77, %78 : vector<8x128xf32>
    %80 = vector.extract_strided_slice %79 {offsets = [0, 0], sizes = [8, 32], strides = [1, 1]} : vector<8x128xf32> to vector<8x32xf32>
    %81 = vector.extract_strided_slice %79 {offsets = [0, 32], sizes = [8, 32], strides = [1, 1]} : vector<8x128xf32> to vector<8x32xf32>
    %82 = vector.extract_strided_slice %79 {offsets = [0, 64], sizes = [8, 32], strides = [1, 1]} : vector<8x128xf32> to vector<8x32xf32>
    %83 = vector.extract_strided_slice %79 {offsets = [0, 96], sizes = [8, 32], strides = [1, 1]} : vector<8x128xf32> to vector<8x32xf32>
    %84 = vector.broadcast %21 : vector<1x32xf32> to vector<8x32xf32>
    %85 = arith.mulf %84, %64 : vector<8x32xf32>
    %86 = arith.addf %80, %85 : vector<8x32xf32>
    %cst_29 = arith.constant 5.000000e-01 : f32
    %87 = vector.broadcast %cst_29 : f32 to vector<8x32xf32>
    %88 = arith.mulf %87, %86 : vector<8x32xf32>
    %89 = math.tanh %88 : vector<8x32xf32>
    %cst_30 = arith.constant 1.000000e+00 : f32
    %90 = vector.broadcast %cst_30 : f32 to vector<8x32xf32>
    %91 = arith.addf %89, %90 : vector<8x32xf32>
    %cst_31 = arith.constant 5.000000e-01 : f32
    %92 = vector.broadcast %cst_31 : f32 to vector<8x32xf32>
    %93 = arith.mulf %92, %91 : vector<8x32xf32>
    %94 = vector.broadcast %22 : vector<1x32xf32> to vector<8x32xf32>
    %95 = arith.mulf %94, %64 : vector<8x32xf32>
    %96 = arith.addf %81, %95 : vector<8x32xf32>
    %cst_32 = arith.constant 5.000000e-01 : f32
    %97 = vector.broadcast %cst_32 : f32 to vector<8x32xf32>
    %98 = arith.mulf %97, %96 : vector<8x32xf32>
    %99 = math.tanh %98 : vector<8x32xf32>
    %cst_33 = arith.constant 1.000000e+00 : f32
    %100 = vector.broadcast %cst_33 : f32 to vector<8x32xf32>
    %101 = arith.addf %99, %100 : vector<8x32xf32>
    %cst_34 = arith.constant 5.000000e-01 : f32
    %102 = vector.broadcast %cst_34 : f32 to vector<8x32xf32>
    %103 = arith.mulf %102, %101 : vector<8x32xf32>
    %104 = math.tanh %82 : vector<8x32xf32>
    %105 = arith.mulf %103, %64 : vector<8x32xf32>
    %106 = arith.mulf %93, %104 : vector<8x32xf32>
    %107 = arith.addf %105, %106 : vector<8x32xf32>
    %108 = vector.broadcast %23 : vector<1x32xf32> to vector<8x32xf32>
    %109 = arith.mulf %108, %107 : vector<8x32xf32>
    %110 = arith.addf %83, %109 : vector<8x32xf32>
    %cst_35 = arith.constant 5.000000e-01 : f32
    %111 = vector.broadcast %cst_35 : f32 to vector<8x32xf32>
    %112 = arith.mulf %111, %110 : vector<8x32xf32>
    %113 = math.tanh %112 : vector<8x32xf32>
    %cst_36 = arith.constant 1.000000e+00 : f32
    %114 = vector.broadcast %cst_36 : f32 to vector<8x32xf32>
    %115 = arith.addf %113, %114 : vector<8x32xf32>
    %cst_37 = arith.constant 5.000000e-01 : f32
    %116 = vector.broadcast %cst_37 : f32 to vector<8x32xf32>
    %117 = arith.mulf %116, %115 : vector<8x32xf32>
    %118 = math.tanh %107 : vector<8x32xf32>
    %119 = arith.mulf %117, %118 : vector<8x32xf32>
    %120 = vector.extract_strided_slice %33 {offsets = [16, 0], sizes = [8, 128], strides = [1, 1]} : vector<64x128xf32> to vector<8x128xf32>
    %cst_38 = arith.constant dense<0.000000e+00> : vector<8x128xf32>
    %121 = tpu.matmul %119, %24, %cst_38 {dimension_numbers = #tpu.dot_dimension_numbers<[1], [0], [0], [1], [0, 0, 1, 1], [], []>} : vector<8x32xf32>, vector<32x128xf32>, vector<8x128xf32> -> vector<8x128xf32>
    %122 = arith.addf %120, %121 : vector<8x128xf32>
    %123 = vector.extract_strided_slice %122 {offsets = [0, 0], sizes = [8, 32], strides = [1, 1]} : vector<8x128xf32> to vector<8x32xf32>
    %124 = vector.extract_strided_slice %122 {offsets = [0, 32], sizes = [8, 32], strides = [1, 1]} : vector<8x128xf32> to vector<8x32xf32>
    %125 = vector.extract_strided_slice %122 {offsets = [0, 64], sizes = [8, 32], strides = [1, 1]} : vector<8x128xf32> to vector<8x32xf32>
    %126 = vector.extract_strided_slice %122 {offsets = [0, 96], sizes = [8, 32], strides = [1, 1]} : vector<8x128xf32> to vector<8x32xf32>
    %127 = vector.broadcast %21 : vector<1x32xf32> to vector<8x32xf32>
    %128 = arith.mulf %127, %107 : vector<8x32xf32>
    %129 = arith.addf %123, %128 : vector<8x32xf32>
    %cst_39 = arith.constant 5.000000e-01 : f32
    %130 = vector.broadcast %cst_39 : f32 to vector<8x32xf32>
    %131 = arith.mulf %130, %129 : vector<8x32xf32>
    %132 = math.tanh %131 : vector<8x32xf32>
    %cst_40 = arith.constant 1.000000e+00 : f32
    %133 = vector.broadcast %cst_40 : f32 to vector<8x32xf32>
    %134 = arith.addf %132, %133 : vector<8x32xf32>
    %cst_41 = arith.constant 5.000000e-01 : f32
    %135 = vector.broadcast %cst_41 : f32 to vector<8x32xf32>
    %136 = arith.mulf %135, %134 : vector<8x32xf32>
    %137 = vector.broadcast %22 : vector<1x32xf32> to vector<8x32xf32>
    %138 = arith.mulf %137, %107 : vector<8x32xf32>
    %139 = arith.addf %124, %138 : vector<8x32xf32>
    %cst_42 = arith.constant 5.000000e-01 : f32
    %140 = vector.broadcast %cst_42 : f32 to vector<8x32xf32>
    %141 = arith.mulf %140, %139 : vector<8x32xf32>
    %142 = math.tanh %141 : vector<8x32xf32>
    %cst_43 = arith.constant 1.000000e+00 : f32
    %143 = vector.broadcast %cst_43 : f32 to vector<8x32xf32>
    %144 = arith.addf %142, %143 : vector<8x32xf32>
    %cst_44 = arith.constant 5.000000e-01 : f32
    %145 = vector.broadcast %cst_44 : f32 to vector<8x32xf32>
    %146 = arith.mulf %145, %144 : vector<8x32xf32>
    %147 = math.tanh %125 : vector<8x32xf32>
    %148 = arith.mulf %146, %107 : vector<8x32xf32>
    %149 = arith.mulf %136, %147 : vector<8x32xf32>
    %150 = arith.addf %148, %149 : vector<8x32xf32>
    %151 = vector.broadcast %23 : vector<1x32xf32> to vector<8x32xf32>
    %152 = arith.mulf %151, %150 : vector<8x32xf32>
    %153 = arith.addf %126, %152 : vector<8x32xf32>
    %cst_45 = arith.constant 5.000000e-01 : f32
    %154 = vector.broadcast %cst_45 : f32 to vector<8x32xf32>
    %155 = arith.mulf %154, %153 : vector<8x32xf32>
    %156 = math.tanh %155 : vector<8x32xf32>
    %cst_46 = arith.constant 1.000000e+00 : f32
    %157 = vector.broadcast %cst_46 : f32 to vector<8x32xf32>
    %158 = arith.addf %156, %157 : vector<8x32xf32>
    %cst_47 = arith.constant 5.000000e-01 : f32
    %159 = vector.broadcast %cst_47 : f32 to vector<8x32xf32>
    %160 = arith.mulf %159, %158 : vector<8x32xf32>
    %161 = math.tanh %150 : vector<8x32xf32>
    %162 = arith.mulf %160, %161 : vector<8x32xf32>
    %163 = vector.extract_strided_slice %33 {offsets = [24, 0], sizes = [8, 128], strides = [1, 1]} : vector<64x128xf32> to vector<8x128xf32>
    %cst_48 = arith.constant dense<0.000000e+00> : vector<8x128xf32>
    %164 = tpu.matmul %162, %24, %cst_48 {dimension_numbers = #tpu.dot_dimension_numbers<[1], [0], [0], [1], [0, 0, 1, 1], [], []>} : vector<8x32xf32>, vector<32x128xf32>, vector<8x128xf32> -> vector<8x128xf32>
    %165 = arith.addf %163, %164 : vector<8x128xf32>
    %166 = vector.extract_strided_slice %165 {offsets = [0, 0], sizes = [8, 32], strides = [1, 1]} : vector<8x128xf32> to vector<8x32xf32>
    %167 = vector.extract_strided_slice %165 {offsets = [0, 32], sizes = [8, 32], strides = [1, 1]} : vector<8x128xf32> to vector<8x32xf32>
    %168 = vector.extract_strided_slice %165 {offsets = [0, 64], sizes = [8, 32], strides = [1, 1]} : vector<8x128xf32> to vector<8x32xf32>
    %169 = vector.extract_strided_slice %165 {offsets = [0, 96], sizes = [8, 32], strides = [1, 1]} : vector<8x128xf32> to vector<8x32xf32>
    %170 = vector.broadcast %21 : vector<1x32xf32> to vector<8x32xf32>
    %171 = arith.mulf %170, %150 : vector<8x32xf32>
    %172 = arith.addf %166, %171 : vector<8x32xf32>
    %cst_49 = arith.constant 5.000000e-01 : f32
    %173 = vector.broadcast %cst_49 : f32 to vector<8x32xf32>
    %174 = arith.mulf %173, %172 : vector<8x32xf32>
    %175 = math.tanh %174 : vector<8x32xf32>
    %cst_50 = arith.constant 1.000000e+00 : f32
    %176 = vector.broadcast %cst_50 : f32 to vector<8x32xf32>
    %177 = arith.addf %175, %176 : vector<8x32xf32>
    %cst_51 = arith.constant 5.000000e-01 : f32
    %178 = vector.broadcast %cst_51 : f32 to vector<8x32xf32>
    %179 = arith.mulf %178, %177 : vector<8x32xf32>
    %180 = vector.broadcast %22 : vector<1x32xf32> to vector<8x32xf32>
    %181 = arith.mulf %180, %150 : vector<8x32xf32>
    %182 = arith.addf %167, %181 : vector<8x32xf32>
    %cst_52 = arith.constant 5.000000e-01 : f32
    %183 = vector.broadcast %cst_52 : f32 to vector<8x32xf32>
    %184 = arith.mulf %183, %182 : vector<8x32xf32>
    %185 = math.tanh %184 : vector<8x32xf32>
    %cst_53 = arith.constant 1.000000e+00 : f32
    %186 = vector.broadcast %cst_53 : f32 to vector<8x32xf32>
    %187 = arith.addf %185, %186 : vector<8x32xf32>
    %cst_54 = arith.constant 5.000000e-01 : f32
    %188 = vector.broadcast %cst_54 : f32 to vector<8x32xf32>
    %189 = arith.mulf %188, %187 : vector<8x32xf32>
    %190 = math.tanh %168 : vector<8x32xf32>
    %191 = arith.mulf %189, %150 : vector<8x32xf32>
    %192 = arith.mulf %179, %190 : vector<8x32xf32>
    %193 = arith.addf %191, %192 : vector<8x32xf32>
    %194 = vector.broadcast %23 : vector<1x32xf32> to vector<8x32xf32>
    %195 = arith.mulf %194, %193 : vector<8x32xf32>
    %196 = arith.addf %169, %195 : vector<8x32xf32>
    %cst_55 = arith.constant 5.000000e-01 : f32
    %197 = vector.broadcast %cst_55 : f32 to vector<8x32xf32>
    %198 = arith.mulf %197, %196 : vector<8x32xf32>
    %199 = math.tanh %198 : vector<8x32xf32>
    %cst_56 = arith.constant 1.000000e+00 : f32
    %200 = vector.broadcast %cst_56 : f32 to vector<8x32xf32>
    %201 = arith.addf %199, %200 : vector<8x32xf32>
    %cst_57 = arith.constant 5.000000e-01 : f32
    %202 = vector.broadcast %cst_57 : f32 to vector<8x32xf32>
    %203 = arith.mulf %202, %201 : vector<8x32xf32>
    %204 = math.tanh %193 : vector<8x32xf32>
    %205 = arith.mulf %203, %204 : vector<8x32xf32>
    %206 = vector.extract_strided_slice %33 {offsets = [32, 0], sizes = [8, 128], strides = [1, 1]} : vector<64x128xf32> to vector<8x128xf32>
    %cst_58 = arith.constant dense<0.000000e+00> : vector<8x128xf32>
    %207 = tpu.matmul %205, %24, %cst_58 {dimension_numbers = #tpu.dot_dimension_numbers<[1], [0], [0], [1], [0, 0, 1, 1], [], []>} : vector<8x32xf32>, vector<32x128xf32>, vector<8x128xf32> -> vector<8x128xf32>
    %208 = arith.addf %206, %207 : vector<8x128xf32>
    %209 = vector.extract_strided_slice %208 {offsets = [0, 0], sizes = [8, 32], strides = [1, 1]} : vector<8x128xf32> to vector<8x32xf32>
    %210 = vector.extract_strided_slice %208 {offsets = [0, 32], sizes = [8, 32], strides = [1, 1]} : vector<8x128xf32> to vector<8x32xf32>
    %211 = vector.extract_strided_slice %208 {offsets = [0, 64], sizes = [8, 32], strides = [1, 1]} : vector<8x128xf32> to vector<8x32xf32>
    %212 = vector.extract_strided_slice %208 {offsets = [0, 96], sizes = [8, 32], strides = [1, 1]} : vector<8x128xf32> to vector<8x32xf32>
    %213 = vector.broadcast %21 : vector<1x32xf32> to vector<8x32xf32>
    %214 = arith.mulf %213, %193 : vector<8x32xf32>
    %215 = arith.addf %209, %214 : vector<8x32xf32>
    %cst_59 = arith.constant 5.000000e-01 : f32
    %216 = vector.broadcast %cst_59 : f32 to vector<8x32xf32>
    %217 = arith.mulf %216, %215 : vector<8x32xf32>
    %218 = math.tanh %217 : vector<8x32xf32>
    %cst_60 = arith.constant 1.000000e+00 : f32
    %219 = vector.broadcast %cst_60 : f32 to vector<8x32xf32>
    %220 = arith.addf %218, %219 : vector<8x32xf32>
    %cst_61 = arith.constant 5.000000e-01 : f32
    %221 = vector.broadcast %cst_61 : f32 to vector<8x32xf32>
    %222 = arith.mulf %221, %220 : vector<8x32xf32>
    %223 = vector.broadcast %22 : vector<1x32xf32> to vector<8x32xf32>
    %224 = arith.mulf %223, %193 : vector<8x32xf32>
    %225 = arith.addf %210, %224 : vector<8x32xf32>
    %cst_62 = arith.constant 5.000000e-01 : f32
    %226 = vector.broadcast %cst_62 : f32 to vector<8x32xf32>
    %227 = arith.mulf %226, %225 : vector<8x32xf32>
    %228 = math.tanh %227 : vector<8x32xf32>
    %cst_63 = arith.constant 1.000000e+00 : f32
    %229 = vector.broadcast %cst_63 : f32 to vector<8x32xf32>
    %230 = arith.addf %228, %229 : vector<8x32xf32>
    %cst_64 = arith.constant 5.000000e-01 : f32
    %231 = vector.broadcast %cst_64 : f32 to vector<8x32xf32>
    %232 = arith.mulf %231, %230 : vector<8x32xf32>
    %233 = math.tanh %211 : vector<8x32xf32>
    %234 = arith.mulf %232, %193 : vector<8x32xf32>
    %235 = arith.mulf %222, %233 : vector<8x32xf32>
    %236 = arith.addf %234, %235 : vector<8x32xf32>
    %237 = vector.broadcast %23 : vector<1x32xf32> to vector<8x32xf32>
    %238 = arith.mulf %237, %236 : vector<8x32xf32>
    %239 = arith.addf %212, %238 : vector<8x32xf32>
    %cst_65 = arith.constant 5.000000e-01 : f32
    %240 = vector.broadcast %cst_65 : f32 to vector<8x32xf32>
    %241 = arith.mulf %240, %239 : vector<8x32xf32>
    %242 = math.tanh %241 : vector<8x32xf32>
    %cst_66 = arith.constant 1.000000e+00 : f32
    %243 = vector.broadcast %cst_66 : f32 to vector<8x32xf32>
    %244 = arith.addf %242, %243 : vector<8x32xf32>
    %cst_67 = arith.constant 5.000000e-01 : f32
    %245 = vector.broadcast %cst_67 : f32 to vector<8x32xf32>
    %246 = arith.mulf %245, %244 : vector<8x32xf32>
    %247 = math.tanh %236 : vector<8x32xf32>
    %248 = arith.mulf %246, %247 : vector<8x32xf32>
    %249 = vector.extract_strided_slice %33 {offsets = [40, 0], sizes = [8, 128], strides = [1, 1]} : vector<64x128xf32> to vector<8x128xf32>
    %cst_68 = arith.constant dense<0.000000e+00> : vector<8x128xf32>
    %250 = tpu.matmul %248, %24, %cst_68 {dimension_numbers = #tpu.dot_dimension_numbers<[1], [0], [0], [1], [0, 0, 1, 1], [], []>} : vector<8x32xf32>, vector<32x128xf32>, vector<8x128xf32> -> vector<8x128xf32>
    %251 = arith.addf %249, %250 : vector<8x128xf32>
    %252 = vector.extract_strided_slice %251 {offsets = [0, 0], sizes = [8, 32], strides = [1, 1]} : vector<8x128xf32> to vector<8x32xf32>
    %253 = vector.extract_strided_slice %251 {offsets = [0, 32], sizes = [8, 32], strides = [1, 1]} : vector<8x128xf32> to vector<8x32xf32>
    %254 = vector.extract_strided_slice %251 {offsets = [0, 64], sizes = [8, 32], strides = [1, 1]} : vector<8x128xf32> to vector<8x32xf32>
    %255 = vector.extract_strided_slice %251 {offsets = [0, 96], sizes = [8, 32], strides = [1, 1]} : vector<8x128xf32> to vector<8x32xf32>
    %256 = vector.broadcast %21 : vector<1x32xf32> to vector<8x32xf32>
    %257 = arith.mulf %256, %236 : vector<8x32xf32>
    %258 = arith.addf %252, %257 : vector<8x32xf32>
    %cst_69 = arith.constant 5.000000e-01 : f32
    %259 = vector.broadcast %cst_69 : f32 to vector<8x32xf32>
    %260 = arith.mulf %259, %258 : vector<8x32xf32>
    %261 = math.tanh %260 : vector<8x32xf32>
    %cst_70 = arith.constant 1.000000e+00 : f32
    %262 = vector.broadcast %cst_70 : f32 to vector<8x32xf32>
    %263 = arith.addf %261, %262 : vector<8x32xf32>
    %cst_71 = arith.constant 5.000000e-01 : f32
    %264 = vector.broadcast %cst_71 : f32 to vector<8x32xf32>
    %265 = arith.mulf %264, %263 : vector<8x32xf32>
    %266 = vector.broadcast %22 : vector<1x32xf32> to vector<8x32xf32>
    %267 = arith.mulf %266, %236 : vector<8x32xf32>
    %268 = arith.addf %253, %267 : vector<8x32xf32>
    %cst_72 = arith.constant 5.000000e-01 : f32
    %269 = vector.broadcast %cst_72 : f32 to vector<8x32xf32>
    %270 = arith.mulf %269, %268 : vector<8x32xf32>
    %271 = math.tanh %270 : vector<8x32xf32>
    %cst_73 = arith.constant 1.000000e+00 : f32
    %272 = vector.broadcast %cst_73 : f32 to vector<8x32xf32>
    %273 = arith.addf %271, %272 : vector<8x32xf32>
    %cst_74 = arith.constant 5.000000e-01 : f32
    %274 = vector.broadcast %cst_74 : f32 to vector<8x32xf32>
    %275 = arith.mulf %274, %273 : vector<8x32xf32>
    %276 = math.tanh %254 : vector<8x32xf32>
    %277 = arith.mulf %275, %236 : vector<8x32xf32>
    %278 = arith.mulf %265, %276 : vector<8x32xf32>
    %279 = arith.addf %277, %278 : vector<8x32xf32>
    %280 = vector.broadcast %23 : vector<1x32xf32> to vector<8x32xf32>
    %281 = arith.mulf %280, %279 : vector<8x32xf32>
    %282 = arith.addf %255, %281 : vector<8x32xf32>
    %cst_75 = arith.constant 5.000000e-01 : f32
    %283 = vector.broadcast %cst_75 : f32 to vector<8x32xf32>
    %284 = arith.mulf %283, %282 : vector<8x32xf32>
    %285 = math.tanh %284 : vector<8x32xf32>
    %cst_76 = arith.constant 1.000000e+00 : f32
    %286 = vector.broadcast %cst_76 : f32 to vector<8x32xf32>
    %287 = arith.addf %285, %286 : vector<8x32xf32>
    %cst_77 = arith.constant 5.000000e-01 : f32
    %288 = vector.broadcast %cst_77 : f32 to vector<8x32xf32>
    %289 = arith.mulf %288, %287 : vector<8x32xf32>
    %290 = math.tanh %279 : vector<8x32xf32>
    %291 = arith.mulf %289, %290 : vector<8x32xf32>
    %292 = vector.extract_strided_slice %33 {offsets = [48, 0], sizes = [8, 128], strides = [1, 1]} : vector<64x128xf32> to vector<8x128xf32>
    %cst_78 = arith.constant dense<0.000000e+00> : vector<8x128xf32>
    %293 = tpu.matmul %291, %24, %cst_78 {dimension_numbers = #tpu.dot_dimension_numbers<[1], [0], [0], [1], [0, 0, 1, 1], [], []>} : vector<8x32xf32>, vector<32x128xf32>, vector<8x128xf32> -> vector<8x128xf32>
    %294 = arith.addf %292, %293 : vector<8x128xf32>
    %295 = vector.extract_strided_slice %294 {offsets = [0, 0], sizes = [8, 32], strides = [1, 1]} : vector<8x128xf32> to vector<8x32xf32>
    %296 = vector.extract_strided_slice %294 {offsets = [0, 32], sizes = [8, 32], strides = [1, 1]} : vector<8x128xf32> to vector<8x32xf32>
    %297 = vector.extract_strided_slice %294 {offsets = [0, 64], sizes = [8, 32], strides = [1, 1]} : vector<8x128xf32> to vector<8x32xf32>
    %298 = vector.extract_strided_slice %294 {offsets = [0, 96], sizes = [8, 32], strides = [1, 1]} : vector<8x128xf32> to vector<8x32xf32>
    %299 = vector.broadcast %21 : vector<1x32xf32> to vector<8x32xf32>
    %300 = arith.mulf %299, %279 : vector<8x32xf32>
    %301 = arith.addf %295, %300 : vector<8x32xf32>
    %cst_79 = arith.constant 5.000000e-01 : f32
    %302 = vector.broadcast %cst_79 : f32 to vector<8x32xf32>
    %303 = arith.mulf %302, %301 : vector<8x32xf32>
    %304 = math.tanh %303 : vector<8x32xf32>
    %cst_80 = arith.constant 1.000000e+00 : f32
    %305 = vector.broadcast %cst_80 : f32 to vector<8x32xf32>
    %306 = arith.addf %304, %305 : vector<8x32xf32>
    %cst_81 = arith.constant 5.000000e-01 : f32
    %307 = vector.broadcast %cst_81 : f32 to vector<8x32xf32>
    %308 = arith.mulf %307, %306 : vector<8x32xf32>
    %309 = vector.broadcast %22 : vector<1x32xf32> to vector<8x32xf32>
    %310 = arith.mulf %309, %279 : vector<8x32xf32>
    %311 = arith.addf %296, %310 : vector<8x32xf32>
    %cst_82 = arith.constant 5.000000e-01 : f32
    %312 = vector.broadcast %cst_82 : f32 to vector<8x32xf32>
    %313 = arith.mulf %312, %311 : vector<8x32xf32>
    %314 = math.tanh %313 : vector<8x32xf32>
    %cst_83 = arith.constant 1.000000e+00 : f32
    %315 = vector.broadcast %cst_83 : f32 to vector<8x32xf32>
    %316 = arith.addf %314, %315 : vector<8x32xf32>
    %cst_84 = arith.constant 5.000000e-01 : f32
    %317 = vector.broadcast %cst_84 : f32 to vector<8x32xf32>
    %318 = arith.mulf %317, %316 : vector<8x32xf32>
    %319 = math.tanh %297 : vector<8x32xf32>
    %320 = arith.mulf %318, %279 : vector<8x32xf32>
    %321 = arith.mulf %308, %319 : vector<8x32xf32>
    %322 = arith.addf %320, %321 : vector<8x32xf32>
    %323 = vector.broadcast %23 : vector<1x32xf32> to vector<8x32xf32>
    %324 = arith.mulf %323, %322 : vector<8x32xf32>
    %325 = arith.addf %298, %324 : vector<8x32xf32>
    %cst_85 = arith.constant 5.000000e-01 : f32
    %326 = vector.broadcast %cst_85 : f32 to vector<8x32xf32>
    %327 = arith.mulf %326, %325 : vector<8x32xf32>
    %328 = math.tanh %327 : vector<8x32xf32>
    %cst_86 = arith.constant 1.000000e+00 : f32
    %329 = vector.broadcast %cst_86 : f32 to vector<8x32xf32>
    %330 = arith.addf %328, %329 : vector<8x32xf32>
    %cst_87 = arith.constant 5.000000e-01 : f32
    %331 = vector.broadcast %cst_87 : f32 to vector<8x32xf32>
    %332 = arith.mulf %331, %330 : vector<8x32xf32>
    %333 = math.tanh %322 : vector<8x32xf32>
    %334 = arith.mulf %332, %333 : vector<8x32xf32>
    %335 = vector.extract_strided_slice %33 {offsets = [56, 0], sizes = [8, 128], strides = [1, 1]} : vector<64x128xf32> to vector<8x128xf32>
    %cst_88 = arith.constant dense<0.000000e+00> : vector<8x128xf32>
    %336 = tpu.matmul %334, %24, %cst_88 {dimension_numbers = #tpu.dot_dimension_numbers<[1], [0], [0], [1], [0, 0, 1, 1], [], []>} : vector<8x32xf32>, vector<32x128xf32>, vector<8x128xf32> -> vector<8x128xf32>
    %337 = arith.addf %335, %336 : vector<8x128xf32>
    %338 = vector.extract_strided_slice %337 {offsets = [0, 0], sizes = [8, 32], strides = [1, 1]} : vector<8x128xf32> to vector<8x32xf32>
    %339 = vector.extract_strided_slice %337 {offsets = [0, 32], sizes = [8, 32], strides = [1, 1]} : vector<8x128xf32> to vector<8x32xf32>
    %340 = vector.extract_strided_slice %337 {offsets = [0, 64], sizes = [8, 32], strides = [1, 1]} : vector<8x128xf32> to vector<8x32xf32>
    %341 = vector.extract_strided_slice %337 {offsets = [0, 96], sizes = [8, 32], strides = [1, 1]} : vector<8x128xf32> to vector<8x32xf32>
    %342 = vector.broadcast %21 : vector<1x32xf32> to vector<8x32xf32>
    %343 = arith.mulf %342, %322 : vector<8x32xf32>
    %344 = arith.addf %338, %343 : vector<8x32xf32>
    %cst_89 = arith.constant 5.000000e-01 : f32
    %345 = vector.broadcast %cst_89 : f32 to vector<8x32xf32>
    %346 = arith.mulf %345, %344 : vector<8x32xf32>
    %347 = math.tanh %346 : vector<8x32xf32>
    %cst_90 = arith.constant 1.000000e+00 : f32
    %348 = vector.broadcast %cst_90 : f32 to vector<8x32xf32>
    %349 = arith.addf %347, %348 : vector<8x32xf32>
    %cst_91 = arith.constant 5.000000e-01 : f32
    %350 = vector.broadcast %cst_91 : f32 to vector<8x32xf32>
    %351 = arith.mulf %350, %349 : vector<8x32xf32>
    %352 = vector.broadcast %22 : vector<1x32xf32> to vector<8x32xf32>
    %353 = arith.mulf %352, %322 : vector<8x32xf32>
    %354 = arith.addf %339, %353 : vector<8x32xf32>
    %cst_92 = arith.constant 5.000000e-01 : f32
    %355 = vector.broadcast %cst_92 : f32 to vector<8x32xf32>
    %356 = arith.mulf %355, %354 : vector<8x32xf32>
    %357 = math.tanh %356 : vector<8x32xf32>
    %cst_93 = arith.constant 1.000000e+00 : f32
    %358 = vector.broadcast %cst_93 : f32 to vector<8x32xf32>
    %359 = arith.addf %357, %358 : vector<8x32xf32>
    %cst_94 = arith.constant 5.000000e-01 : f32
    %360 = vector.broadcast %cst_94 : f32 to vector<8x32xf32>
    %361 = arith.mulf %360, %359 : vector<8x32xf32>
    %362 = math.tanh %340 : vector<8x32xf32>
    %363 = arith.mulf %361, %322 : vector<8x32xf32>
    %364 = arith.mulf %351, %362 : vector<8x32xf32>
    %365 = arith.addf %363, %364 : vector<8x32xf32>
    %366 = vector.broadcast %23 : vector<1x32xf32> to vector<8x32xf32>
    %367 = arith.mulf %366, %365 : vector<8x32xf32>
    %368 = arith.addf %341, %367 : vector<8x32xf32>
    %cst_95 = arith.constant 5.000000e-01 : f32
    %369 = vector.broadcast %cst_95 : f32 to vector<8x32xf32>
    %370 = arith.mulf %369, %368 : vector<8x32xf32>
    %371 = math.tanh %370 : vector<8x32xf32>
    %cst_96 = arith.constant 1.000000e+00 : f32
    %372 = vector.broadcast %cst_96 : f32 to vector<8x32xf32>
    %373 = arith.addf %371, %372 : vector<8x32xf32>
    %cst_97 = arith.constant 5.000000e-01 : f32
    %374 = vector.broadcast %cst_97 : f32 to vector<8x32xf32>
    %375 = arith.mulf %374, %373 : vector<8x32xf32>
    %376 = math.tanh %365 : vector<8x32xf32>
    %377 = arith.mulf %375, %376 : vector<8x32xf32>
    %c0_98 = arith.constant 0 : index
    %c0_99 = arith.constant 0 : index
    %c0_100 = arith.constant 0 : index
    %378 = vector.load %arg12[%c0_98, %c0_99, %c0_100] : memref<2x8x32xf32, #tpu.memory_space<vmem>>, vector<1x8x32xf32>
    %379 = vector.shape_cast %378 : vector<1x8x32xf32> to vector<8x32xf32>
    %380 = vector.shape_cast %377 : vector<8x32xf32> to vector<1x8x32xf32>
    tpu.vector_store %arg12[%c0_98, %c0_99, %c0_100], %380 {strides = array<i32>} : memref<2x8x32xf32, #tpu.memory_space<vmem>>, vector<1x8x32xf32>,
    %c0_101 = arith.constant 0 : index
    %c0_102 = arith.constant 0 : index
    %c0_103 = arith.constant 0 : index
    %381 = vector.load %arg13[%c0_101, %c0_102, %c0_103] : memref<2x8x32xf32, #tpu.memory_space<vmem>>, vector<1x8x32xf32>
    %382 = vector.shape_cast %381 : vector<1x8x32xf32> to vector<8x32xf32>
    %383 = vector.shape_cast %365 : vector<8x32xf32> to vector<1x8x32xf32>
    tpu.vector_store %arg13[%c0_101, %c0_102, %c0_103], %383 {strides = array<i32>} : memref<2x8x32xf32, #tpu.memory_space<vmem>>, vector<1x8x32xf32>,
    %c0_104 = arith.constant 0 : index
    %c0_105 = arith.constant 0 : index
    %384 = vector.load %arg8[%c0_104, %c0_105] : memref<8x128xf32, #tpu.memory_space<vmem>>, vector<1x128xf32>
    %c1_106 = arith.constant 1 : index
    %c0_107 = arith.constant 0 : index
    %385 = vector.load %arg8[%c1_106, %c0_107] : memref<8x128xf32, #tpu.memory_space<vmem>>, vector<1x32xf32>
    %c2_108 = arith.constant 2 : index
    %c0_109 = arith.constant 0 : index
    %386 = vector.load %arg8[%c2_108, %c0_109] : memref<8x128xf32, #tpu.memory_space<vmem>>, vector<1x32xf32>
    %c3_110 = arith.constant 3 : index
    %c0_111 = arith.constant 0 : index
    %387 = vector.load %arg8[%c3_110, %c0_111] : memref<8x128xf32, #tpu.memory_space<vmem>>, vector<1x32xf32>
    %c0_112 = arith.constant 0 : index
    %c0_113 = arith.constant 0 : index
    %388 = vector.load %arg7[%c0_112, %c0_113] : memref<32x128xf32, #tpu.memory_space<vmem>>, vector<32x128xf32>
    %c1_114 = arith.constant 1 : index
    %c0_115 = arith.constant 0 : index
    %c0_116 = arith.constant 0 : index
    %389 = vector.load %arg12[%c1_114, %c0_115, %c0_116] : memref<2x8x32xf32, #tpu.memory_space<vmem>>, vector<1x8x32xf32>
    %390 = vector.shape_cast %389 : vector<1x8x32xf32> to vector<8x32xf32>
    %c1_117 = arith.constant 1 : index
    %c0_118 = arith.constant 0 : index
    %c0_119 = arith.constant 0 : index
    %391 = vector.load %arg13[%c1_117, %c0_118, %c0_119] : memref<2x8x32xf32, #tpu.memory_space<vmem>>, vector<1x8x32xf32>
    %392 = vector.shape_cast %391 : vector<1x8x32xf32> to vector<8x32xf32>
    %393 = tpu.concatenate %76, %119, %162, %205, %248, %291, %334, %377 in 0 : vector<8x32xf32>, vector<8x32xf32>, vector<8x32xf32>, vector<8x32xf32>, vector<8x32xf32>, vector<8x32xf32>, vector<8x32xf32>, vector<8x32xf32> -> vector<64x32xf32>
    %c0_120 = arith.constant 0 : index
    %c0_121 = arith.constant 0 : index
    %394 = vector.load %arg6[%c0_120, %c0_121] : memref<32x128xf32, #tpu.memory_space<vmem>>, vector<32x128xf32>
    %cst_122 = arith.constant dense<0.000000e+00> : vector<64x128xf32>
    %395 = tpu.matmul %393, %394, %cst_122 {dimension_numbers = #tpu.dot_dimension_numbers<[1], [0], [0], [1], [0, 0, 1, 1], [], []>} : vector<64x32xf32>, vector<32x128xf32>, vector<64x128xf32> -> vector<64x128xf32>
    %396 = vector.broadcast %384 : vector<1x128xf32> to vector<64x128xf32>
    %397 = arith.addf %395, %396 : vector<64x128xf32>
    %398 = vector.extract_strided_slice %397 {offsets = [0, 0], sizes = [8, 128], strides = [1, 1]} : vector<64x128xf32> to vector<8x128xf32>
    %cst_123 = arith.constant dense<0.000000e+00> : vector<8x128xf32>
    %399 = tpu.matmul %390, %388, %cst_123 {dimension_numbers = #tpu.dot_dimension_numbers<[1], [0], [0], [1], [0, 0, 1, 1], [], []>} : vector<8x32xf32>, vector<32x128xf32>, vector<8x128xf32> -> vector<8x128xf32>
    %400 = arith.addf %398, %399 : vector<8x128xf32>
    %401 = vector.extract_strided_slice %400 {offsets = [0, 0], sizes = [8, 32], strides = [1, 1]} : vector<8x128xf32> to vector<8x32xf32>
    %402 = vector.extract_strided_slice %400 {offsets = [0, 32], sizes = [8, 32], strides = [1, 1]} : vector<8x128xf32> to vector<8x32xf32>
    %403 = vector.extract_strided_slice %400 {offsets = [0, 64], sizes = [8, 32], strides = [1, 1]} : vector<8x128xf32> to vector<8x32xf32>
    %404 = vector.extract_strided_slice %400 {offsets = [0, 96], sizes = [8, 32], strides = [1, 1]} : vector<8x128xf32> to vector<8x32xf32>
    %405 = vector.broadcast %385 : vector<1x32xf32> to vector<8x32xf32>
    %406 = arith.mulf %405, %392 : vector<8x32xf32>
    %407 = arith.addf %401, %406 : vector<8x32xf32>
    %cst_124 = arith.constant 5.000000e-01 : f32
    %408 = vector.broadcast %cst_124 : f32 to vector<8x32xf32>
    %409 = arith.mulf %408, %407 : vector<8x32xf32>
    %410 = math.tanh %409 : vector<8x32xf32>
    %cst_125 = arith.constant 1.000000e+00 : f32
    %411 = vector.broadcast %cst_125 : f32 to vector<8x32xf32>
    %412 = arith.addf %410, %411 : vector<8x32xf32>
    %cst_126 = arith.constant 5.000000e-01 : f32
    %413 = vector.broadcast %cst_126 : f32 to vector<8x32xf32>
    %414 = arith.mulf %413, %412 : vector<8x32xf32>
    %415 = vector.broadcast %386 : vector<1x32xf32> to vector<8x32xf32>
    %416 = arith.mulf %415, %392 : vector<8x32xf32>
    %417 = arith.addf %402, %416 : vector<8x32xf32>
    %cst_127 = arith.constant 5.000000e-01 : f32
    %418 = vector.broadcast %cst_127 : f32 to vector<8x32xf32>
    %419 = arith.mulf %418, %417 : vector<8x32xf32>
    %420 = math.tanh %419 : vector<8x32xf32>
    %cst_128 = arith.constant 1.000000e+00 : f32
    %421 = vector.broadcast %cst_128 : f32 to vector<8x32xf32>
    %422 = arith.addf %420, %421 : vector<8x32xf32>
    %cst_129 = arith.constant 5.000000e-01 : f32
    %423 = vector.broadcast %cst_129 : f32 to vector<8x32xf32>
    %424 = arith.mulf %423, %422 : vector<8x32xf32>
    %425 = math.tanh %403 : vector<8x32xf32>
    %426 = arith.mulf %424, %392 : vector<8x32xf32>
    %427 = arith.mulf %414, %425 : vector<8x32xf32>
    %428 = arith.addf %426, %427 : vector<8x32xf32>
    %429 = vector.broadcast %387 : vector<1x32xf32> to vector<8x32xf32>
    %430 = arith.mulf %429, %428 : vector<8x32xf32>
    %431 = arith.addf %404, %430 : vector<8x32xf32>
    %cst_130 = arith.constant 5.000000e-01 : f32
    %432 = vector.broadcast %cst_130 : f32 to vector<8x32xf32>
    %433 = arith.mulf %432, %431 : vector<8x32xf32>
    %434 = math.tanh %433 : vector<8x32xf32>
    %cst_131 = arith.constant 1.000000e+00 : f32
    %435 = vector.broadcast %cst_131 : f32 to vector<8x32xf32>
    %436 = arith.addf %434, %435 : vector<8x32xf32>
    %cst_132 = arith.constant 5.000000e-01 : f32
    %437 = vector.broadcast %cst_132 : f32 to vector<8x32xf32>
    %438 = arith.mulf %437, %436 : vector<8x32xf32>
    %439 = math.tanh %428 : vector<8x32xf32>
    %440 = arith.mulf %438, %439 : vector<8x32xf32>
    %441 = vector.extract_strided_slice %397 {offsets = [8, 0], sizes = [8, 128], strides = [1, 1]} : vector<64x128xf32> to vector<8x128xf32>
    %cst_133 = arith.constant dense<0.000000e+00> : vector<8x128xf32>
    %442 = tpu.matmul %440, %388, %cst_133 {dimension_numbers = #tpu.dot_dimension_numbers<[1], [0], [0], [1], [0, 0, 1, 1], [], []>} : vector<8x32xf32>, vector<32x128xf32>, vector<8x128xf32> -> vector<8x128xf32>
    %443 = arith.addf %441, %442 : vector<8x128xf32>
    %444 = vector.extract_strided_slice %443 {offsets = [0, 0], sizes = [8, 32], strides = [1, 1]} : vector<8x128xf32> to vector<8x32xf32>
    %445 = vector.extract_strided_slice %443 {offsets = [0, 32], sizes = [8, 32], strides = [1, 1]} : vector<8x128xf32> to vector<8x32xf32>
    %446 = vector.extract_strided_slice %443 {offsets = [0, 64], sizes = [8, 32], strides = [1, 1]} : vector<8x128xf32> to vector<8x32xf32>
    %447 = vector.extract_strided_slice %443 {offsets = [0, 96], sizes = [8, 32], strides = [1, 1]} : vector<8x128xf32> to vector<8x32xf32>
    %448 = vector.broadcast %385 : vector<1x32xf32> to vector<8x32xf32>
    %449 = arith.mulf %448, %428 : vector<8x32xf32>
    %450 = arith.addf %444, %449 : vector<8x32xf32>
    %cst_134 = arith.constant 5.000000e-01 : f32
    %451 = vector.broadcast %cst_134 : f32 to vector<8x32xf32>
    %452 = arith.mulf %451, %450 : vector<8x32xf32>
    %453 = math.tanh %452 : vector<8x32xf32>
    %cst_135 = arith.constant 1.000000e+00 : f32
    %454 = vector.broadcast %cst_135 : f32 to vector<8x32xf32>
    %455 = arith.addf %453, %454 : vector<8x32xf32>
    %cst_136 = arith.constant 5.000000e-01 : f32
    %456 = vector.broadcast %cst_136 : f32 to vector<8x32xf32>
    %457 = arith.mulf %456, %455 : vector<8x32xf32>
    %458 = vector.broadcast %386 : vector<1x32xf32> to vector<8x32xf32>
    %459 = arith.mulf %458, %428 : vector<8x32xf32>
    %460 = arith.addf %445, %459 : vector<8x32xf32>
    %cst_137 = arith.constant 5.000000e-01 : f32
    %461 = vector.broadcast %cst_137 : f32 to vector<8x32xf32>
    %462 = arith.mulf %461, %460 : vector<8x32xf32>
    %463 = math.tanh %462 : vector<8x32xf32>
    %cst_138 = arith.constant 1.000000e+00 : f32
    %464 = vector.broadcast %cst_138 : f32 to vector<8x32xf32>
    %465 = arith.addf %463, %464 : vector<8x32xf32>
    %cst_139 = arith.constant 5.000000e-01 : f32
    %466 = vector.broadcast %cst_139 : f32 to vector<8x32xf32>
    %467 = arith.mulf %466, %465 : vector<8x32xf32>
    %468 = math.tanh %446 : vector<8x32xf32>
    %469 = arith.mulf %467, %428 : vector<8x32xf32>
    %470 = arith.mulf %457, %468 : vector<8x32xf32>
    %471 = arith.addf %469, %470 : vector<8x32xf32>
    %472 = vector.broadcast %387 : vector<1x32xf32> to vector<8x32xf32>
    %473 = arith.mulf %472, %471 : vector<8x32xf32>
    %474 = arith.addf %447, %473 : vector<8x32xf32>
    %cst_140 = arith.constant 5.000000e-01 : f32
    %475 = vector.broadcast %cst_140 : f32 to vector<8x32xf32>
    %476 = arith.mulf %475, %474 : vector<8x32xf32>
    %477 = math.tanh %476 : vector<8x32xf32>
    %cst_141 = arith.constant 1.000000e+00 : f32
    %478 = vector.broadcast %cst_141 : f32 to vector<8x32xf32>
    %479 = arith.addf %477, %478 : vector<8x32xf32>
    %cst_142 = arith.constant 5.000000e-01 : f32
    %480 = vector.broadcast %cst_142 : f32 to vector<8x32xf32>
    %481 = arith.mulf %480, %479 : vector<8x32xf32>
    %482 = math.tanh %471 : vector<8x32xf32>
    %483 = arith.mulf %481, %482 : vector<8x32xf32>
    %484 = vector.extract_strided_slice %397 {offsets = [16, 0], sizes = [8, 128], strides = [1, 1]} : vector<64x128xf32> to vector<8x128xf32>
    %cst_143 = arith.constant dense<0.000000e+00> : vector<8x128xf32>
    %485 = tpu.matmul %483, %388, %cst_143 {dimension_numbers = #tpu.dot_dimension_numbers<[1], [0], [0], [1], [0, 0, 1, 1], [], []>} : vector<8x32xf32>, vector<32x128xf32>, vector<8x128xf32> -> vector<8x128xf32>
    %486 = arith.addf %484, %485 : vector<8x128xf32>
    %487 = vector.extract_strided_slice %486 {offsets = [0, 0], sizes = [8, 32], strides = [1, 1]} : vector<8x128xf32> to vector<8x32xf32>
    %488 = vector.extract_strided_slice %486 {offsets = [0, 32], sizes = [8, 32], strides = [1, 1]} : vector<8x128xf32> to vector<8x32xf32>
    %489 = vector.extract_strided_slice %486 {offsets = [0, 64], sizes = [8, 32], strides = [1, 1]} : vector<8x128xf32> to vector<8x32xf32>
    %490 = vector.extract_strided_slice %486 {offsets = [0, 96], sizes = [8, 32], strides = [1, 1]} : vector<8x128xf32> to vector<8x32xf32>
    %491 = vector.broadcast %385 : vector<1x32xf32> to vector<8x32xf32>
    %492 = arith.mulf %491, %471 : vector<8x32xf32>
    %493 = arith.addf %487, %492 : vector<8x32xf32>
    %cst_144 = arith.constant 5.000000e-01 : f32
    %494 = vector.broadcast %cst_144 : f32 to vector<8x32xf32>
    %495 = arith.mulf %494, %493 : vector<8x32xf32>
    %496 = math.tanh %495 : vector<8x32xf32>
    %cst_145 = arith.constant 1.000000e+00 : f32
    %497 = vector.broadcast %cst_145 : f32 to vector<8x32xf32>
    %498 = arith.addf %496, %497 : vector<8x32xf32>
    %cst_146 = arith.constant 5.000000e-01 : f32
    %499 = vector.broadcast %cst_146 : f32 to vector<8x32xf32>
    %500 = arith.mulf %499, %498 : vector<8x32xf32>
    %501 = vector.broadcast %386 : vector<1x32xf32> to vector<8x32xf32>
    %502 = arith.mulf %501, %471 : vector<8x32xf32>
    %503 = arith.addf %488, %502 : vector<8x32xf32>
    %cst_147 = arith.constant 5.000000e-01 : f32
    %504 = vector.broadcast %cst_147 : f32 to vector<8x32xf32>
    %505 = arith.mulf %504, %503 : vector<8x32xf32>
    %506 = math.tanh %505 : vector<8x32xf32>
    %cst_148 = arith.constant 1.000000e+00 : f32
    %507 = vector.broadcast %cst_148 : f32 to vector<8x32xf32>
    %508 = arith.addf %506, %507 : vector<8x32xf32>
    %cst_149 = arith.constant 5.000000e-01 : f32
    %509 = vector.broadcast %cst_149 : f32 to vector<8x32xf32>
    %510 = arith.mulf %509, %508 : vector<8x32xf32>
    %511 = math.tanh %489 : vector<8x32xf32>
    %512 = arith.mulf %510, %471 : vector<8x32xf32>
    %513 = arith.mulf %500, %511 : vector<8x32xf32>
    %514 = arith.addf %512, %513 : vector<8x32xf32>
    %515 = vector.broadcast %387 : vector<1x32xf32> to vector<8x32xf32>
    %516 = arith.mulf %515, %514 : vector<8x32xf32>
    %517 = arith.addf %490, %516 : vector<8x32xf32>
    %cst_150 = arith.constant 5.000000e-01 : f32
    %518 = vector.broadcast %cst_150 : f32 to vector<8x32xf32>
    %519 = arith.mulf %518, %517 : vector<8x32xf32>
    %520 = math.tanh %519 : vector<8x32xf32>
    %cst_151 = arith.constant 1.000000e+00 : f32
    %521 = vector.broadcast %cst_151 : f32 to vector<8x32xf32>
    %522 = arith.addf %520, %521 : vector<8x32xf32>
    %cst_152 = arith.constant 5.000000e-01 : f32
    %523 = vector.broadcast %cst_152 : f32 to vector<8x32xf32>
    %524 = arith.mulf %523, %522 : vector<8x32xf32>
    %525 = math.tanh %514 : vector<8x32xf32>
    %526 = arith.mulf %524, %525 : vector<8x32xf32>
    %527 = vector.extract_strided_slice %397 {offsets = [24, 0], sizes = [8, 128], strides = [1, 1]} : vector<64x128xf32> to vector<8x128xf32>
    %cst_153 = arith.constant dense<0.000000e+00> : vector<8x128xf32>
    %528 = tpu.matmul %526, %388, %cst_153 {dimension_numbers = #tpu.dot_dimension_numbers<[1], [0], [0], [1], [0, 0, 1, 1], [], []>} : vector<8x32xf32>, vector<32x128xf32>, vector<8x128xf32> -> vector<8x128xf32>
    %529 = arith.addf %527, %528 : vector<8x128xf32>
    %530 = vector.extract_strided_slice %529 {offsets = [0, 0], sizes = [8, 32], strides = [1, 1]} : vector<8x128xf32> to vector<8x32xf32>
    %531 = vector.extract_strided_slice %529 {offsets = [0, 32], sizes = [8, 32], strides = [1, 1]} : vector<8x128xf32> to vector<8x32xf32>
    %532 = vector.extract_strided_slice %529 {offsets = [0, 64], sizes = [8, 32], strides = [1, 1]} : vector<8x128xf32> to vector<8x32xf32>
    %533 = vector.extract_strided_slice %529 {offsets = [0, 96], sizes = [8, 32], strides = [1, 1]} : vector<8x128xf32> to vector<8x32xf32>
    %534 = vector.broadcast %385 : vector<1x32xf32> to vector<8x32xf32>
    %535 = arith.mulf %534, %514 : vector<8x32xf32>
    %536 = arith.addf %530, %535 : vector<8x32xf32>
    %cst_154 = arith.constant 5.000000e-01 : f32
    %537 = vector.broadcast %cst_154 : f32 to vector<8x32xf32>
    %538 = arith.mulf %537, %536 : vector<8x32xf32>
    %539 = math.tanh %538 : vector<8x32xf32>
    %cst_155 = arith.constant 1.000000e+00 : f32
    %540 = vector.broadcast %cst_155 : f32 to vector<8x32xf32>
    %541 = arith.addf %539, %540 : vector<8x32xf32>
    %cst_156 = arith.constant 5.000000e-01 : f32
    %542 = vector.broadcast %cst_156 : f32 to vector<8x32xf32>
    %543 = arith.mulf %542, %541 : vector<8x32xf32>
    %544 = vector.broadcast %386 : vector<1x32xf32> to vector<8x32xf32>
    %545 = arith.mulf %544, %514 : vector<8x32xf32>
    %546 = arith.addf %531, %545 : vector<8x32xf32>
    %cst_157 = arith.constant 5.000000e-01 : f32
    %547 = vector.broadcast %cst_157 : f32 to vector<8x32xf32>
    %548 = arith.mulf %547, %546 : vector<8x32xf32>
    %549 = math.tanh %548 : vector<8x32xf32>
    %cst_158 = arith.constant 1.000000e+00 : f32
    %550 = vector.broadcast %cst_158 : f32 to vector<8x32xf32>
    %551 = arith.addf %549, %550 : vector<8x32xf32>
    %cst_159 = arith.constant 5.000000e-01 : f32
    %552 = vector.broadcast %cst_159 : f32 to vector<8x32xf32>
    %553 = arith.mulf %552, %551 : vector<8x32xf32>
    %554 = math.tanh %532 : vector<8x32xf32>
    %555 = arith.mulf %553, %514 : vector<8x32xf32>
    %556 = arith.mulf %543, %554 : vector<8x32xf32>
    %557 = arith.addf %555, %556 : vector<8x32xf32>
    %558 = vector.broadcast %387 : vector<1x32xf32> to vector<8x32xf32>
    %559 = arith.mulf %558, %557 : vector<8x32xf32>
    %560 = arith.addf %533, %559 : vector<8x32xf32>
    %cst_160 = arith.constant 5.000000e-01 : f32
    %561 = vector.broadcast %cst_160 : f32 to vector<8x32xf32>
    %562 = arith.mulf %561, %560 : vector<8x32xf32>
    %563 = math.tanh %562 : vector<8x32xf32>
    %cst_161 = arith.constant 1.000000e+00 : f32
    %564 = vector.broadcast %cst_161 : f32 to vector<8x32xf32>
    %565 = arith.addf %563, %564 : vector<8x32xf32>
    %cst_162 = arith.constant 5.000000e-01 : f32
    %566 = vector.broadcast %cst_162 : f32 to vector<8x32xf32>
    %567 = arith.mulf %566, %565 : vector<8x32xf32>
    %568 = math.tanh %557 : vector<8x32xf32>
    %569 = arith.mulf %567, %568 : vector<8x32xf32>
    %570 = vector.extract_strided_slice %397 {offsets = [32, 0], sizes = [8, 128], strides = [1, 1]} : vector<64x128xf32> to vector<8x128xf32>
    %cst_163 = arith.constant dense<0.000000e+00> : vector<8x128xf32>
    %571 = tpu.matmul %569, %388, %cst_163 {dimension_numbers = #tpu.dot_dimension_numbers<[1], [0], [0], [1], [0, 0, 1, 1], [], []>} : vector<8x32xf32>, vector<32x128xf32>, vector<8x128xf32> -> vector<8x128xf32>
    %572 = arith.addf %570, %571 : vector<8x128xf32>
    %573 = vector.extract_strided_slice %572 {offsets = [0, 0], sizes = [8, 32], strides = [1, 1]} : vector<8x128xf32> to vector<8x32xf32>
    %574 = vector.extract_strided_slice %572 {offsets = [0, 32], sizes = [8, 32], strides = [1, 1]} : vector<8x128xf32> to vector<8x32xf32>
    %575 = vector.extract_strided_slice %572 {offsets = [0, 64], sizes = [8, 32], strides = [1, 1]} : vector<8x128xf32> to vector<8x32xf32>
    %576 = vector.extract_strided_slice %572 {offsets = [0, 96], sizes = [8, 32], strides = [1, 1]} : vector<8x128xf32> to vector<8x32xf32>
    %577 = vector.broadcast %385 : vector<1x32xf32> to vector<8x32xf32>
    %578 = arith.mulf %577, %557 : vector<8x32xf32>
    %579 = arith.addf %573, %578 : vector<8x32xf32>
    %cst_164 = arith.constant 5.000000e-01 : f32
    %580 = vector.broadcast %cst_164 : f32 to vector<8x32xf32>
    %581 = arith.mulf %580, %579 : vector<8x32xf32>
    %582 = math.tanh %581 : vector<8x32xf32>
    %cst_165 = arith.constant 1.000000e+00 : f32
    %583 = vector.broadcast %cst_165 : f32 to vector<8x32xf32>
    %584 = arith.addf %582, %583 : vector<8x32xf32>
    %cst_166 = arith.constant 5.000000e-01 : f32
    %585 = vector.broadcast %cst_166 : f32 to vector<8x32xf32>
    %586 = arith.mulf %585, %584 : vector<8x32xf32>
    %587 = vector.broadcast %386 : vector<1x32xf32> to vector<8x32xf32>
    %588 = arith.mulf %587, %557 : vector<8x32xf32>
    %589 = arith.addf %574, %588 : vector<8x32xf32>
    %cst_167 = arith.constant 5.000000e-01 : f32
    %590 = vector.broadcast %cst_167 : f32 to vector<8x32xf32>
    %591 = arith.mulf %590, %589 : vector<8x32xf32>
    %592 = math.tanh %591 : vector<8x32xf32>
    %cst_168 = arith.constant 1.000000e+00 : f32
    %593 = vector.broadcast %cst_168 : f32 to vector<8x32xf32>
    %594 = arith.addf %592, %593 : vector<8x32xf32>
    %cst_169 = arith.constant 5.000000e-01 : f32
    %595 = vector.broadcast %cst_169 : f32 to vector<8x32xf32>
    %596 = arith.mulf %595, %594 : vector<8x32xf32>
    %597 = math.tanh %575 : vector<8x32xf32>
    %598 = arith.mulf %596, %557 : vector<8x32xf32>
    %599 = arith.mulf %586, %597 : vector<8x32xf32>
    %600 = arith.addf %598, %599 : vector<8x32xf32>
    %601 = vector.broadcast %387 : vector<1x32xf32> to vector<8x32xf32>
    %602 = arith.mulf %601, %600 : vector<8x32xf32>
    %603 = arith.addf %576, %602 : vector<8x32xf32>
    %cst_170 = arith.constant 5.000000e-01 : f32
    %604 = vector.broadcast %cst_170 : f32 to vector<8x32xf32>
    %605 = arith.mulf %604, %603 : vector<8x32xf32>
    %606 = math.tanh %605 : vector<8x32xf32>
    %cst_171 = arith.constant 1.000000e+00 : f32
    %607 = vector.broadcast %cst_171 : f32 to vector<8x32xf32>
    %608 = arith.addf %606, %607 : vector<8x32xf32>
    %cst_172 = arith.constant 5.000000e-01 : f32
    %609 = vector.broadcast %cst_172 : f32 to vector<8x32xf32>
    %610 = arith.mulf %609, %608 : vector<8x32xf32>
    %611 = math.tanh %600 : vector<8x32xf32>
    %612 = arith.mulf %610, %611 : vector<8x32xf32>
    %613 = vector.extract_strided_slice %397 {offsets = [40, 0], sizes = [8, 128], strides = [1, 1]} : vector<64x128xf32> to vector<8x128xf32>
    %cst_173 = arith.constant dense<0.000000e+00> : vector<8x128xf32>
    %614 = tpu.matmul %612, %388, %cst_173 {dimension_numbers = #tpu.dot_dimension_numbers<[1], [0], [0], [1], [0, 0, 1, 1], [], []>} : vector<8x32xf32>, vector<32x128xf32>, vector<8x128xf32> -> vector<8x128xf32>
    %615 = arith.addf %613, %614 : vector<8x128xf32>
    %616 = vector.extract_strided_slice %615 {offsets = [0, 0], sizes = [8, 32], strides = [1, 1]} : vector<8x128xf32> to vector<8x32xf32>
    %617 = vector.extract_strided_slice %615 {offsets = [0, 32], sizes = [8, 32], strides = [1, 1]} : vector<8x128xf32> to vector<8x32xf32>
    %618 = vector.extract_strided_slice %615 {offsets = [0, 64], sizes = [8, 32], strides = [1, 1]} : vector<8x128xf32> to vector<8x32xf32>
    %619 = vector.extract_strided_slice %615 {offsets = [0, 96], sizes = [8, 32], strides = [1, 1]} : vector<8x128xf32> to vector<8x32xf32>
    %620 = vector.broadcast %385 : vector<1x32xf32> to vector<8x32xf32>
    %621 = arith.mulf %620, %600 : vector<8x32xf32>
    %622 = arith.addf %616, %621 : vector<8x32xf32>
    %cst_174 = arith.constant 5.000000e-01 : f32
    %623 = vector.broadcast %cst_174 : f32 to vector<8x32xf32>
    %624 = arith.mulf %623, %622 : vector<8x32xf32>
    %625 = math.tanh %624 : vector<8x32xf32>
    %cst_175 = arith.constant 1.000000e+00 : f32
    %626 = vector.broadcast %cst_175 : f32 to vector<8x32xf32>
    %627 = arith.addf %625, %626 : vector<8x32xf32>
    %cst_176 = arith.constant 5.000000e-01 : f32
    %628 = vector.broadcast %cst_176 : f32 to vector<8x32xf32>
    %629 = arith.mulf %628, %627 : vector<8x32xf32>
    %630 = vector.broadcast %386 : vector<1x32xf32> to vector<8x32xf32>
    %631 = arith.mulf %630, %600 : vector<8x32xf32>
    %632 = arith.addf %617, %631 : vector<8x32xf32>
    %cst_177 = arith.constant 5.000000e-01 : f32
    %633 = vector.broadcast %cst_177 : f32 to vector<8x32xf32>
    %634 = arith.mulf %633, %632 : vector<8x32xf32>
    %635 = math.tanh %634 : vector<8x32xf32>
    %cst_178 = arith.constant 1.000000e+00 : f32
    %636 = vector.broadcast %cst_178 : f32 to vector<8x32xf32>
    %637 = arith.addf %635, %636 : vector<8x32xf32>
    %cst_179 = arith.constant 5.000000e-01 : f32
    %638 = vector.broadcast %cst_179 : f32 to vector<8x32xf32>
    %639 = arith.mulf %638, %637 : vector<8x32xf32>
    %640 = math.tanh %618 : vector<8x32xf32>
    %641 = arith.mulf %639, %600 : vector<8x32xf32>
    %642 = arith.mulf %629, %640 : vector<8x32xf32>
    %643 = arith.addf %641, %642 : vector<8x32xf32>
    %644 = vector.broadcast %387 : vector<1x32xf32> to vector<8x32xf32>
    %645 = arith.mulf %644, %643 : vector<8x32xf32>
    %646 = arith.addf %619, %645 : vector<8x32xf32>
    %cst_180 = arith.constant 5.000000e-01 : f32
    %647 = vector.broadcast %cst_180 : f32 to vector<8x32xf32>
    %648 = arith.mulf %647, %646 : vector<8x32xf32>
    %649 = math.tanh %648 : vector<8x32xf32>
    %cst_181 = arith.constant 1.000000e+00 : f32
    %650 = vector.broadcast %cst_181 : f32 to vector<8x32xf32>
    %651 = arith.addf %649, %650 : vector<8x32xf32>
    %cst_182 = arith.constant 5.000000e-01 : f32
    %652 = vector.broadcast %cst_182 : f32 to vector<8x32xf32>
    %653 = arith.mulf %652, %651 : vector<8x32xf32>
    %654 = math.tanh %643 : vector<8x32xf32>
    %655 = arith.mulf %653, %654 : vector<8x32xf32>
    %656 = vector.extract_strided_slice %397 {offsets = [48, 0], sizes = [8, 128], strides = [1, 1]} : vector<64x128xf32> to vector<8x128xf32>
    %cst_183 = arith.constant dense<0.000000e+00> : vector<8x128xf32>
    %657 = tpu.matmul %655, %388, %cst_183 {dimension_numbers = #tpu.dot_dimension_numbers<[1], [0], [0], [1], [0, 0, 1, 1], [], []>} : vector<8x32xf32>, vector<32x128xf32>, vector<8x128xf32> -> vector<8x128xf32>
    %658 = arith.addf %656, %657 : vector<8x128xf32>
    %659 = vector.extract_strided_slice %658 {offsets = [0, 0], sizes = [8, 32], strides = [1, 1]} : vector<8x128xf32> to vector<8x32xf32>
    %660 = vector.extract_strided_slice %658 {offsets = [0, 32], sizes = [8, 32], strides = [1, 1]} : vector<8x128xf32> to vector<8x32xf32>
    %661 = vector.extract_strided_slice %658 {offsets = [0, 64], sizes = [8, 32], strides = [1, 1]} : vector<8x128xf32> to vector<8x32xf32>
    %662 = vector.extract_strided_slice %658 {offsets = [0, 96], sizes = [8, 32], strides = [1, 1]} : vector<8x128xf32> to vector<8x32xf32>
    %663 = vector.broadcast %385 : vector<1x32xf32> to vector<8x32xf32>
    %664 = arith.mulf %663, %643 : vector<8x32xf32>
    %665 = arith.addf %659, %664 : vector<8x32xf32>
    %cst_184 = arith.constant 5.000000e-01 : f32
    %666 = vector.broadcast %cst_184 : f32 to vector<8x32xf32>
    %667 = arith.mulf %666, %665 : vector<8x32xf32>
    %668 = math.tanh %667 : vector<8x32xf32>
    %cst_185 = arith.constant 1.000000e+00 : f32
    %669 = vector.broadcast %cst_185 : f32 to vector<8x32xf32>
    %670 = arith.addf %668, %669 : vector<8x32xf32>
    %cst_186 = arith.constant 5.000000e-01 : f32
    %671 = vector.broadcast %cst_186 : f32 to vector<8x32xf32>
    %672 = arith.mulf %671, %670 : vector<8x32xf32>
    %673 = vector.broadcast %386 : vector<1x32xf32> to vector<8x32xf32>
    %674 = arith.mulf %673, %643 : vector<8x32xf32>
    %675 = arith.addf %660, %674 : vector<8x32xf32>
    %cst_187 = arith.constant 5.000000e-01 : f32
    %676 = vector.broadcast %cst_187 : f32 to vector<8x32xf32>
    %677 = arith.mulf %676, %675 : vector<8x32xf32>
    %678 = math.tanh %677 : vector<8x32xf32>
    %cst_188 = arith.constant 1.000000e+00 : f32
    %679 = vector.broadcast %cst_188 : f32 to vector<8x32xf32>
    %680 = arith.addf %678, %679 : vector<8x32xf32>
    %cst_189 = arith.constant 5.000000e-01 : f32
    %681 = vector.broadcast %cst_189 : f32 to vector<8x32xf32>
    %682 = arith.mulf %681, %680 : vector<8x32xf32>
    %683 = math.tanh %661 : vector<8x32xf32>
    %684 = arith.mulf %682, %643 : vector<8x32xf32>
    %685 = arith.mulf %672, %683 : vector<8x32xf32>
    %686 = arith.addf %684, %685 : vector<8x32xf32>
    %687 = vector.broadcast %387 : vector<1x32xf32> to vector<8x32xf32>
    %688 = arith.mulf %687, %686 : vector<8x32xf32>
    %689 = arith.addf %662, %688 : vector<8x32xf32>
    %cst_190 = arith.constant 5.000000e-01 : f32
    %690 = vector.broadcast %cst_190 : f32 to vector<8x32xf32>
    %691 = arith.mulf %690, %689 : vector<8x32xf32>
    %692 = math.tanh %691 : vector<8x32xf32>
    %cst_191 = arith.constant 1.000000e+00 : f32
    %693 = vector.broadcast %cst_191 : f32 to vector<8x32xf32>
    %694 = arith.addf %692, %693 : vector<8x32xf32>
    %cst_192 = arith.constant 5.000000e-01 : f32
    %695 = vector.broadcast %cst_192 : f32 to vector<8x32xf32>
    %696 = arith.mulf %695, %694 : vector<8x32xf32>
    %697 = math.tanh %686 : vector<8x32xf32>
    %698 = arith.mulf %696, %697 : vector<8x32xf32>
    %699 = vector.extract_strided_slice %397 {offsets = [56, 0], sizes = [8, 128], strides = [1, 1]} : vector<64x128xf32> to vector<8x128xf32>
    %cst_193 = arith.constant dense<0.000000e+00> : vector<8x128xf32>
    %700 = tpu.matmul %698, %388, %cst_193 {dimension_numbers = #tpu.dot_dimension_numbers<[1], [0], [0], [1], [0, 0, 1, 1], [], []>} : vector<8x32xf32>, vector<32x128xf32>, vector<8x128xf32> -> vector<8x128xf32>
    %701 = arith.addf %699, %700 : vector<8x128xf32>
    %702 = vector.extract_strided_slice %701 {offsets = [0, 0], sizes = [8, 32], strides = [1, 1]} : vector<8x128xf32> to vector<8x32xf32>
    %703 = vector.extract_strided_slice %701 {offsets = [0, 32], sizes = [8, 32], strides = [1, 1]} : vector<8x128xf32> to vector<8x32xf32>
    %704 = vector.extract_strided_slice %701 {offsets = [0, 64], sizes = [8, 32], strides = [1, 1]} : vector<8x128xf32> to vector<8x32xf32>
    %705 = vector.extract_strided_slice %701 {offsets = [0, 96], sizes = [8, 32], strides = [1, 1]} : vector<8x128xf32> to vector<8x32xf32>
    %706 = vector.broadcast %385 : vector<1x32xf32> to vector<8x32xf32>
    %707 = arith.mulf %706, %686 : vector<8x32xf32>
    %708 = arith.addf %702, %707 : vector<8x32xf32>
    %cst_194 = arith.constant 5.000000e-01 : f32
    %709 = vector.broadcast %cst_194 : f32 to vector<8x32xf32>
    %710 = arith.mulf %709, %708 : vector<8x32xf32>
    %711 = math.tanh %710 : vector<8x32xf32>
    %cst_195 = arith.constant 1.000000e+00 : f32
    %712 = vector.broadcast %cst_195 : f32 to vector<8x32xf32>
    %713 = arith.addf %711, %712 : vector<8x32xf32>
    %cst_196 = arith.constant 5.000000e-01 : f32
    %714 = vector.broadcast %cst_196 : f32 to vector<8x32xf32>
    %715 = arith.mulf %714, %713 : vector<8x32xf32>
    %716 = vector.broadcast %386 : vector<1x32xf32> to vector<8x32xf32>
    %717 = arith.mulf %716, %686 : vector<8x32xf32>
    %718 = arith.addf %703, %717 : vector<8x32xf32>
    %cst_197 = arith.constant 5.000000e-01 : f32
    %719 = vector.broadcast %cst_197 : f32 to vector<8x32xf32>
    %720 = arith.mulf %719, %718 : vector<8x32xf32>
    %721 = math.tanh %720 : vector<8x32xf32>
    %cst_198 = arith.constant 1.000000e+00 : f32
    %722 = vector.broadcast %cst_198 : f32 to vector<8x32xf32>
    %723 = arith.addf %721, %722 : vector<8x32xf32>
    %cst_199 = arith.constant 5.000000e-01 : f32
    %724 = vector.broadcast %cst_199 : f32 to vector<8x32xf32>
    %725 = arith.mulf %724, %723 : vector<8x32xf32>
    %726 = math.tanh %704 : vector<8x32xf32>
    %727 = arith.mulf %725, %686 : vector<8x32xf32>
    %728 = arith.mulf %715, %726 : vector<8x32xf32>
    %729 = arith.addf %727, %728 : vector<8x32xf32>
    %730 = vector.broadcast %387 : vector<1x32xf32> to vector<8x32xf32>
    %731 = arith.mulf %730, %729 : vector<8x32xf32>
    %732 = arith.addf %705, %731 : vector<8x32xf32>
    %cst_200 = arith.constant 5.000000e-01 : f32
    %733 = vector.broadcast %cst_200 : f32 to vector<8x32xf32>
    %734 = arith.mulf %733, %732 : vector<8x32xf32>
    %735 = math.tanh %734 : vector<8x32xf32>
    %cst_201 = arith.constant 1.000000e+00 : f32
    %736 = vector.broadcast %cst_201 : f32 to vector<8x32xf32>
    %737 = arith.addf %735, %736 : vector<8x32xf32>
    %cst_202 = arith.constant 5.000000e-01 : f32
    %738 = vector.broadcast %cst_202 : f32 to vector<8x32xf32>
    %739 = arith.mulf %738, %737 : vector<8x32xf32>
    %740 = math.tanh %729 : vector<8x32xf32>
    %741 = arith.mulf %739, %740 : vector<8x32xf32>
    %c1_203 = arith.constant 1 : index
    %c0_204 = arith.constant 0 : index
    %c0_205 = arith.constant 0 : index
    %742 = vector.load %arg12[%c1_203, %c0_204, %c0_205] : memref<2x8x32xf32, #tpu.memory_space<vmem>>, vector<1x8x32xf32>
    %743 = vector.shape_cast %742 : vector<1x8x32xf32> to vector<8x32xf32>
    %744 = vector.shape_cast %741 : vector<8x32xf32> to vector<1x8x32xf32>
    tpu.vector_store %arg12[%c1_203, %c0_204, %c0_205], %744 {strides = array<i32>} : memref<2x8x32xf32, #tpu.memory_space<vmem>>, vector<1x8x32xf32>,
    %c1_206 = arith.constant 1 : index
    %c0_207 = arith.constant 0 : index
    %c0_208 = arith.constant 0 : index
    %745 = vector.load %arg13[%c1_206, %c0_207, %c0_208] : memref<2x8x32xf32, #tpu.memory_space<vmem>>, vector<1x8x32xf32>
    %746 = vector.shape_cast %745 : vector<1x8x32xf32> to vector<8x32xf32>
    %747 = vector.shape_cast %729 : vector<8x32xf32> to vector<1x8x32xf32>
    tpu.vector_store %arg13[%c1_206, %c0_207, %c0_208], %747 {strides = array<i32>} : memref<2x8x32xf32, #tpu.memory_space<vmem>>, vector<1x8x32xf32>,
    %748 = tpu.concatenate %440, %483, %526, %569, %612, %655, %698, %741 in 1 : vector<8x32xf32>, vector<8x32xf32>, vector<8x32xf32>, vector<8x32xf32>, vector<8x32xf32>, vector<8x32xf32>, vector<8x32xf32>, vector<8x32xf32> -> vector<8x256xf32>
    %c0_209 = arith.constant 0 : index
    %c0_210 = arith.constant 0 : index
    %749 = vector.load %arg11[%c0_209, %c0_210] : memref<8x256xf32, #tpu.memory_space<vmem>>, vector<8x256xf32>
    tpu.vector_store %arg11[%c0_209, %c0_210], %748 {strides = array<i32>} : memref<8x256xf32, #tpu.memory_space<vmem>>, vector<8x256xf32>,
    return
  }
  func.func @transform_0(%arg0: i32, %arg1: i32) -> (i32, i32, i32) {
    %c0_i32 = arith.constant 0 : i32
    %c0_i32_0 = arith.constant 0 : i32
    return %arg0, %arg1, %c0_i32 : i32, i32, i32
  }
  func.func @transform_1(%arg0: i32, %arg1: i32) -> (i32, i32) {
    %c0_i32 = arith.constant 0 : i32
    %c0_i32_0 = arith.constant 0 : i32
    %c0_i32_1 = arith.constant 0 : i32
    return %c0_i32, %c0_i32_0 : i32, i32
  }
  func.func @transform_2(%arg0: i32, %arg1: i32) -> (i32, i32) {
    %c0_i32 = arith.constant 0 : i32
    %c0_i32_0 = arith.constant 0 : i32
    %c0_i32_1 = arith.constant 0 : i32
    return %c0_i32, %c0_i32_0 : i32, i32
  }
  func.func @transform_3(%arg0: i32, %arg1: i32) -> (i32, i32) {
    %c0_i32 = arith.constant 0 : i32
    %c0_i32_0 = arith.constant 0 : i32
    %c0_i32_1 = arith.constant 0 : i32
    return %c0_i32, %c0_i32_0 : i32, i32
  }
  func.func @transform_4(%arg0: i32, %arg1: i32) -> (i32, i32) {
    %c0_i32 = arith.constant 0 : i32
    %c0_i32_0 = arith.constant 0 : i32
    %c0_i32_1 = arith.constant 0 : i32
    return %c0_i32, %c0_i32_0 : i32, i32
  }
  func.func @transform_5(%arg0: i32, %arg1: i32) -> (i32, i32) {
    %c0_i32 = arith.constant 0 : i32
    %c0_i32_0 = arith.constant 0 : i32
    %c0_i32_1 = arith.constant 0 : i32
    return %c0_i32, %c0_i32_0 : i32, i32
  }
  func.func @transform_6(%arg0: i32, %arg1: i32) -> (i32, i32) {
    %c0_i32 = arith.constant 0 : i32
    %c0_i32_0 = arith.constant 0 : i32
    %c0_i32_1 = arith.constant 0 : i32
    return %c0_i32, %c0_i32_0 : i32, i32
  }
  func.func @transform_7(%arg0: i32, %arg1: i32) -> (i32, i32, i32) {
    %c0_i32 = arith.constant 0 : i32
    %c0_i32_0 = arith.constant 0 : i32
    %c0_i32_1 = arith.constant 0 : i32
    return %c0_i32, %arg0, %c0_i32_0 : i32, i32, i32
  }
  func.func @transform_8(%arg0: i32, %arg1: i32) -> (i32, i32, i32) {
    %c0_i32 = arith.constant 0 : i32
    %c0_i32_0 = arith.constant 0 : i32
    %c0_i32_1 = arith.constant 0 : i32
    return %c0_i32, %arg0, %c0_i32_0 : i32, i32, i32
  }
  func.func @transform_9(%arg0: i32, %arg1: i32) -> (i32, i32) {
    %c0_i32 = arith.constant 0 : i32
    return %arg0, %arg1 : i32, i32
  }
  func.func @transform_10(%arg0: i32, %arg1: i32) -> (i32, i32, i32) {
    %c0_i32 = arith.constant 0 : i32
    %c0_i32_0 = arith.constant 0 : i32
    %c0_i32_1 = arith.constant 0 : i32
    return %c0_i32, %arg0, %c0_i32_0 : i32, i32, i32
  }
  func.func @transform_11(%arg0: i32, %arg1: i32) -> (i32, i32, i32) {
    %c0_i32 = arith.constant 0 : i32
    %c0_i32_0 = arith.constant 0 : i32
    %c0_i32_1 = arith.constant 0 : i32
    return %c0_i32, %arg0, %c0_i32_0 : i32, i32, i32
  }
}

</mosaic_0001>

<llo_original>
// kernel: tpu_custom_call.1
$region0: #{tpu_custom_call.1}
  #allocation0 [shape = 'u32[]', space=smem, size = 0x4, offset = 0x4, fixed_abs, tag = 'smem constant byte address 0x4 - core index']
  #allocation1 [shape = 'u32[144,128]{1,0:T(1,128)}', space=vmem, size = 0x12000, scoped, tag = 'internal scratch']
  %s0 = inlined_call_operand.hbm [shape: f32[8,8,16], index: 0, kind: input, shape index: {}]
  %s1 = inlined_call_operand.hbm [shape: f32[16,128], index: 1, kind: input, shape index: {}]
  %s2 = inlined_call_operand.hbm [shape: f32[32,128], index: 2, kind: input, shape index: {}]
  %s3 = inlined_call_operand.hbm [shape: f32[8,128], index: 3, kind: input, shape index: {}]
  %s4 = inlined_call_operand.hbm [shape: f32[32,128], index: 4, kind: input, shape index: {}]
  %s5 = inlined_call_operand.hbm [shape: f32[32,128], index: 5, kind: input, shape index: {}]
  %s6 = inlined_call_operand.vmem [shape: f32[8,128], index: 6, kind: input, shape index: {}]
  %s7 = inlined_call_operand.hbm [shape: f32[2,8,32], index: 7, kind: input, shape index: {}]
  %s8 = inlined_call_operand.hbm [shape: f32[2,8,32], index: 8, kind: input, shape index: {}]
  %s9 = inlined_call_operand.hbm [shape: f32[8,256], index: 9, kind: output, shape index: {0}]
  %s10 = inlined_call_operand.hbm [shape: f32[2,8,32], index: 10, kind: output, shape index: {1}]
  %s11 = inlined_call_operand.hbm [shape: f32[2,8,32], index: 11, kind: output, shape index: {2}]
  %12 = xla_tuple %s9, %s10, %s11
  %s13 = sld [smem:[#allocation0]]
  $region98: #{tpu_custom_call.1} parent=0
    _
  %s15 = ssub.s32 1, %s13
  %s16 = scalar_select 0, %s15, %s13
  $region1: #{tpu_custom_call.1} parent=0
    #allocation2 [shape = 'u8[32768]{0}', space=vmem, size = 0x8000, scoped, tag = 'input window, operand 0, single buffered']
    #allocation3 [shape = 's32[1]{0}', space=sflag, size = 0x4, scoped, tag = 'scoped memory for tpu_custom_call.1']
    #allocation4 [shape = 's32[1]{0}', space=sflag, size = 0x4, scoped, tag = 'scoped memory for tpu_custom_call.1']
    #allocation5 [shape = 'u8[8192]{0}', space=vmem, size = 0x2000, scoped, tag = 'input window, operand 1, single buffered']
    #allocation6 [shape = 's32[1]{0}', space=sflag, size = 0x4, scoped, tag = 'scoped memory for tpu_custom_call.1']
    #allocation7 [shape = 'u8[16384]{0}', space=vmem, size = 0x4000, scoped, tag = 'input window, operand 2, single buffered']
    #allocation8 [shape = 'u8[4096]{0}', space=vmem, size = 0x1000, scoped, tag = 'input window, operand 3, single buffered']
    #allocation9 [shape = 's32[1]{0}', space=sflag, size = 0x4, scoped, tag = 'scoped memory for tpu_custom_call.1']
    #allocation10 [shape = 'u8[16384]{0}', space=vmem, size = 0x4000, scoped, tag = 'input window, operand 4, single buffered']
    #allocation11 [shape = 'u8[16384]{0}', space=vmem, size = 0x4000, scoped, tag = 'input window, operand 5, single buffered']
    #allocation12 [shape = 's32[1]{0}', space=sflag, size = 0x4, scoped, tag = 'scoped memory for tpu_custom_call.1']
    #allocation13 [shape = 'u8[8192]{0}', space=vmem, size = 0x2000, scoped, tag = 'input window, operand 7, single buffered']
    #allocation14 [shape = 'u8[8192]{0}', space=vmem, size = 0x2000, scoped, tag = 'input window, operand 8, single buffered']
    #allocation15 [shape = 's32[1]{0}', space=sflag, size = 0x4, scoped, tag = 'scoped memory for tpu_custom_call.1']
    #allocation16 [shape = 'u8[8192]{0}', space=vmem, size = 0x2000, scoped, tag = 'output window, operand 0, single buffered']
    #allocation17 [shape = 'u8[8192]{0}', space=vmem, size = 0x2000, scoped, tag = 'output window, operand 1, single buffered']
    #allocation18 [shape = 's32[1]{0}', space=sflag, size = 0x4, scoped, tag = 'scoped memory for tpu_custom_call.1']
    #allocation19 [shape = 'u8[8192]{0}', space=vmem, size = 0x2000, scoped, tag = 'output window, operand 2, single buffered']
    %17 = vsyncpa [#allocation3], 0
    %18 = vsyncpa [#allocation6], 0
    %19 = vsyncpa [#allocation9], 0
    %20 = vsyncpa [#allocation12], 0
    %21 = vsyncpa [#allocation15], 0
    %22 = vsyncpa [#allocation4], 0
    %23 = vsyncpa [#allocation18], 0
    // Predicated region
    $region2: #{tpu_custom_call.1} parent=1 // pred_check
      _
    $region3: #{tpu_custom_call.1} parent=1 // pred_check_branch
      %25 = sbr.rel (0) target = $region5
    $region4: #{tpu_custom_call.1} parent=1 // pred_region
      %s27 = ssub.s32 1024, 1024
      %28 = vsyncadd [#allocation3], %s27
      %s29 = sshll.u32 [#allocation2], 4
      %s30 = int_to_ptr.vmem [resolvable:$true] %s29
      %35 = dma.hbm_to_vmem [thread:$0]  %s0, 1024, %s30, [#allocation3], 128, 128, 8
    $region5: #{tpu_custom_call.1} parent=1 // pred_fallthru
      _
    // Predicated region
    $region6: #{tpu_custom_call.1} parent=1 // pred_check
      _
    $region7: #{tpu_custom_call.1} parent=1 // pred_check_branch
      %37 = sbr.rel (0) target = $region9
    $region8: #{tpu_custom_call.1} parent=1 // pred_region
      %s39 = ssub.s32 256, 256
      %40 = vsyncadd [#allocation6], %s39
      %s41 = sshll.u32 [#allocation5], 4
      %s42 = int_to_ptr.vmem [resolvable:$true] %s41
      %47 = dma.hbm_to_vmem [thread:$0]  %s1, 256, %s42, [#allocation6], 128, 128, 8
    $region9: #{tpu_custom_call.1} parent=1 // pred_fallthru
      _
    // Predicated region
    $region10: #{tpu_custom_call.1} parent=1 // pred_check
      _
    $region11: #{tpu_custom_call.1} parent=1 // pred_check_branch
      %49 = sbr.rel (0) target = $region13
    $region12: #{tpu_custom_call.1} parent=1 // pred_region
      %s51 = ssub.s32 512, 512
      %52 = vsyncadd [#allocation6], %s51
      %s53 = sshll.u32 [#allocation7], 4
      %s54 = int_to_ptr.vmem [resolvable:$true] %s53
      %59 = dma.hbm_to_vmem [thread:$0]  %s2, 512, %s54, [#allocation6], 128, 128, 8
    $region13: #{tpu_custom_call.1} parent=1 // pred_fallthru
      _
    // Predicated region
    $region14: #{tpu_custom_call.1} parent=1 // pred_check
      _
    $region15: #{tpu_custom_call.1} parent=1 // pred_check_branch
      %61 = sbr.rel (0) target = $region17
    $region16: #{tpu_custom_call.1} parent=1 // pred_region
      %s63 = ssub.s32 128, 128
      %64 = vsyncadd [#allocation9], %s63
      %s66 = sshll.u32 [#allocation8], 4
      %s67 = int_to_ptr.vmem [resolvable:$true] %s66
      %69 = dma.hbm_to_vmem [thread:$0]  %s3, 128, %s67, [#allocation9]
    $region17: #{tpu_custom_call.1} parent=1 // pred_fallthru
      _
    // Predicated region
    $region18: #{tpu_custom_call.1} parent=1 // pred_check
      _
    $region19: #{tpu_custom_call.1} parent=1 // pred_check_branch
      %71 = sbr.rel (0) target = $region21
    $region20: #{tpu_custom_call.1} parent=1 // pred_region
      %s73 = ssub.s32 512, 512
      %74 = vsyncadd [#allocation9], %s73
      %s75 = sshll.u32 [#allocation10], 4
      %s76 = int_to_ptr.vmem [resolvable:$true] %s75
      %81 = dma.hbm_to_vmem [thread:$0]  %s4, 512, %s76, [#allocation9], 128, 128, 8
    $region21: #{tpu_custom_call.1} parent=1 // pred_fallthru
      _
    // Predicated region
    $region22: #{tpu_custom_call.1} parent=1 // pred_check
      _
    $region23: #{tpu_custom_call.1} parent=1 // pred_check_branch
      %83 = sbr.rel (0) target = $region25
    $region24: #{tpu_custom_call.1} parent=1 // pred_region
      %s85 = ssub.s32 512, 512
      %86 = vsyncadd [#allocation12], %s85
      %s87 = sshll.u32 [#allocation11], 4
      %s88 = int_to_ptr.vmem [resolvable:$true] %s87
      %93 = dma.hbm_to_vmem [thread:$0]  %s5, 512, %s88, [#allocation12], 128, 128, 8
    $region25: #{tpu_custom_call.1} parent=1 // pred_fallthru
      _
    // Predicated region
    $region26: #{tpu_custom_call.1} parent=1 // pred_check
      _
    $region27: #{tpu_custom_call.1} parent=1 // pred_check_branch
      %95 = sbr.rel (0) target = $region29
    $region28: #{tpu_custom_call.1} parent=1 // pred_region
      _
    $region29: #{tpu_custom_call.1} parent=1 // pred_fallthru
      _
    // Predicated region
    $region30: #{tpu_custom_call.1} parent=1 // pred_check
      _
    $region31: #{tpu_custom_call.1} parent=1 // pred_check_branch
      %97 = sbr.rel (0) target = $region33
    $region32: #{tpu_custom_call.1} parent=1 // pred_region
      %s99 = ssub.s32 256, 256
      %100 = vsyncadd [#allocation12], %s99
      %s101 = sshll.u32 [#allocation13], 4
      %s102 = int_to_ptr.vmem [resolvable:$true] %s101
      %107 = dma.hbm_to_vmem [thread:$0]  %s7, 256, %s102, [#allocation12], 128, 128, 8
    $region33: #{tpu_custom_call.1} parent=1 // pred_fallthru
      _
    // Predicated region
    $region34: #{tpu_custom_call.1} parent=1 // pred_check
      _
    $region35: #{tpu_custom_call.1} parent=1 // pred_check_branch
      %109 = sbr.rel (0) target = $region37
    $region36: #{tpu_custom_call.1} parent=1 // pred_region
      %s111 = ssub.s32 256, 256
      %112 = vsyncadd [#allocation15], %s111
      %s113 = sshll.u32 [#allocation14], 4
      %s114 = int_to_ptr.vmem [resolvable:$true] %s113
      %119 = dma.hbm_to_vmem [thread:$0]  %s8, 256, %s114, [#allocation15], 128, 128, 8
    $region37: #{tpu_custom_call.1} parent=1 // pred_fallthru
      _
    // Predicated region
    $region38: #{tpu_custom_call.1} parent=1 // pred_check
      _
    $region39: #{tpu_custom_call.1} parent=1 // pred_check_branch
      %121 = sbr.rel (0) target = $region41
    $region40: #{tpu_custom_call.1} parent=1 // pred_region
      %122 = dma.done [#allocation3], 1024
    $region41: #{tpu_custom_call.1} parent=1 // pred_fallthru
      _
    // Predicated region
    $region42: #{tpu_custom_call.1} parent=1 // pred_check
      _
    $region43: #{tpu_custom_call.1} parent=1 // pred_check_branch
      %124 = sbr.rel (0) target = $region45
    $region44: #{tpu_custom_call.1} parent=1 // pred_region
      %125 = dma.done [#allocation6], 256
    $region45: #{tpu_custom_call.1} parent=1 // pred_fallthru
      _
    // Predicated region
    $region46: #{tpu_custom_call.1} parent=1 // pred_check
      _
    $region47: #{tpu_custom_call.1} parent=1 // pred_check_branch
      %127 = sbr.rel (0) target = $region49
    $region48: #{tpu_custom_call.1} parent=1 // pred_region
      %128 = dma.done [#allocation6], 512
    $region49: #{tpu_custom_call.1} parent=1 // pred_fallthru
      _
    // Predicated region
    $region50: #{tpu_custom_call.1} parent=1 // pred_check
      _
    $region51: #{tpu_custom_call.1} parent=1 // pred_check_branch
      %130 = sbr.rel (0) target = $region53
    $region52: #{tpu_custom_call.1} parent=1 // pred_region
      %131 = dma.done [#allocation9], 128
    $region53: #{tpu_custom_call.1} parent=1 // pred_fallthru
      _
    // Predicated region
    $region54: #{tpu_custom_call.1} parent=1 // pred_check
      _
    $region55: #{tpu_custom_call.1} parent=1 // pred_check_branch
      %133 = sbr.rel (0) target = $region57
    $region56: #{tpu_custom_call.1} parent=1 // pred_region
      %134 = dma.done [#allocation9], 512
    $region57: #{tpu_custom_call.1} parent=1 // pred_fallthru
      _
    // Predicated region
    $region58: #{tpu_custom_call.1} parent=1 // pred_check
      _
    $region59: #{tpu_custom_call.1} parent=1 // pred_check_branch
      %136 = sbr.rel (0) target = $region61
    $region60: #{tpu_custom_call.1} parent=1 // pred_region
      %137 = dma.done [#allocation12], 512
    $region61: #{tpu_custom_call.1} parent=1 // pred_fallthru
      _
    // Predicated region
    $region62: #{tpu_custom_call.1} parent=1 // pred_check
      _
    $region63: #{tpu_custom_call.1} parent=1 // pred_check_branch
      %139 = sbr.rel (0) target = $region65
    $region64: #{tpu_custom_call.1} parent=1 // pred_region
      %140 = dma.done [#allocation12], 256
    $region65: #{tpu_custom_call.1} parent=1 // pred_fallthru
      _
    // Predicated region
    $region66: #{tpu_custom_call.1} parent=1 // pred_check
      _
    $region67: #{tpu_custom_call.1} parent=1 // pred_check_branch
      %142 = sbr.rel (0) target = $region69
    $region68: #{tpu_custom_call.1} parent=1 // pred_region
      %143 = dma.done [#allocation15], 256
    $region69: #{tpu_custom_call.1} parent=1 // pred_fallthru
      _
    %p144 = scmp.eq.s32.totalorder 0, 0
    // Predicated region
    $region70: #{tpu_custom_call.1} parent=1 // pred_check
      %p145 = pneg %p144
    $region71: #{tpu_custom_call.1} parent=1 // pred_check_branch
      %147 = sbr.rel (%p145) target = $region73
    $region72: #{tpu_custom_call.1} parent=1 // pred_region
      %v148 = vld [vmem:[#allocation13] sm:$0xff]
      %v149 = vld [vmem:[#allocation13 + $0x8] sm:$0xff]
      %vm150 = vcmask 261120
      %151 = vst.msk [vmem:[#allocation17] sm:$0xff] %vm150, %v148
      %152 = vst.msk [vmem:[#allocation17 + $0x8] sm:$0xff] %vm150, %v149
      %v153 = vld [vmem:[#allocation14] sm:$0xff]
      %v154 = vld [vmem:[#allocation14 + $0x8] sm:$0xff]
      %155 = vst.msk [vmem:[#allocation19] sm:$0xff] %vm150, %v153
      %156 = vst.msk [vmem:[#allocation19 + $0x8] sm:$0xff] %vm150, %v154
    $region73: #{tpu_custom_call.1} parent=1 // pred_fallthru
      _
    %v157 = vld [vmem:[#allocation2] sm:$0xff]
    %v158 = vld [vmem:[#allocation2 + $0x8] sm:$0xff]
    %v159 = vld [vmem:[#allocation2 + $0x10] sm:$0xff]
    %v160 = vld [vmem:[#allocation2 + $0x18] sm:$0xff]
    %v161 = vld [vmem:[#allocation2 + $0x20] sm:$0xff]
    %v162 = vld [vmem:[#allocation2 + $0x28] sm:$0xff]
    %v163 = vld [vmem:[#allocation2 + $0x30] sm:$0xff]
    %v164 = vld [vmem:[#allocation2 + $0x38] sm:$0xff]
    %v165 = vld [vmem:[#allocation8] sm:$0x1]
    %v166 = vld [vmem:[#allocation8 + $0x1] sm:$0x1]
    %v167 = vld [vmem:[#allocation8 + $0x2] sm:$0x1]
    %v168 = vld [vmem:[#allocation8 + $0x3] sm:$0x1]
    %v169 = vld [vmem:[#allocation7] sm:$0xff]
    %v170 = vld [vmem:[#allocation7 + $0x8] sm:$0xff]
    %v171 = vld [vmem:[#allocation7 + $0x10] sm:$0xff]
    %v172 = vld [vmem:[#allocation7 + $0x18] sm:$0xff]
    %v173 = vld [vmem:[#allocation17] sm:$0xff]
    %v174 = vld [vmem:[#allocation19] sm:$0xff]
    %v183 = vrot.slane %v158, 7
    %vm184 = vcmask 1041409
    %v185 = vsel %vm184, %v183, %v157
    %v186 = vrot.slane %v159, 6
    %vm187 = vcmask 1042434
    %v188 = vsel %vm187, %v186, %v185
    %v189 = vrot.slane %v160, 5
    %vm190 = vcmask 1043459
    %v191 = vsel %vm190, %v189, %v188
    %v192 = vrot.slane %v161, 4
    %vm193 = vcmask 1044484
    %v194 = vsel %vm193, %v192, %v191
    %v195 = vrot.slane %v162, 3
    %vm196 = vcmask 1045509
    %v197 = vsel %vm196, %v195, %v194
    %v198 = vrot.slane %v163, 2
    %vm199 = vcmask 1046534
    %v200 = vsel %vm199, %v198, %v197
    %v201 = vrot.slane %v164, 1
    %vm202 = vcmask 1047559
    %v203 = vsel %vm202, %v201, %v200
    %v204 = vrot.slane %v157, 1
    %v205 = vsel %vm184, %v158, %v204
    %v206 = vrot.slane %v159, 7
    %v207 = vsel %vm187, %v206, %v205
    %v208 = vrot.slane %v160, 6
    %v209 = vsel %vm190, %v208, %v207
    %v210 = vrot.slane %v161, 5
    %v211 = vsel %vm193, %v210, %v209
    %v212 = vrot.slane %v162, 4
    %v213 = vsel %vm196, %v212, %v211
    %v214 = vrot.slane %v163, 3
    %v215 = vsel %vm199, %v214, %v213
    %v216 = vrot.slane %v164, 2
    %v217 = vsel %vm202, %v216, %v215
    %v218 = vrot.slane %v157, 2
    %v219 = vrot.slane %v158, 1
    %v220 = vsel %vm184, %v219, %v218
    %v221 = vsel %vm187, %v159, %v220
    %v222 = vrot.slane %v160, 7
    %v223 = vsel %vm190, %v222, %v221
    %v224 = vrot.slane %v161, 6
    %v225 = vsel %vm193, %v224, %v223
    %v226 = vrot.slane %v162, 5
    %v227 = vsel %vm196, %v226, %v225
    %v228 = vrot.slane %v163, 4
    %v229 = vsel %vm199, %v228, %v227
    %v230 = vrot.slane %v164, 3
    %v231 = vsel %vm202, %v230, %v229
    %v232 = vrot.slane %v157, 3
    %v233 = vrot.slane %v158, 2
    %v234 = vsel %vm184, %v233, %v232
    %v235 = vrot.slane %v159, 1
    %v236 = vsel %vm187, %v235, %v234
    %v237 = vsel %vm190, %v160, %v236
    %v238 = vrot.slane %v161, 7
    %v239 = vsel %vm193, %v238, %v237
    %v240 = vrot.slane %v162, 6
    %v241 = vsel %vm196, %v240, %v239
    %v242 = vrot.slane %v163, 5
    %v243 = vsel %vm199, %v242, %v241
    %v244 = vrot.slane %v164, 4
    %v245 = vsel %vm202, %v244, %v243
    %v246 = vrot.slane %v157, 4
    %v247 = vrot.slane %v158, 3
    %v248 = vsel %vm184, %v247, %v246
    %v249 = vrot.slane %v159, 2
    %v250 = vsel %vm187, %v249, %v248
    %v251 = vrot.slane %v160, 1
    %v252 = vsel %vm190, %v251, %v250
    %v253 = vsel %vm193, %v161, %v252
    %v254 = vrot.slane %v162, 7
    %v255 = vsel %vm196, %v254, %v253
    %v256 = vrot.slane %v163, 6
    %v257 = vsel %vm199, %v256, %v255
    %v258 = vrot.slane %v164, 5
    %v259 = vsel %vm202, %v258, %v257
    %v260 = vrot.slane %v157, 5
    %v261 = vrot.slane %v158, 4
    %v262 = vsel %vm184, %v261, %v260
    %v263 = vrot.slane %v159, 3
    %v264 = vsel %vm187, %v263, %v262
    %v265 = vrot.slane %v160, 2
    %v266 = vsel %vm190, %v265, %v264
    %v267 = vrot.slane %v161, 1
    %v268 = vsel %vm193, %v267, %v266
    %v269 = vsel %vm196, %v162, %v268
    %v270 = vrot.slane %v163, 7
    %v271 = vsel %vm199, %v270, %v269
    %v272 = vrot.slane %v164, 6
    %v273 = vsel %vm202, %v272, %v271
    %v274 = vrot.slane %v157, 6
    %v275 = vrot.slane %v158, 5
    %v276 = vsel %vm184, %v275, %v274
    %v277 = vrot.slane %v159, 4
    %v278 = vsel %vm187, %v277, %v276
    %v279 = vrot.slane %v160, 3
    %v280 = vsel %vm190, %v279, %v278
    %v281 = vrot.slane %v161, 2
    %v282 = vsel %vm193, %v281, %v280
    %v283 = vrot.slane %v162, 1
    %v284 = vsel %vm196, %v283, %v282
    %v285 = vsel %vm199, %v163, %v284
    %v286 = vrot.slane %v164, 7
    %v287 = vsel %vm202, %v286, %v285
    %v288 = vrot.slane %v157, 7
    %v289 = vrot.slane %v158, 6
    %v290 = vsel %vm184, %v289, %v288
    %v291 = vrot.slane %v159, 5
    %v292 = vsel %vm187, %v291, %v290
    %v293 = vrot.slane %v160, 4
    %v294 = vsel %vm190, %v293, %v292
    %v295 = vrot.slane %v161, 3
    %v296 = vsel %vm193, %v295, %v294
    %v297 = vrot.slane %v162, 2
    %v298 = vsel %vm196, %v297, %v296
    %v299 = vrot.slane %v163, 1
    %v300 = vsel %vm199, %v299, %v298
    %v301 = vsel %vm202, %v164, %v300
    %v302 = vld [vmem:[#allocation5] sm:$0xff]
    %v303 = vld [vmem:[#allocation5 + $0x8] sm:$0xff]
    %v304 = vlaneseq
    %v305 = vshrl.u32 %v304, 7
    %v306 = vsub.s32 0, %v305
    %v307 = vrot.slane %v165, %v306
    %vm308 = vcmask 130048
    %v309 = vsel %vm308, %v203, 0
    %v311 = vsel %vm308, %v217, 0
    %v313 = vsel %vm308, %v231, 0
    %v315 = vsel %vm308, %v245, 0
    %v317 = vsel %vm308, %v259, 0
    %v319 = vsel %vm308, %v273, 0
    %v321 = vsel %vm308, %v287, 0
    %v323 = vsel %vm308, %v301, 0
    %325 = vmatprep.subr.mxu0 0.0
    %326 = vmatpush1.msra.mxu0 0.0
    %327 = vmatprep.subr.mxu0 0.0
    %328 = vmatpush1.msra.mxu0 0.0
    %329 = vmatprep.subr.mxu0 0.0
    %330 = vmatpush1.msra.mxu0 0.0
    %331 = vmatprep.subr.mxu0 0.0
    %332 = vmatpush1.msra.mxu0 0.0
    %333 = vmatprep.subr.mxu0 0.0
    %334 = vmatpush1.msra.mxu0 0.0
    %335 = vmatprep.subr.mxu0 0.0
    %336 = vmatpush1.msra.mxu0 0.0
    %337 = vmatprep.subr.mxu0 0.0
    %338 = vmatpush1.msra.mxu0 0.0
    %339 = vmatprep.subr.mxu0 0.0
    %340 = vmatpush1.msra.mxu0 0.0
    %341 = vmatprep.subr.mxu0 0.0
    %342 = vmatpush1.msra.mxu0 0.0
    %343 = vmatprep.subr.mxu0 0.0
    %344 = vmatpush1.msra.mxu0 0.0
    %345 = vmatprep.subr.mxu0 0.0
    %346 = vmatpush1.msra.mxu0 0.0
    %347 = vmatprep.subr.mxu0 0.0
    %348 = vmatpush1.msra.mxu0 0.0
    %349 = vmatprep.subr.mxu0 0.0
    %350 = vmatpush1.msra.mxu0 0.0
    %351 = vmatprep.subr.mxu0 0.0
    %352 = vmatpush1.msra.mxu0 0.0
    %353 = vmatprep.subr.mxu0 0.0
    %354 = vmatpush1.msra.mxu0 %v303
    %355 = vmatprep.subr.mxu0 0.0
    %356 = vmatpush1.msra.mxu0 %v302
    %357 = vmatprep.subr.mxu0 0.0
    %358 = vmatpush2.msra.mxu0 0.0
    %359 = vmatprep.subr.mxu0 0.0
    %360 = vmatpush2.msra.mxu0 0.0
    %361 = vmatprep.subr.mxu0 0.0
    %362 = vmatpush2.msra.mxu0 0.0
    %363 = vmatprep.subr.mxu0 0.0
    %364 = vmatpush2.msra.mxu0 0.0
    %365 = vmatprep.subr.mxu0 0.0
    %366 = vmatpush2.msra.mxu0 0.0
    %367 = vmatprep.subr.mxu0 0.0
    %368 = vmatpush2.msra.mxu0 0.0
    %369 = vmatprep.subr.mxu0 0.0
    %370 = vmatpush2.msra.mxu0 0.0
    %371 = vmatprep.subr.mxu0 0.0
    %372 = vmatpush2.msra.mxu0 0.0
    %373 = vmatprep.subr.mxu0 0.0
    %374 = vmatpush2.msra.mxu0 0.0
    %375 = vmatprep.subr.mxu0 0.0
    %376 = vmatpush2.msra.mxu0 0.0
    %377 = vmatprep.subr.mxu0 0.0
    %378 = vmatpush2.msra.mxu0 0.0
    %379 = vmatprep.subr.mxu0 0.0
    %380 = vmatpush2.msra.mxu0 0.0
    %381 = vmatprep.subr.mxu0 0.0
    %382 = vmatpush2.msra.mxu0 0.0
    %383 = vmatprep.subr.mxu0 0.0
    %384 = vmatpush2.msra.mxu0 0.0
    %385 = vmatprep.subr.mxu0 0.0
    %386 = vmatpush2.msra.mxu0 0.0
    %387 = vmatprep.subr.mxu0 0.0
    %388 = vmatpush2.msra.mxu0 0.0
    %389 = vmatprep.mubr.f32.mxu0 0.0
    %390 = vmatmul.mubr.f32.gmra.mxu0 %v309
    %v391 = vpop.f32.mrf.mxu0
    %v392 = vadd.f32 %v307, %v391
    %v393 = vpop.f32.mrf.mxu0
    %394 = vmatprep.mubr.f32.mxu0 0.0
    %395 = vmatmul.mubr.f32.gmra.mxu0 %v311
    %v396 = vpop.f32.mrf.mxu0
    %v397 = vadd.f32 %v307, %v396
    %v398 = vpop.f32.mrf.mxu0
    %399 = vmatprep.mubr.f32.mxu0 0.0
    %400 = vmatmul.mubr.f32.gmra.mxu0 %v313
    %v401 = vpop.f32.mrf.mxu0
    %v402 = vadd.f32 %v307, %v401
    %v403 = vpop.f32.mrf.mxu0
    %404 = vmatprep.mubr.f32.mxu0 0.0
    %405 = vmatmul.mubr.f32.gmra.mxu0 %v315
    %v406 = vpop.f32.mrf.mxu0
    %v407 = vadd.f32 %v307, %v406
    %v408 = vpop.f32.mrf.mxu0
    %409 = vmatprep.mubr.f32.mxu0 0.0
    %410 = vmatmul.mubr.f32.gmra.mxu0 %v317
    %v411 = vpop.f32.mrf.mxu0
    %v412 = vadd.f32 %v307, %v411
    %v413 = vpop.f32.mrf.mxu0
    %414 = vmatprep.mubr.f32.mxu0 0.0
    %415 = vmatmul.mubr.f32.gmra.mxu0 %v319
    %v416 = vpop.f32.mrf.mxu0
    %v417 = vadd.f32 %v307, %v416
    %v418 = vpop.f32.mrf.mxu0
    %419 = vmatprep.mubr.f32.mxu0 0.0
    %420 = vmatmul.mubr.f32.gmra.mxu0 %v321
    %v421 = vpop.f32.mrf.mxu0
    %v422 = vadd.f32 %v307, %v421
    %v423 = vpop.f32.mrf.mxu0
    %424 = vmatprep.mubr.f32.mxu0 0.0
    %425 = vmatmul.mubr.f32.gmra.mxu0 %v323
    %v426 = vpop.f32.mrf.mxu0
    %v427 = vadd.f32 %v307, %v426
    %v428 = vpop.f32.mrf.mxu0
    %429 = vdwg.mxu0
    %vm430 = vcmask 261120
    %v432 = vsel %vm430, %v173, 0
    %434 = vmatprep.subr.mxu0 0.0
    %435 = vmatpush1.msra.mxu0 0.0
    %436 = vmatprep.subr.mxu0 0.0
    %437 = vmatpush1.msra.mxu0 0.0
    %438 = vmatprep.subr.mxu0 0.0
    %439 = vmatpush1.msra.mxu0 0.0
    %440 = vmatprep.subr.mxu0 0.0
    %441 = vmatpush1.msra.mxu0 0.0
    %442 = vmatprep.subr.mxu0 0.0
    %443 = vmatpush1.msra.mxu0 0.0
    %444 = vmatprep.subr.mxu0 0.0
    %445 = vmatpush1.msra.mxu0 0.0
    %446 = vmatprep.subr.mxu0 0.0
    %447 = vmatpush1.msra.mxu0 0.0
    %448 = vmatprep.subr.mxu0 0.0
    %449 = vmatpush1.msra.mxu0 0.0
    %450 = vmatprep.subr.mxu0 0.0
    %451 = vmatpush1.msra.mxu0 0.0
    %452 = vmatprep.subr.mxu0 0.0
    %453 = vmatpush1.msra.mxu0 0.0
    %454 = vmatprep.subr.mxu0 0.0
    %455 = vmatpush1.msra.mxu0 0.0
    %456 = vmatprep.subr.mxu0 0.0
    %457 = vmatpush1.msra.mxu0 0.0
    %458 = vmatprep.subr.mxu0 0.0
    %459 = vmatpush1.msra.mxu0 %v172
    %460 = vmatprep.subr.mxu0 0.0
    %461 = vmatpush1.msra.mxu0 %v171
    %462 = vmatprep.subr.mxu0 0.0
    %463 = vmatpush1.msra.mxu0 %v170
    %464 = vmatprep.subr.mxu0 0.0
    %465 = vmatpush1.msra.mxu0 %v169
    %466 = vmatprep.subr.mxu0 0.0
    %467 = vmatpush2.msra.mxu0 0.0
    %468 = vmatprep.subr.mxu0 0.0
    %469 = vmatpush2.msra.mxu0 0.0
    %470 = vmatprep.subr.mxu0 0.0
    %471 = vmatpush2.msra.mxu0 0.0
    %472 = vmatprep.subr.mxu0 0.0
    %473 = vmatpush2.msra.mxu0 0.0
    %474 = vmatprep.subr.mxu0 0.0
    %475 = vmatpush2.msra.mxu0 0.0
    %476 = vmatprep.subr.mxu0 0.0
    %477 = vmatpush2.msra.mxu0 0.0
    %478 = vmatprep.subr.mxu0 0.0
    %479 = vmatpush2.msra.mxu0 0.0
    %480 = vmatprep.subr.mxu0 0.0
    %481 = vmatpush2.msra.mxu0 0.0
    %482 = vmatprep.subr.mxu0 0.0
    %483 = vmatpush2.msra.mxu0 0.0
    %484 = vmatprep.subr.mxu0 0.0
    %485 = vmatpush2.msra.mxu0 0.0
    %486 = vmatprep.subr.mxu0 0.0
    %487 = vmatpush2.msra.mxu0 0.0
    %488 = vmatprep.subr.mxu0 0.0
    %489 = vmatpush2.msra.mxu0 0.0
    %490 = vmatprep.subr.mxu0 0.0
    %491 = vmatpush2.msra.mxu0 0.0
    %492 = vmatprep.subr.mxu0 0.0
    %493 = vmatpush2.msra.mxu0 0.0
    %494 = vmatprep.subr.mxu0 0.0
    %495 = vmatpush2.msra.mxu0 0.0
    %496 = vmatprep.subr.mxu0 0.0
    %497 = vmatpush2.msra.mxu0 0.0
    %498 = vmatprep.mubr.f32.mxu0 0.0
    %499 = vmatmul.mubr.f32.gmra.mxu0 %v432
    %v500 = vpop.f32.mrf.mxu0
    %v501 = vadd.f32 0.0, %v500
    %v502 = vpop.f32.mrf.mxu0
    %503 = vdwg.mxu0
    %v504 = vadd.f32 %v392, %v501
    %v505 = vlaneseq
    %v506 = vshrl.u32 %v505, 7
    %v507 = vsub.s32 0, %v506
    %v508 = vrot.slane %v166, %v507
    %v509 = vmul.f32 %v508, %v174
    %v510 = vadd.f32 %v504, %v509
    %v511 = vmul.f32 %v510, 0.5
    %v512 = vtanh.pop %v511
    %v513 = vadd.f32 %v512, 1.0
    %v514 = vmul.f32 %v513, 0.5
    %v515 = vlaneseq
    %v516 = vshrl.u32 %v515, 7
    %v517 = vsub.s32 0, %v516
    %v518 = vrot.slane %v167, %v517
    %v519 = vmul.f32 %v518, %v174
    %521 = vrot.lane.b32.xlu0 %v519, 32
    %v522 = vpop.permute.xlu0 %521
    %v524 = vadd.f32 %v504, %v522
    %v525 = vmul.f32 %v524, 0.5
    %v526 = vtanh.pop %v525
    %v527 = vadd.f32 %v526, 1.0
    %v528 = vmul.f32 %v527, 0.5
    %v529 = vtanh.pop %v504
    %531 = vrot.lane.b32.xlu0 %v174, 32
    %v532 = vpop.permute.xlu0 %531
    %v534 = vmul.f32 %v528, %v532
    %536 = vrot.lane.b32.xlu0 %v529, 64
    %v537 = vpop.permute.xlu0 %536
    %v539 = vmul.f32 %v514, %v537
    %541 = vrot.lane.b32.xlu0 %v539, 32
    %v542 = vpop.permute.xlu0 %541
    %v544 = vadd.f32 %v534, %v542
    %v545 = vlaneseq
    %v546 = vshrl.u32 %v545, 7
    %v547 = vsub.s32 0, %v546
    %v548 = vrot.slane %v168, %v547
    %550 = vrot.lane.b32.xlu0 %v544, 96
    %v551 = vpop.permute.xlu0 %550
    %v553 = vmul.f32 %v548, %v551
    %555 = vrot.lane.b32.xlu0 %v553, 96
    %v556 = vpop.permute.xlu0 %555
    %v558 = vadd.f32 %v504, %v556
    %v559 = vmul.f32 %v558, 0.5
    %v560 = vtanh.pop %v559
    %v561 = vadd.f32 %v560, 1.0
    %v562 = vmul.f32 %v561, 0.5
    %v563 = vtanh.pop %v544
    %565 = vrot.lane.b32.xlu0 %v563, 64
    %v566 = vpop.permute.xlu0 %565
    %v568 = vmul.f32 %v562, %v566
    %570 = vrot.lane.b32.xlu0 %v568, 32
    %v571 = vpop.permute.xlu0 %570
    %v572 = vsel %vm430, %v571, 0
    %574 = vmatprep.subr.mxu0 0.0
    %575 = vmatpush1.msra.mxu0 0.0
    %576 = vmatprep.subr.mxu0 0.0
    %577 = vmatpush1.msra.mxu0 0.0
    %578 = vmatprep.subr.mxu0 0.0
    %579 = vmatpush1.msra.mxu0 0.0
    %580 = vmatprep.subr.mxu0 0.0
    %581 = vmatpush1.msra.mxu0 0.0
    %582 = vmatprep.subr.mxu0 0.0
    %583 = vmatpush1.msra.mxu0 0.0
    %584 = vmatprep.subr.mxu0 0.0
    %585 = vmatpush1.msra.mxu0 0.0
    %586 = vmatprep.subr.mxu0 0.0
    %587 = vmatpush1.msra.mxu0 0.0
    %588 = vmatprep.subr.mxu0 0.0
    %589 = vmatpush1.msra.mxu0 0.0
    %590 = vmatprep.subr.mxu0 0.0
    %591 = vmatpush1.msra.mxu0 0.0
    %592 = vmatprep.subr.mxu0 0.0
    %593 = vmatpush1.msra.mxu0 0.0
    %594 = vmatprep.subr.mxu0 0.0
    %595 = vmatpush1.msra.mxu0 0.0
    %596 = vmatprep.subr.mxu0 0.0
    %597 = vmatpush1.msra.mxu0 0.0
    %598 = vmatprep.subr.mxu0 0.0
    %599 = vmatpush1.msra.mxu0 %v172
    %600 = vmatprep.subr.mxu0 0.0
    %601 = vmatpush1.msra.mxu0 %v171
    %602 = vmatprep.subr.mxu0 0.0
    %603 = vmatpush1.msra.mxu0 %v170
    %604 = vmatprep.subr.mxu0 0.0
    %605 = vmatpush1.msra.mxu0 %v169
    %606 = vmatprep.subr.mxu0 0.0
    %607 = vmatpush2.msra.mxu0 0.0
    %608 = vmatprep.subr.mxu0 0.0
    %609 = vmatpush2.msra.mxu0 0.0
    %610 = vmatprep.subr.mxu0 0.0
    %611 = vmatpush2.msra.mxu0 0.0
    %612 = vmatprep.subr.mxu0 0.0
    %613 = vmatpush2.msra.mxu0 0.0
    %614 = vmatprep.subr.mxu0 0.0
    %615 = vmatpush2.msra.mxu0 0.0
    %616 = vmatprep.subr.mxu0 0.0
    %617 = vmatpush2.msra.mxu0 0.0
    %618 = vmatprep.subr.mxu0 0.0
    %619 = vmatpush2.msra.mxu0 0.0
    %620 = vmatprep.subr.mxu0 0.0
    %621 = vmatpush2.msra.mxu0 0.0
    %622 = vmatprep.subr.mxu0 0.0
    %623 = vmatpush2.msra.mxu0 0.0
    %624 = vmatprep.subr.mxu0 0.0
    %625 = vmatpush2.msra.mxu0 0.0
    %626 = vmatprep.subr.mxu0 0.0
    %627 = vmatpush2.msra.mxu0 0.0
    %628 = vmatprep.subr.mxu0 0.0
    %629 = vmatpush2.msra.mxu0 0.0
    %630 = vmatprep.subr.mxu0 0.0
    %631 = vmatpush2.msra.mxu0 0.0
    %632 = vmatprep.subr.mxu0 0.0
    %633 = vmatpush2.msra.mxu0 0.0
    %634 = vmatprep.subr.mxu0 0.0
    %635 = vmatpush2.msra.mxu0 0.0
    %636 = vmatprep.subr.mxu0 0.0
    %637 = vmatpush2.msra.mxu0 0.0
    %638 = vmatprep.mubr.f32.mxu0 0.0
    %639 = vmatmul.mubr.f32.gmra.mxu0 %v572
    %v640 = vpop.f32.mrf.mxu0
    %v641 = vadd.f32 0.0, %v640
    %v642 = vpop.f32.mrf.mxu0
    %643 = vdwg.mxu0
    %v644 = vadd.f32 %v397, %v641
    %v645 = vmul.f32 %v508, %v551
    %v646 = vadd.f32 %v644, %v645
    %v647 = vmul.f32 %v646, 0.5
    %v648 = vtanh.pop %v647
    %v649 = vadd.f32 %v648, 1.0
    %v650 = vmul.f32 %v649, 0.5
    %v651 = vmul.f32 %v518, %v551
    %653 = vrot.lane.b32.xlu0 %v651, 32
    %v654 = vpop.permute.xlu0 %653
    %v656 = vadd.f32 %v644, %v654
    %v657 = vmul.f32 %v656, 0.5
    %v658 = vtanh.pop %v657
    %v659 = vadd.f32 %v658, 1.0
    %v660 = vmul.f32 %v659, 0.5
    %v661 = vtanh.pop %v644
    %v662 = vmul.f32 %v660, %v544
    %664 = vrot.lane.b32.xlu0 %v661, 64
    %v665 = vpop.permute.xlu0 %664
    %v667 = vmul.f32 %v650, %v665
    %669 = vrot.lane.b32.xlu0 %v667, 32
    %v670 = vpop.permute.xlu0 %669
    %v672 = vadd.f32 %v662, %v670
    %674 = vrot.lane.b32.xlu0 %v672, 96
    %v675 = vpop.permute.xlu0 %674
    %v677 = vmul.f32 %v548, %v675
    %679 = vrot.lane.b32.xlu0 %v677, 96
    %v680 = vpop.permute.xlu0 %679
    %v682 = vadd.f32 %v644, %v680
    %v683 = vmul.f32 %v682, 0.5
    %v684 = vtanh.pop %v683
    %v685 = vadd.f32 %v684, 1.0
    %v686 = vmul.f32 %v685, 0.5
    %v687 = vtanh.pop %v672
    %689 = vrot.lane.b32.xlu0 %v687, 64
    %v690 = vpop.permute.xlu0 %689
    %v692 = vmul.f32 %v686, %v690
    %694 = vrot.lane.b32.xlu0 %v692, 32
    %v695 = vpop.permute.xlu0 %694
    %v696 = vsel %vm430, %v695, 0
    %698 = vmatprep.subr.mxu0 0.0
    %699 = vmatpush1.msra.mxu0 0.0
    %700 = vmatprep.subr.mxu0 0.0
    %701 = vmatpush1.msra.mxu0 0.0
    %702 = vmatprep.subr.mxu0 0.0
    %703 = vmatpush1.msra.mxu0 0.0
    %704 = vmatprep.subr.mxu0 0.0
    %705 = vmatpush1.msra.mxu0 0.0
    %706 = vmatprep.subr.mxu0 0.0
    %707 = vmatpush1.msra.mxu0 0.0
    %708 = vmatprep.subr.mxu0 0.0
    %709 = vmatpush1.msra.mxu0 0.0
    %710 = vmatprep.subr.mxu0 0.0
    %711 = vmatpush1.msra.mxu0 0.0
    %712 = vmatprep.subr.mxu0 0.0
    %713 = vmatpush1.msra.mxu0 0.0
    %714 = vmatprep.subr.mxu0 0.0
    %715 = vmatpush1.msra.mxu0 0.0
    %716 = vmatprep.subr.mxu0 0.0
    %717 = vmatpush1.msra.mxu0 0.0
    %718 = vmatprep.subr.mxu0 0.0
    %719 = vmatpush1.msra.mxu0 0.0
    %720 = vmatprep.subr.mxu0 0.0
    %721 = vmatpush1.msra.mxu0 0.0
    %722 = vmatprep.subr.mxu0 0.0
    %723 = vmatpush1.msra.mxu0 %v172
    %724 = vmatprep.subr.mxu0 0.0
    %725 = vmatpush1.msra.mxu0 %v171
    %726 = vmatprep.subr.mxu0 0.0
    %727 = vmatpush1.msra.mxu0 %v170
    %728 = vmatprep.subr.mxu0 0.0
    %729 = vmatpush1.msra.mxu0 %v169
    %730 = vmatprep.subr.mxu0 0.0
    %731 = vmatpush2.msra.mxu0 0.0
    %732 = vmatprep.subr.mxu0 0.0
    %733 = vmatpush2.msra.mxu0 0.0
    %734 = vmatprep.subr.mxu0 0.0
    %735 = vmatpush2.msra.mxu0 0.0
    %736 = vmatprep.subr.mxu0 0.0
    %737 = vmatpush2.msra.mxu0 0.0
    %738 = vmatprep.subr.mxu0 0.0
    %739 = vmatpush2.msra.mxu0 0.0
    %740 = vmatprep.subr.mxu0 0.0
    %741 = vmatpush2.msra.mxu0 0.0
    %742 = vmatprep.subr.mxu0 0.0
    %743 = vmatpush2.msra.mxu0 0.0
    %744 = vmatprep.subr.mxu0 0.0
    %745 = vmatpush2.msra.mxu0 0.0
    %746 = vmatprep.subr.mxu0 0.0
    %747 = vmatpush2.msra.mxu0 0.0
    %748 = vmatprep.subr.mxu0 0.0
    %749 = vmatpush2.msra.mxu0 0.0
    %750 = vmatprep.subr.mxu0 0.0
    %751 = vmatpush2.msra.mxu0 0.0
    %752 = vmatprep.subr.mxu0 0.0
    %753 = vmatpush2.msra.mxu0 0.0
    %754 = vmatprep.subr.mxu0 0.0
    %755 = vmatpush2.msra.mxu0 0.0
    %756 = vmatprep.subr.mxu0 0.0
    %757 = vmatpush2.msra.mxu0 0.0
    %758 = vmatprep.subr.mxu0 0.0
    %759 = vmatpush2.msra.mxu0 0.0
    %760 = vmatprep.subr.mxu0 0.0
    %761 = vmatpush2.msra.mxu0 0.0
    %762 = vmatprep.mubr.f32.mxu0 0.0
    %763 = vmatmul.mubr.f32.gmra.mxu0 %v696
    %v764 = vpop.f32.mrf.mxu0
    %v765 = vadd.f32 0.0, %v764
    %v766 = vpop.f32.mrf.mxu0
    %767 = vdwg.mxu0
    %v768 = vadd.f32 %v402, %v765
    %v769 = vmul.f32 %v508, %v675
    %v770 = vadd.f32 %v768, %v769
    %v771 = vmul.f32 %v770, 0.5
    %v772 = vtanh.pop %v771
    %v773 = vadd.f32 %v772, 1.0
    %v774 = vmul.f32 %v773, 0.5
    %v775 = vmul.f32 %v518, %v675
    %777 = vrot.lane.b32.xlu0 %v775, 32
    %v778 = vpop.permute.xlu0 %777
    %v780 = vadd.f32 %v768, %v778
    %v781 = vmul.f32 %v780, 0.5
    %v782 = vtanh.pop %v781
    %v783 = vadd.f32 %v782, 1.0
    %v784 = vmul.f32 %v783, 0.5
    %v785 = vtanh.pop %v768
    %v786 = vmul.f32 %v784, %v672
    %788 = vrot.lane.b32.xlu0 %v785, 64
    %v789 = vpop.permute.xlu0 %788
    %v791 = vmul.f32 %v774, %v789
    %793 = vrot.lane.b32.xlu0 %v791, 32
    %v794 = vpop.permute.xlu0 %793
    %v796 = vadd.f32 %v786, %v794
    %798 = vrot.lane.b32.xlu0 %v796, 96
    %v799 = vpop.permute.xlu0 %798
    %v801 = vmul.f32 %v548, %v799
    %803 = vrot.lane.b32.xlu0 %v801, 96
    %v804 = vpop.permute.xlu0 %803
    %v806 = vadd.f32 %v768, %v804
    %v807 = vmul.f32 %v806, 0.5
    %v808 = vtanh.pop %v807
    %v809 = vadd.f32 %v808, 1.0
    %v810 = vmul.f32 %v809, 0.5
    %v811 = vtanh.pop %v796
    %813 = vrot.lane.b32.xlu0 %v811, 64
    %v814 = vpop.permute.xlu0 %813
    %v816 = vmul.f32 %v810, %v814
    %818 = vrot.lane.b32.xlu0 %v816, 32
    %v819 = vpop.permute.xlu0 %818
    %v820 = vsel %vm430, %v819, 0
    %822 = vmatprep.subr.mxu0 0.0
    %823 = vmatpush1.msra.mxu0 0.0
    %824 = vmatprep.subr.mxu0 0.0
    %825 = vmatpush1.msra.mxu0 0.0
    %826 = vmatprep.subr.mxu0 0.0
    %827 = vmatpush1.msra.mxu0 0.0
    %828 = vmatprep.subr.mxu0 0.0
    %829 = vmatpush1.msra.mxu0 0.0
    %830 = vmatprep.subr.mxu0 0.0
    %831 = vmatpush1.msra.mxu0 0.0
    %832 = vmatprep.subr.mxu0 0.0
    %833 = vmatpush1.msra.mxu0 0.0
    %834 = vmatprep.subr.mxu0 0.0
    %835 = vmatpush1.msra.mxu0 0.0
    %836 = vmatprep.subr.mxu0 0.0
    %837 = vmatpush1.msra.mxu0 0.0
    %838 = vmatprep.subr.mxu0 0.0
    %839 = vmatpush1.msra.mxu0 0.0
    %840 = vmatprep.subr.mxu0 0.0
    %841 = vmatpush1.msra.mxu0 0.0
    %842 = vmatprep.subr.mxu0 0.0
    %843 = vmatpush1.msra.mxu0 0.0
    %844 = vmatprep.subr.mxu0 0.0
    %845 = vmatpush1.msra.mxu0 0.0
    %846 = vmatprep.subr.mxu0 0.0
    %847 = vmatpush1.msra.mxu0 %v172
    %848 = vmatprep.subr.mxu0 0.0
    %849 = vmatpush1.msra.mxu0 %v171
    %850 = vmatprep.subr.mxu0 0.0
    %851 = vmatpush1.msra.mxu0 %v170
    %852 = vmatprep.subr.mxu0 0.0
    %853 = vmatpush1.msra.mxu0 %v169
    %854 = vmatprep.subr.mxu0 0.0
    %855 = vmatpush2.msra.mxu0 0.0
    %856 = vmatprep.subr.mxu0 0.0
    %857 = vmatpush2.msra.mxu0 0.0
    %858 = vmatprep.subr.mxu0 0.0
    %859 = vmatpush2.msra.mxu0 0.0
    %860 = vmatprep.subr.mxu0 0.0
    %861 = vmatpush2.msra.mxu0 0.0
    %862 = vmatprep.subr.mxu0 0.0
    %863 = vmatpush2.msra.mxu0 0.0
    %864 = vmatprep.subr.mxu0 0.0
    %865 = vmatpush2.msra.mxu0 0.0
    %866 = vmatprep.subr.mxu0 0.0
    %867 = vmatpush2.msra.mxu0 0.0
    %868 = vmatprep.subr.mxu0 0.0
    %869 = vmatpush2.msra.mxu0 0.0
    %870 = vmatprep.subr.mxu0 0.0
    %871 = vmatpush2.msra.mxu0 0.0
    %872 = vmatprep.subr.mxu0 0.0
    %873 = vmatpush2.msra.mxu0 0.0
    %874 = vmatprep.subr.mxu0 0.0
    %875 = vmatpush2.msra.mxu0 0.0
    %876 = vmatprep.subr.mxu0 0.0
    %877 = vmatpush2.msra.mxu0 0.0
    %878 = vmatprep.subr.mxu0 0.0
    %879 = vmatpush2.msra.mxu0 0.0
    %880 = vmatprep.subr.mxu0 0.0
    %881 = vmatpush2.msra.mxu0 0.0
    %882 = vmatprep.subr.mxu0 0.0
    %883 = vmatpush2.msra.mxu0 0.0
    %884 = vmatprep.subr.mxu0 0.0
    %885 = vmatpush2.msra.mxu0 0.0
    %886 = vmatprep.mubr.f32.mxu0 0.0
    %887 = vmatmul.mubr.f32.gmra.mxu0 %v820
    %v888 = vpop.f32.mrf.mxu0
    %v889 = vadd.f32 0.0, %v888
    %v890 = vpop.f32.mrf.mxu0
    %891 = vdwg.mxu0
    %v892 = vadd.f32 %v407, %v889
    %v893 = vmul.f32 %v508, %v799
    %v894 = vadd.f32 %v892, %v893
    %v895 = vmul.f32 %v894, 0.5
    %v896 = vtanh.pop %v895
    %v897 = vadd.f32 %v896, 1.0
    %v898 = vmul.f32 %v897, 0.5
    %v899 = vmul.f32 %v518, %v799
    %901 = vrot.lane.b32.xlu0 %v899, 32
    %v902 = vpop.permute.xlu0 %901
    %v904 = vadd.f32 %v892, %v902
    %v905 = vmul.f32 %v904, 0.5
    %v906 = vtanh.pop %v905
    %v907 = vadd.f32 %v906, 1.0
    %v908 = vmul.f32 %v907, 0.5
    %v909 = vtanh.pop %v892
    %v910 = vmul.f32 %v908, %v796
    %912 = vrot.lane.b32.xlu0 %v909, 64
    %v913 = vpop.permute.xlu0 %912
    %v915 = vmul.f32 %v898, %v913
    %917 = vrot.lane.b32.xlu0 %v915, 32
    %v918 = vpop.permute.xlu0 %917
    %v920 = vadd.f32 %v910, %v918
    %922 = vrot.lane.b32.xlu0 %v920, 96
    %v923 = vpop.permute.xlu0 %922
    %v925 = vmul.f32 %v548, %v923
    %927 = vrot.lane.b32.xlu0 %v925, 96
    %v928 = vpop.permute.xlu0 %927
    %v930 = vadd.f32 %v892, %v928
    %v931 = vmul.f32 %v930, 0.5
    %v932 = vtanh.pop %v931
    %v933 = vadd.f32 %v932, 1.0
    %v934 = vmul.f32 %v933, 0.5
    %v935 = vtanh.pop %v920
    %937 = vrot.lane.b32.xlu0 %v935, 64
    %v938 = vpop.permute.xlu0 %937
    %v940 = vmul.f32 %v934, %v938
    %942 = vrot.lane.b32.xlu0 %v940, 32
    %v943 = vpop.permute.xlu0 %942
    %v944 = vsel %vm430, %v943, 0
    %946 = vmatprep.subr.mxu0 0.0
    %947 = vmatpush1.msra.mxu0 0.0
    %948 = vmatprep.subr.mxu0 0.0
    %949 = vmatpush1.msra.mxu0 0.0
    %950 = vmatprep.subr.mxu0 0.0
    %951 = vmatpush1.msra.mxu0 0.0
    %952 = vmatprep.subr.mxu0 0.0
    %953 = vmatpush1.msra.mxu0 0.0
    %954 = vmatprep.subr.mxu0 0.0
    %955 = vmatpush1.msra.mxu0 0.0
    %956 = vmatprep.subr.mxu0 0.0
    %957 = vmatpush1.msra.mxu0 0.0
    %958 = vmatprep.subr.mxu0 0.0
    %959 = vmatpush1.msra.mxu0 0.0
    %960 = vmatprep.subr.mxu0 0.0
    %961 = vmatpush1.msra.mxu0 0.0
    %962 = vmatprep.subr.mxu0 0.0
    %963 = vmatpush1.msra.mxu0 0.0
    %964 = vmatprep.subr.mxu0 0.0
    %965 = vmatpush1.msra.mxu0 0.0
    %966 = vmatprep.subr.mxu0 0.0
    %967 = vmatpush1.msra.mxu0 0.0
    %968 = vmatprep.subr.mxu0 0.0
    %969 = vmatpush1.msra.mxu0 0.0
    %970 = vmatprep.subr.mxu0 0.0
    %971 = vmatpush1.msra.mxu0 %v172
    %972 = vmatprep.subr.mxu0 0.0
    %973 = vmatpush1.msra.mxu0 %v171
    %974 = vmatprep.subr.mxu0 0.0
    %975 = vmatpush1.msra.mxu0 %v170
    %976 = vmatprep.subr.mxu0 0.0
    %977 = vmatpush1.msra.mxu0 %v169
    %978 = vmatprep.subr.mxu0 0.0
    %979 = vmatpush2.msra.mxu0 0.0
    %980 = vmatprep.subr.mxu0 0.0
    %981 = vmatpush2.msra.mxu0 0.0
    %982 = vmatprep.subr.mxu0 0.0
    %983 = vmatpush2.msra.mxu0 0.0
    %984 = vmatprep.subr.mxu0 0.0
    %985 = vmatpush2.msra.mxu0 0.0
    %986 = vmatprep.subr.mxu0 0.0
    %987 = vmatpush2.msra.mxu0 0.0
    %988 = vmatprep.subr.mxu0 0.0
    %989 = vmatpush2.msra.mxu0 0.0
    %990 = vmatprep.subr.mxu0 0.0
    %991 = vmatpush2.msra.mxu0 0.0
    %992 = vmatprep.subr.mxu0 0.0
    %993 = vmatpush2.msra.mxu0 0.0
    %994 = vmatprep.subr.mxu0 0.0
    %995 = vmatpush2.msra.mxu0 0.0
    %996 = vmatprep.subr.mxu0 0.0
    %997 = vmatpush2.msra.mxu0 0.0
    %998 = vmatprep.subr.mxu0 0.0
    %999 = vmatpush2.msra.mxu0 0.0
    %1000 = vmatprep.subr.mxu0 0.0
    %1001 = vmatpush2.msra.mxu0 0.0
    %1002 = vmatprep.subr.mxu0 0.0
    %1003 = vmatpush2.msra.mxu0 0.0
    %1004 = vmatprep.subr.mxu0 0.0
    %1005 = vmatpush2.msra.mxu0 0.0
    %1006 = vmatprep.subr.mxu0 0.0
    %1007 = vmatpush2.msra.mxu0 0.0
    %1008 = vmatprep.subr.mxu0 0.0
    %1009 = vmatpush2.msra.mxu0 0.0
    %1010 = vmatprep.mubr.f32.mxu0 0.0
    %1011 = vmatmul.mubr.f32.gmra.mxu0 %v944
    %v1012 = vpop.f32.mrf.mxu0
    %v1013 = vadd.f32 0.0, %v1012
    %v1014 = vpop.f32.mrf.mxu0
    %1015 = vdwg.mxu0
    %v1016 = vadd.f32 %v412, %v1013
    %v1017 = vmul.f32 %v508, %v923
    %v1018 = vadd.f32 %v1016, %v1017
    %v1019 = vmul.f32 %v1018, 0.5
    %v1020 = vtanh.pop %v1019
    %v1021 = vadd.f32 %v1020, 1.0
    %v1022 = vmul.f32 %v1021, 0.5
    %v1023 = vmul.f32 %v518, %v923
    %1025 = vrot.lane.b32.xlu0 %v1023, 32
    %v1026 = vpop.permute.xlu0 %1025
    %v1028 = vadd.f32 %v1016, %v1026
    %v1029 = vmul.f32 %v1028, 0.5
    %v1030 = vtanh.pop %v1029
    %v1031 = vadd.f32 %v1030, 1.0
    %v1032 = vmul.f32 %v1031, 0.5
    %v1033 = vtanh.pop %v1016
    %v1034 = vmul.f32 %v1032, %v920
    %1036 = vrot.lane.b32.xlu0 %v1033, 64
    %v1037 = vpop.permute.xlu0 %1036
    %v1039 = vmul.f32 %v1022, %v1037
    %1041 = vrot.lane.b32.xlu0 %v1039, 32
    %v1042 = vpop.permute.xlu0 %1041
    %v1044 = vadd.f32 %v1034, %v1042
    %1046 = vrot.lane.b32.xlu0 %v1044, 96
    %v1047 = vpop.permute.xlu0 %1046
    %v1049 = vmul.f32 %v548, %v1047
    %1051 = vrot.lane.b32.xlu0 %v1049, 96
    %v1052 = vpop.permute.xlu0 %1051
    %v1054 = vadd.f32 %v1016, %v1052
    %v1055 = vmul.f32 %v1054, 0.5
    %v1056 = vtanh.pop %v1055
    %v1057 = vadd.f32 %v1056, 1.0
    %v1058 = vmul.f32 %v1057, 0.5
    %v1059 = vtanh.pop %v1044
    %1061 = vrot.lane.b32.xlu0 %v1059, 64
    %v1062 = vpop.permute.xlu0 %1061
    %v1064 = vmul.f32 %v1058, %v1062
    %1066 = vrot.lane.b32.xlu0 %v1064, 32
    %v1067 = vpop.permute.xlu0 %1066
    %v1068 = vsel %vm430, %v1067, 0
    %1070 = vmatprep.subr.mxu0 0.0
    %1071 = vmatpush1.msra.mxu0 0.0
    %1072 = vmatprep.subr.mxu0 0.0
    %1073 = vmatpush1.msra.mxu0 0.0
    %1074 = vmatprep.subr.mxu0 0.0
    %1075 = vmatpush1.msra.mxu0 0.0
    %1076 = vmatprep.subr.mxu0 0.0
    %1077 = vmatpush1.msra.mxu0 0.0
    %1078 = vmatprep.subr.mxu0 0.0
    %1079 = vmatpush1.msra.mxu0 0.0
    %1080 = vmatprep.subr.mxu0 0.0
    %1081 = vmatpush1.msra.mxu0 0.0
    %1082 = vmatprep.subr.mxu0 0.0
    %1083 = vmatpush1.msra.mxu0 0.0
    %1084 = vmatprep.subr.mxu0 0.0
    %1085 = vmatpush1.msra.mxu0 0.0
    %1086 = vmatprep.subr.mxu0 0.0
    %1087 = vmatpush1.msra.mxu0 0.0
    %1088 = vmatprep.subr.mxu0 0.0
    %1089 = vmatpush1.msra.mxu0 0.0
    %1090 = vmatprep.subr.mxu0 0.0
    %1091 = vmatpush1.msra.mxu0 0.0
    %1092 = vmatprep.subr.mxu0 0.0
    %1093 = vmatpush1.msra.mxu0 0.0
    %1094 = vmatprep.subr.mxu0 0.0
    %1095 = vmatpush1.msra.mxu0 %v172
    %1096 = vmatprep.subr.mxu0 0.0
    %1097 = vmatpush1.msra.mxu0 %v171
    %1098 = vmatprep.subr.mxu0 0.0
    %1099 = vmatpush1.msra.mxu0 %v170
    %1100 = vmatprep.subr.mxu0 0.0
    %1101 = vmatpush1.msra.mxu0 %v169
    %1102 = vmatprep.subr.mxu0 0.0
    %1103 = vmatpush2.msra.mxu0 0.0
    %1104 = vmatprep.subr.mxu0 0.0
    %1105 = vmatpush2.msra.mxu0 0.0
    %1106 = vmatprep.subr.mxu0 0.0
    %1107 = vmatpush2.msra.mxu0 0.0
    %1108 = vmatprep.subr.mxu0 0.0
    %1109 = vmatpush2.msra.mxu0 0.0
    %1110 = vmatprep.subr.mxu0 0.0
    %1111 = vmatpush2.msra.mxu0 0.0
    %1112 = vmatprep.subr.mxu0 0.0
    %1113 = vmatpush2.msra.mxu0 0.0
    %1114 = vmatprep.subr.mxu0 0.0
    %1115 = vmatpush2.msra.mxu0 0.0
    %1116 = vmatprep.subr.mxu0 0.0
    %1117 = vmatpush2.msra.mxu0 0.0
    %1118 = vmatprep.subr.mxu0 0.0
    %1119 = vmatpush2.msra.mxu0 0.0
    %1120 = vmatprep.subr.mxu0 0.0
    %1121 = vmatpush2.msra.mxu0 0.0
    %1122 = vmatprep.subr.mxu0 0.0
    %1123 = vmatpush2.msra.mxu0 0.0
    %1124 = vmatprep.subr.mxu0 0.0
    %1125 = vmatpush2.msra.mxu0 0.0
    %1126 = vmatprep.subr.mxu0 0.0
    %1127 = vmatpush2.msra.mxu0 0.0
    %1128 = vmatprep.subr.mxu0 0.0
    %1129 = vmatpush2.msra.mxu0 0.0
    %1130 = vmatprep.subr.mxu0 0.0
    %1131 = vmatpush2.msra.mxu0 0.0
    %1132 = vmatprep.subr.mxu0 0.0
    %1133 = vmatpush2.msra.mxu0 0.0
    %1134 = vmatprep.mubr.f32.mxu0 0.0
    %1135 = vmatmul.mubr.f32.gmra.mxu0 %v1068
    %v1136 = vpop.f32.mrf.mxu0
    %v1137 = vadd.f32 0.0, %v1136
    %v1138 = vpop.f32.mrf.mxu0
    %1139 = vdwg.mxu0
    %v1140 = vadd.f32 %v417, %v1137
    %v1141 = vmul.f32 %v508, %v1047
    %v1142 = vadd.f32 %v1140, %v1141
    %v1143 = vmul.f32 %v1142, 0.5
    %v1144 = vtanh.pop %v1143
    %v1145 = vadd.f32 %v1144, 1.0
    %v1146 = vmul.f32 %v1145, 0.5
    %v1147 = vmul.f32 %v518, %v1047
    %1149 = vrot.lane.b32.xlu0 %v1147, 32
    %v1150 = vpop.permute.xlu0 %1149
    %v1152 = vadd.f32 %v1140, %v1150
    %v1153 = vmul.f32 %v1152, 0.5
    %v1154 = vtanh.pop %v1153
    %v1155 = vadd.f32 %v1154, 1.0
    %v1156 = vmul.f32 %v1155, 0.5
    %v1157 = vtanh.pop %v1140
    %v1158 = vmul.f32 %v1156, %v1044
    %1160 = vrot.lane.b32.xlu0 %v1157, 64
    %v1161 = vpop.permute.xlu0 %1160
    %v1163 = vmul.f32 %v1146, %v1161
    %1165 = vrot.lane.b32.xlu0 %v1163, 32
    %v1166 = vpop.permute.xlu0 %1165
    %v1168 = vadd.f32 %v1158, %v1166
    %1170 = vrot.lane.b32.xlu0 %v1168, 96
    %v1171 = vpop.permute.xlu0 %1170
    %v1173 = vmul.f32 %v548, %v1171
    %1175 = vrot.lane.b32.xlu0 %v1173, 96
    %v1176 = vpop.permute.xlu0 %1175
    %v1178 = vadd.f32 %v1140, %v1176
    %v1179 = vmul.f32 %v1178, 0.5
    %v1180 = vtanh.pop %v1179
    %v1181 = vadd.f32 %v1180, 1.0
    %v1182 = vmul.f32 %v1181, 0.5
    %v1183 = vtanh.pop %v1168
    %1185 = vrot.lane.b32.xlu0 %v1183, 64
    %v1186 = vpop.permute.xlu0 %1185
    %v1188 = vmul.f32 %v1182, %v1186
    %1190 = vrot.lane.b32.xlu0 %v1188, 32
    %v1191 = vpop.permute.xlu0 %1190
    %v1192 = vsel %vm430, %v1191, 0
    %1194 = vmatprep.subr.mxu0 0.0
    %1195 = vmatpush1.msra.mxu0 0.0
    %1196 = vmatprep.subr.mxu0 0.0
    %1197 = vmatpush1.msra.mxu0 0.0
    %1198 = vmatprep.subr.mxu0 0.0
    %1199 = vmatpush1.msra.mxu0 0.0
    %1200 = vmatprep.subr.mxu0 0.0
    %1201 = vmatpush1.msra.mxu0 0.0
    %1202 = vmatprep.subr.mxu0 0.0
    %1203 = vmatpush1.msra.mxu0 0.0
    %1204 = vmatprep.subr.mxu0 0.0
    %1205 = vmatpush1.msra.mxu0 0.0
    %1206 = vmatprep.subr.mxu0 0.0
    %1207 = vmatpush1.msra.mxu0 0.0
    %1208 = vmatprep.subr.mxu0 0.0
    %1209 = vmatpush1.msra.mxu0 0.0
    %1210 = vmatprep.subr.mxu0 0.0
    %1211 = vmatpush1.msra.mxu0 0.0
    %1212 = vmatprep.subr.mxu0 0.0
    %1213 = vmatpush1.msra.mxu0 0.0
    %1214 = vmatprep.subr.mxu0 0.0
    %1215 = vmatpush1.msra.mxu0 0.0
    %1216 = vmatprep.subr.mxu0 0.0
    %1217 = vmatpush1.msra.mxu0 0.0
    %1218 = vmatprep.subr.mxu0 0.0
    %1219 = vmatpush1.msra.mxu0 %v172
    %1220 = vmatprep.subr.mxu0 0.0
    %1221 = vmatpush1.msra.mxu0 %v171
    %1222 = vmatprep.subr.mxu0 0.0
    %1223 = vmatpush1.msra.mxu0 %v170
    %1224 = vmatprep.subr.mxu0 0.0
    %1225 = vmatpush1.msra.mxu0 %v169
    %1226 = vmatprep.subr.mxu0 0.0
    %1227 = vmatpush2.msra.mxu0 0.0
    %1228 = vmatprep.subr.mxu0 0.0
    %1229 = vmatpush2.msra.mxu0 0.0
    %1230 = vmatprep.subr.mxu0 0.0
    %1231 = vmatpush2.msra.mxu0 0.0
    %1232 = vmatprep.subr.mxu0 0.0
    %1233 = vmatpush2.msra.mxu0 0.0
    %1234 = vmatprep.subr.mxu0 0.0
    %1235 = vmatpush2.msra.mxu0 0.0
    %1236 = vmatprep.subr.mxu0 0.0
    %1237 = vmatpush2.msra.mxu0 0.0
    %1238 = vmatprep.subr.mxu0 0.0
    %1239 = vmatpush2.msra.mxu0 0.0
    %1240 = vmatprep.subr.mxu0 0.0
    %1241 = vmatpush2.msra.mxu0 0.0
    %1242 = vmatprep.subr.mxu0 0.0
    %1243 = vmatpush2.msra.mxu0 0.0
    %1244 = vmatprep.subr.mxu0 0.0
    %1245 = vmatpush2.msra.mxu0 0.0
    %1246 = vmatprep.subr.mxu0 0.0
    %1247 = vmatpush2.msra.mxu0 0.0
    %1248 = vmatprep.subr.mxu0 0.0
    %1249 = vmatpush2.msra.mxu0 0.0
    %1250 = vmatprep.subr.mxu0 0.0
    %1251 = vmatpush2.msra.mxu0 0.0
    %1252 = vmatprep.subr.mxu0 0.0
    %1253 = vmatpush2.msra.mxu0 0.0
    %1254 = vmatprep.subr.mxu0 0.0
    %1255 = vmatpush2.msra.mxu0 0.0
    %1256 = vmatprep.subr.mxu0 0.0
    %1257 = vmatpush2.msra.mxu0 0.0
    %1258 = vmatprep.mubr.f32.mxu0 0.0
    %1259 = vmatmul.mubr.f32.gmra.mxu0 %v1192
    %v1260 = vpop.f32.mrf.mxu0
    %v1261 = vadd.f32 0.0, %v1260
    %v1262 = vpop.f32.mrf.mxu0
    %1263 = vdwg.mxu0
    %v1264 = vadd.f32 %v422, %v1261
    %v1265 = vmul.f32 %v508, %v1171
    %v1266 = vadd.f32 %v1264, %v1265
    %v1267 = vmul.f32 %v1266, 0.5
    %v1268 = vtanh.pop %v1267
    %v1269 = vadd.f32 %v1268, 1.0
    %v1270 = vmul.f32 %v1269, 0.5
    %v1271 = vmul.f32 %v518, %v1171
    %1273 = vrot.lane.b32.xlu0 %v1271, 32
    %v1274 = vpop.permute.xlu0 %1273
    %v1276 = vadd.f32 %v1264, %v1274
    %v1277 = vmul.f32 %v1276, 0.5
    %v1278 = vtanh.pop %v1277
    %v1279 = vadd.f32 %v1278, 1.0
    %v1280 = vmul.f32 %v1279, 0.5
    %v1281 = vtanh.pop %v1264
    %v1282 = vmul.f32 %v1280, %v1168
    %1284 = vrot.lane.b32.xlu0 %v1281, 64
    %v1285 = vpop.permute.xlu0 %1284
    %v1287 = vmul.f32 %v1270, %v1285
    %1289 = vrot.lane.b32.xlu0 %v1287, 32
    %v1290 = vpop.permute.xlu0 %1289
    %v1292 = vadd.f32 %v1282, %v1290
    %1294 = vrot.lane.b32.xlu0 %v1292, 96
    %v1295 = vpop.permute.xlu0 %1294
    %v1297 = vmul.f32 %v548, %v1295
    %1299 = vrot.lane.b32.xlu0 %v1297, 96
    %v1300 = vpop.permute.xlu0 %1299
    %v1302 = vadd.f32 %v1264, %v1300
    %v1303 = vmul.f32 %v1302, 0.5
    %v1304 = vtanh.pop %v1303
    %v1305 = vadd.f32 %v1304, 1.0
    %v1306 = vmul.f32 %v1305, 0.5
    %v1307 = vtanh.pop %v1292
    %1309 = vrot.lane.b32.xlu0 %v1307, 64
    %v1310 = vpop.permute.xlu0 %1309
    %v1312 = vmul.f32 %v1306, %v1310
    %1314 = vrot.lane.b32.xlu0 %v1312, 32
    %v1315 = vpop.permute.xlu0 %1314
    %v1316 = vsel %vm430, %v1315, 0
    %1318 = vmatprep.subr.mxu0 0.0
    %1319 = vmatpush1.msra.mxu0 0.0
    %1320 = vmatprep.subr.mxu0 0.0
    %1321 = vmatpush1.msra.mxu0 0.0
    %1322 = vmatprep.subr.mxu0 0.0
    %1323 = vmatpush1.msra.mxu0 0.0
    %1324 = vmatprep.subr.mxu0 0.0
    %1325 = vmatpush1.msra.mxu0 0.0
    %1326 = vmatprep.subr.mxu0 0.0
    %1327 = vmatpush1.msra.mxu0 0.0
    %1328 = vmatprep.subr.mxu0 0.0
    %1329 = vmatpush1.msra.mxu0 0.0
    %1330 = vmatprep.subr.mxu0 0.0
    %1331 = vmatpush1.msra.mxu0 0.0
    %1332 = vmatprep.subr.mxu0 0.0
    %1333 = vmatpush1.msra.mxu0 0.0
    %1334 = vmatprep.subr.mxu0 0.0
    %1335 = vmatpush1.msra.mxu0 0.0
    %1336 = vmatprep.subr.mxu0 0.0
    %1337 = vmatpush1.msra.mxu0 0.0
    %1338 = vmatprep.subr.mxu0 0.0
    %1339 = vmatpush1.msra.mxu0 0.0
    %1340 = vmatprep.subr.mxu0 0.0
    %1341 = vmatpush1.msra.mxu0 0.0
    %1342 = vmatprep.subr.mxu0 0.0
    %1343 = vmatpush1.msra.mxu0 %v172
    %1344 = vmatprep.subr.mxu0 0.0
    %1345 = vmatpush1.msra.mxu0 %v171
    %1346 = vmatprep.subr.mxu0 0.0
    %1347 = vmatpush1.msra.mxu0 %v170
    %1348 = vmatprep.subr.mxu0 0.0
    %1349 = vmatpush1.msra.mxu0 %v169
    %1350 = vmatprep.subr.mxu0 0.0
    %1351 = vmatpush2.msra.mxu0 0.0
    %1352 = vmatprep.subr.mxu0 0.0
    %1353 = vmatpush2.msra.mxu0 0.0
    %1354 = vmatprep.subr.mxu0 0.0
    %1355 = vmatpush2.msra.mxu0 0.0
    %1356 = vmatprep.subr.mxu0 0.0
    %1357 = vmatpush2.msra.mxu0 0.0
    %1358 = vmatprep.subr.mxu0 0.0
    %1359 = vmatpush2.msra.mxu0 0.0
    %1360 = vmatprep.subr.mxu0 0.0
    %1361 = vmatpush2.msra.mxu0 0.0
    %1362 = vmatprep.subr.mxu0 0.0
    %1363 = vmatpush2.msra.mxu0 0.0
    %1364 = vmatprep.subr.mxu0 0.0
    %1365 = vmatpush2.msra.mxu0 0.0
    %1366 = vmatprep.subr.mxu0 0.0
    %1367 = vmatpush2.msra.mxu0 0.0
    %1368 = vmatprep.subr.mxu0 0.0
    %1369 = vmatpush2.msra.mxu0 0.0
    %1370 = vmatprep.subr.mxu0 0.0
    %1371 = vmatpush2.msra.mxu0 0.0
    %1372 = vmatprep.subr.mxu0 0.0
    %1373 = vmatpush2.msra.mxu0 0.0
    %1374 = vmatprep.subr.mxu0 0.0
    %1375 = vmatpush2.msra.mxu0 0.0
    %1376 = vmatprep.subr.mxu0 0.0
    %1377 = vmatpush2.msra.mxu0 0.0
    %1378 = vmatprep.subr.mxu0 0.0
    %1379 = vmatpush2.msra.mxu0 0.0
    %1380 = vmatprep.subr.mxu0 0.0
    %1381 = vmatpush2.msra.mxu0 0.0
    %1382 = vmatprep.mubr.f32.mxu0 0.0
    %1383 = vmatmul.mubr.f32.gmra.mxu0 %v1316
    %v1384 = vpop.f32.mrf.mxu0
    %v1385 = vadd.f32 0.0, %v1384
    %v1386 = vpop.f32.mrf.mxu0
    %1387 = vdwg.mxu0
    %v1388 = vadd.f32 %v427, %v1385
    %v1389 = vmul.f32 %v508, %v1295
    %v1390 = vadd.f32 %v1388, %v1389
    %v1391 = vmul.f32 %v1390, 0.5
    %v1392 = vtanh.pop %v1391
    %v1393 = vadd.f32 %v1392, 1.0
    %v1394 = vmul.f32 %v1393, 0.5
    %v1395 = vmul.f32 %v518, %v1295
    %1397 = vrot.lane.b32.xlu0 %v1395, 32
    %v1398 = vpop.permute.xlu0 %1397
    %v1400 = vadd.f32 %v1388, %v1398
    %v1401 = vmul.f32 %v1400, 0.5
    %v1402 = vtanh.pop %v1401
    %v1403 = vadd.f32 %v1402, 1.0
    %v1404 = vmul.f32 %v1403, 0.5
    %v1405 = vtanh.pop %v1388
    %v1406 = vmul.f32 %v1404, %v1292
    %1408 = vrot.lane.b32.xlu0 %v1405, 64
    %v1409 = vpop.permute.xlu0 %1408
    %v1411 = vmul.f32 %v1394, %v1409
    %1413 = vrot.lane.b32.xlu0 %v1411, 32
    %v1414 = vpop.permute.xlu0 %1413
    %v1416 = vadd.f32 %v1406, %v1414
    %1418 = vrot.lane.b32.xlu0 %v1416, 96
    %v1419 = vpop.permute.xlu0 %1418
    %v1421 = vmul.f32 %v548, %v1419
    %1423 = vrot.lane.b32.xlu0 %v1421, 96
    %v1424 = vpop.permute.xlu0 %1423
    %v1426 = vadd.f32 %v1388, %v1424
    %v1427 = vmul.f32 %v1426, 0.5
    %v1428 = vtanh.pop %v1427
    %v1429 = vadd.f32 %v1428, 1.0
    %v1430 = vmul.f32 %v1429, 0.5
    %v1431 = vtanh.pop %v1416
    %1433 = vrot.lane.b32.xlu0 %v1431, 64
    %v1434 = vpop.permute.xlu0 %1433
    %v1436 = vmul.f32 %v1430, %v1434
    %1438 = vrot.lane.b32.xlu0 %v1436, 32
    %v1439 = vpop.permute.xlu0 %1438
    %1441 = vst.msk [vmem:[#allocation17] sm:$0xff] %vm430, %v1439
    %1442 = vst.msk [vmem:[#allocation19] sm:$0xff] %vm430, %v1419
    %v1443 = vld [vmem:[%s6] sm:$0x1]
    %v1444 = vld [vmem:[%s6 + $0x1] sm:$0x1]
    %v1445 = vld [vmem:[%s6 + $0x2] sm:$0x1]
    %v1446 = vld [vmem:[%s6 + $0x3] sm:$0x1]
    %v1447 = vld [vmem:[#allocation11] sm:$0xff]
    %v1448 = vld [vmem:[#allocation11 + $0x8] sm:$0xff]
    %v1449 = vld [vmem:[#allocation11 + $0x10] sm:$0xff]
    %v1450 = vld [vmem:[#allocation11 + $0x18] sm:$0xff]
    %s1451 = scalar_lea.vmem [#allocation17], 8
    %v1452 = vld [vmem:[%s1451] sm:$0xff]
    %s1453 = scalar_lea.vmem [#allocation19], 8
    %v1454 = vld [vmem:[%s1453] sm:$0xff]
    %v1455 = vld [vmem:[#allocation10] sm:$0xff]
    %v1456 = vld [vmem:[#allocation10 + $0x8] sm:$0xff]
    %v1457 = vld [vmem:[#allocation10 + $0x10] sm:$0xff]
    %v1458 = vld [vmem:[#allocation10 + $0x18] sm:$0xff]
    %v1459 = vlaneseq
    %v1460 = vshrl.u32 %v1459, 7
    %v1461 = vsub.s32 0, %v1460
    %v1462 = vrot.slane %v1443, %v1461
    %v1463 = vsel %vm430, %v1439, 0
    %1465 = vmatprep.subr.mxu0 0.0
    %1466 = vmatpush1.msra.mxu0 0.0
    %1467 = vmatprep.subr.mxu0 0.0
    %1468 = vmatpush1.msra.mxu0 0.0
    %1469 = vmatprep.subr.mxu0 0.0
    %1470 = vmatpush1.msra.mxu0 0.0
    %1471 = vmatprep.subr.mxu0 0.0
    %1472 = vmatpush1.msra.mxu0 0.0
    %1473 = vmatprep.subr.mxu0 0.0
    %1474 = vmatpush1.msra.mxu0 0.0
    %1475 = vmatprep.subr.mxu0 0.0
    %1476 = vmatpush1.msra.mxu0 0.0
    %1477 = vmatprep.subr.mxu0 0.0
    %1478 = vmatpush1.msra.mxu0 0.0
    %1479 = vmatprep.subr.mxu0 0.0
    %1480 = vmatpush1.msra.mxu0 0.0
    %1481 = vmatprep.subr.mxu0 0.0
    %1482 = vmatpush1.msra.mxu0 0.0
    %1483 = vmatprep.subr.mxu0 0.0
    %1484 = vmatpush1.msra.mxu0 0.0
    %1485 = vmatprep.subr.mxu0 0.0
    %1486 = vmatpush1.msra.mxu0 0.0
    %1487 = vmatprep.subr.mxu0 0.0
    %1488 = vmatpush1.msra.mxu0 0.0
    %1489 = vmatprep.subr.mxu0 0.0
    %1490 = vmatpush1.msra.mxu0 %v1458
    %1491 = vmatprep.subr.mxu0 0.0
    %1492 = vmatpush1.msra.mxu0 %v1457
    %1493 = vmatprep.subr.mxu0 0.0
    %1494 = vmatpush1.msra.mxu0 %v1456
    %1495 = vmatprep.subr.mxu0 0.0
    %1496 = vmatpush1.msra.mxu0 %v1455
    %1497 = vmatprep.subr.mxu0 0.0
    %1498 = vmatpush2.msra.mxu0 0.0
    %1499 = vmatprep.subr.mxu0 0.0
    %1500 = vmatpush2.msra.mxu0 0.0
    %1501 = vmatprep.subr.mxu0 0.0
    %1502 = vmatpush2.msra.mxu0 0.0
    %1503 = vmatprep.subr.mxu0 0.0
    %1504 = vmatpush2.msra.mxu0 0.0
    %1505 = vmatprep.subr.mxu0 0.0
    %1506 = vmatpush2.msra.mxu0 0.0
    %1507 = vmatprep.subr.mxu0 0.0
    %1508 = vmatpush2.msra.mxu0 0.0
    %1509 = vmatprep.subr.mxu0 0.0
    %1510 = vmatpush2.msra.mxu0 0.0
    %1511 = vmatprep.subr.mxu0 0.0
    %1512 = vmatpush2.msra.mxu0 0.0
    %1513 = vmatprep.subr.mxu0 0.0
    %1514 = vmatpush2.msra.mxu0 0.0
    %1515 = vmatprep.subr.mxu0 0.0
    %1516 = vmatpush2.msra.mxu0 0.0
    %1517 = vmatprep.subr.mxu0 0.0
    %1518 = vmatpush2.msra.mxu0 0.0
    %1519 = vmatprep.subr.mxu0 0.0
    %1520 = vmatpush2.msra.mxu0 0.0
    %1521 = vmatprep.subr.mxu0 0.0
    %1522 = vmatpush2.msra.mxu0 0.0
    %1523 = vmatprep.subr.mxu0 0.0
    %1524 = vmatpush2.msra.mxu0 0.0
    %1525 = vmatprep.subr.mxu0 0.0
    %1526 = vmatpush2.msra.mxu0 0.0
    %1527 = vmatprep.subr.mxu0 0.0
    %1528 = vmatpush2.msra.mxu0 0.0
    %1529 = vmatprep.mubr.f32.mxu0 0.0
    %1530 = vmatmul.mubr.f32.gmra.mxu0 %v572
    %v1531 = vpop.f32.mrf.mxu0
    %v1532 = vadd.f32 %v1462, %v1531
    %v1533 = vpop.f32.mrf.mxu0
    %1534 = vmatprep.mubr.f32.mxu0 0.0
    %1535 = vmatmul.mubr.f32.gmra.mxu0 %v696
    %v1536 = vpop.f32.mrf.mxu0
    %v1537 = vadd.f32 %v1462, %v1536
    %v1538 = vpop.f32.mrf.mxu0
    %1539 = vmatprep.mubr.f32.mxu0 0.0
    %1540 = vmatmul.mubr.f32.gmra.mxu0 %v820
    %v1541 = vpop.f32.mrf.mxu0
    %v1542 = vadd.f32 %v1462, %v1541
    %v1543 = vpop.f32.mrf.mxu0
    %1544 = vmatprep.mubr.f32.mxu0 0.0
    %1545 = vmatmul.mubr.f32.gmra.mxu0 %v944
    %v1546 = vpop.f32.mrf.mxu0
    %v1547 = vadd.f32 %v1462, %v1546
    %v1548 = vpop.f32.mrf.mxu0
    %1549 = vmatprep.mubr.f32.mxu0 0.0
    %1550 = vmatmul.mubr.f32.gmra.mxu0 %v1068
    %v1551 = vpop.f32.mrf.mxu0
    %v1552 = vadd.f32 %v1462, %v1551
    %v1553 = vpop.f32.mrf.mxu0
    %1554 = vmatprep.mubr.f32.mxu0 0.0
    %1555 = vmatmul.mubr.f32.gmra.mxu0 %v1192
    %v1556 = vpop.f32.mrf.mxu0
    %v1557 = vadd.f32 %v1462, %v1556
    %v1558 = vpop.f32.mrf.mxu0
    %1559 = vmatprep.mubr.f32.mxu0 0.0
    %1560 = vmatmul.mubr.f32.gmra.mxu0 %v1316
    %v1561 = vpop.f32.mrf.mxu0
    %v1562 = vadd.f32 %v1462, %v1561
    %v1563 = vpop.f32.mrf.mxu0
    %1564 = vmatprep.mubr.f32.mxu0 0.0
    %1565 = vmatmul.mubr.f32.gmra.mxu0 %v1463
    %v1566 = vpop.f32.mrf.mxu0
    %v1567 = vadd.f32 %v1462, %v1566
    %v1568 = vpop.f32.mrf.mxu0
    %1569 = vdwg.mxu0
    %v1571 = vsel %vm430, %v1452, 0
    %1573 = vmatprep.subr.mxu0 0.0
    %1574 = vmatpush1.msra.mxu0 0.0
    %1575 = vmatprep.subr.mxu0 0.0
    %1576 = vmatpush1.msra.mxu0 0.0
    %1577 = vmatprep.subr.mxu0 0.0
    %1578 = vmatpush1.msra.mxu0 0.0
    %1579 = vmatprep.subr.mxu0 0.0
    %1580 = vmatpush1.msra.mxu0 0.0
    %1581 = vmatprep.subr.mxu0 0.0
    %1582 = vmatpush1.msra.mxu0 0.0
    %1583 = vmatprep.subr.mxu0 0.0
    %1584 = vmatpush1.msra.mxu0 0.0
    %1585 = vmatprep.subr.mxu0 0.0
    %1586 = vmatpush1.msra.mxu0 0.0
    %1587 = vmatprep.subr.mxu0 0.0
    %1588 = vmatpush1.msra.mxu0 0.0
    %1589 = vmatprep.subr.mxu0 0.0
    %1590 = vmatpush1.msra.mxu0 0.0
    %1591 = vmatprep.subr.mxu0 0.0
    %1592 = vmatpush1.msra.mxu0 0.0
    %1593 = vmatprep.subr.mxu0 0.0
    %1594 = vmatpush1.msra.mxu0 0.0
    %1595 = vmatprep.subr.mxu0 0.0
    %1596 = vmatpush1.msra.mxu0 0.0
    %1597 = vmatprep.subr.mxu0 0.0
    %1598 = vmatpush1.msra.mxu0 %v1450
    %1599 = vmatprep.subr.mxu0 0.0
    %1600 = vmatpush1.msra.mxu0 %v1449
    %1601 = vmatprep.subr.mxu0 0.0
    %1602 = vmatpush1.msra.mxu0 %v1448
    %1603 = vmatprep.subr.mxu0 0.0
    %1604 = vmatpush1.msra.mxu0 %v1447
    %1605 = vmatprep.subr.mxu0 0.0
    %1606 = vmatpush2.msra.mxu0 0.0
    %1607 = vmatprep.subr.mxu0 0.0
    %1608 = vmatpush2.msra.mxu0 0.0
    %1609 = vmatprep.subr.mxu0 0.0
    %1610 = vmatpush2.msra.mxu0 0.0
    %1611 = vmatprep.subr.mxu0 0.0
    %1612 = vmatpush2.msra.mxu0 0.0
    %1613 = vmatprep.subr.mxu0 0.0
    %1614 = vmatpush2.msra.mxu0 0.0
    %1615 = vmatprep.subr.mxu0 0.0
    %1616 = vmatpush2.msra.mxu0 0.0
    %1617 = vmatprep.subr.mxu0 0.0
    %1618 = vmatpush2.msra.mxu0 0.0
    %1619 = vmatprep.subr.mxu0 0.0
    %1620 = vmatpush2.msra.mxu0 0.0
    %1621 = vmatprep.subr.mxu0 0.0
    %1622 = vmatpush2.msra.mxu0 0.0
    %1623 = vmatprep.subr.mxu0 0.0
    %1624 = vmatpush2.msra.mxu0 0.0
    %1625 = vmatprep.subr.mxu0 0.0
    %1626 = vmatpush2.msra.mxu0 0.0
    %1627 = vmatprep.subr.mxu0 0.0
    %1628 = vmatpush2.msra.mxu0 0.0
    %1629 = vmatprep.subr.mxu0 0.0
    %1630 = vmatpush2.msra.mxu0 0.0
    %1631 = vmatprep.subr.mxu0 0.0
    %1632 = vmatpush2.msra.mxu0 0.0
    %1633 = vmatprep.subr.mxu0 0.0
    %1634 = vmatpush2.msra.mxu0 0.0
    %1635 = vmatprep.subr.mxu0 0.0
    %1636 = vmatpush2.msra.mxu0 0.0
    %1637 = vmatprep.mubr.f32.mxu0 0.0
    %1638 = vmatmul.mubr.f32.gmra.mxu0 %v1571
    %v1639 = vpop.f32.mrf.mxu0
    %v1640 = vadd.f32 0.0, %v1639
    %v1641 = vpop.f32.mrf.mxu0
    %1642 = vdwg.mxu0
    %v1643 = vadd.f32 %v1532, %v1640
    %v1644 = vlaneseq
    %v1645 = vshrl.u32 %v1644, 7
    %v1646 = vsub.s32 0, %v1645
    %v1647 = vrot.slane %v1444, %v1646
    %v1648 = vmul.f32 %v1647, %v1454
    %v1649 = vadd.f32 %v1643, %v1648
    %v1650 = vmul.f32 %v1649, 0.5
    %v1651 = vtanh.pop %v1650
    %v1652 = vadd.f32 %v1651, 1.0
    %v1653 = vmul.f32 %v1652, 0.5
    %v1654 = vlaneseq
    %v1655 = vshrl.u32 %v1654, 7
    %v1656 = vsub.s32 0, %v1655
    %v1657 = vrot.slane %v1445, %v1656
    %v1658 = vmul.f32 %v1657, %v1454
    %1660 = vrot.lane.b32.xlu0 %v1658, 32
    %v1661 = vpop.permute.xlu0 %1660
    %v1663 = vadd.f32 %v1643, %v1661
    %v1664 = vmul.f32 %v1663, 0.5
    %v1665 = vtanh.pop %v1664
    %v1666 = vadd.f32 %v1665, 1.0
    %v1667 = vmul.f32 %v1666, 0.5
    %v1668 = vtanh.pop %v1643
    %1670 = vrot.lane.b32.xlu0 %v1454, 32
    %v1671 = vpop.permute.xlu0 %1670
    %v1673 = vmul.f32 %v1667, %v1671
    %1675 = vrot.lane.b32.xlu0 %v1668, 64
    %v1676 = vpop.permute.xlu0 %1675
    %v1678 = vmul.f32 %v1653, %v1676
    %1680 = vrot.lane.b32.xlu0 %v1678, 32
    %v1681 = vpop.permute.xlu0 %1680
    %v1683 = vadd.f32 %v1673, %v1681
    %v1684 = vlaneseq
    %v1685 = vshrl.u32 %v1684, 7
    %v1686 = vsub.s32 0, %v1685
    %v1687 = vrot.slane %v1446, %v1686
    %1689 = vrot.lane.b32.xlu0 %v1683, 96
    %v1690 = vpop.permute.xlu0 %1689
    %v1692 = vmul.f32 %v1687, %v1690
    %1694 = vrot.lane.b32.xlu0 %v1692, 96
    %v1695 = vpop.permute.xlu0 %1694
    %v1697 = vadd.f32 %v1643, %v1695
    %v1698 = vmul.f32 %v1697, 0.5
    %v1699 = vtanh.pop %v1698
    %v1700 = vadd.f32 %v1699, 1.0
    %v1701 = vmul.f32 %v1700, 0.5
    %v1702 = vtanh.pop %v1683
    %1704 = vrot.lane.b32.xlu0 %v1702, 64
    %v1705 = vpop.permute.xlu0 %1704
    %v1707 = vmul.f32 %v1701, %v1705
    %1709 = vrot.lane.b32.xlu0 %v1707, 32
    %v1710 = vpop.permute.xlu0 %1709
    %v1711 = vsel %vm430, %v1710, 0
    %1713 = vmatprep.subr.mxu0 0.0
    %1714 = vmatpush1.msra.mxu0 0.0
    %1715 = vmatprep.subr.mxu0 0.0
    %1716 = vmatpush1.msra.mxu0 0.0
    %1717 = vmatprep.subr.mxu0 0.0
    %1718 = vmatpush1.msra.mxu0 0.0
    %1719 = vmatprep.subr.mxu0 0.0
    %1720 = vmatpush1.msra.mxu0 0.0
    %1721 = vmatprep.subr.mxu0 0.0
    %1722 = vmatpush1.msra.mxu0 0.0
    %1723 = vmatprep.subr.mxu0 0.0
    %1724 = vmatpush1.msra.mxu0 0.0
    %1725 = vmatprep.subr.mxu0 0.0
    %1726 = vmatpush1.msra.mxu0 0.0
    %1727 = vmatprep.subr.mxu0 0.0
    %1728 = vmatpush1.msra.mxu0 0.0
    %1729 = vmatprep.subr.mxu0 0.0
    %1730 = vmatpush1.msra.mxu0 0.0
    %1731 = vmatprep.subr.mxu0 0.0
    %1732 = vmatpush1.msra.mxu0 0.0
    %1733 = vmatprep.subr.mxu0 0.0
    %1734 = vmatpush1.msra.mxu0 0.0
    %1735 = vmatprep.subr.mxu0 0.0
    %1736 = vmatpush1.msra.mxu0 0.0
    %1737 = vmatprep.subr.mxu0 0.0
    %1738 = vmatpush1.msra.mxu0 %v1450
    %1739 = vmatprep.subr.mxu0 0.0
    %1740 = vmatpush1.msra.mxu0 %v1449
    %1741 = vmatprep.subr.mxu0 0.0
    %1742 = vmatpush1.msra.mxu0 %v1448
    %1743 = vmatprep.subr.mxu0 0.0
    %1744 = vmatpush1.msra.mxu0 %v1447
    %1745 = vmatprep.subr.mxu0 0.0
    %1746 = vmatpush2.msra.mxu0 0.0
    %1747 = vmatprep.subr.mxu0 0.0
    %1748 = vmatpush2.msra.mxu0 0.0
    %1749 = vmatprep.subr.mxu0 0.0
    %1750 = vmatpush2.msra.mxu0 0.0
    %1751 = vmatprep.subr.mxu0 0.0
    %1752 = vmatpush2.msra.mxu0 0.0
    %1753 = vmatprep.subr.mxu0 0.0
    %1754 = vmatpush2.msra.mxu0 0.0
    %1755 = vmatprep.subr.mxu0 0.0
    %1756 = vmatpush2.msra.mxu0 0.0
    %1757 = vmatprep.subr.mxu0 0.0
    %1758 = vmatpush2.msra.mxu0 0.0
    %1759 = vmatprep.subr.mxu0 0.0
    %1760 = vmatpush2.msra.mxu0 0.0
    %1761 = vmatprep.subr.mxu0 0.0
    %1762 = vmatpush2.msra.mxu0 0.0
    %1763 = vmatprep.subr.mxu0 0.0
    %1764 = vmatpush2.msra.mxu0 0.0
    %1765 = vmatprep.subr.mxu0 0.0
    %1766 = vmatpush2.msra.mxu0 0.0
    %1767 = vmatprep.subr.mxu0 0.0
    %1768 = vmatpush2.msra.mxu0 0.0
    %1769 = vmatprep.subr.mxu0 0.0
    %1770 = vmatpush2.msra.mxu0 0.0
    %1771 = vmatprep.subr.mxu0 0.0
    %1772 = vmatpush2.msra.mxu0 0.0
    %1773 = vmatprep.subr.mxu0 0.0
    %1774 = vmatpush2.msra.mxu0 0.0
    %1775 = vmatprep.subr.mxu0 0.0
    %1776 = vmatpush2.msra.mxu0 0.0
    %1777 = vmatprep.mubr.f32.mxu0 0.0
    %1778 = vmatmul.mubr.f32.gmra.mxu0 %v1711
    %v1779 = vpop.f32.mrf.mxu0
    %v1780 = vadd.f32 0.0, %v1779
    %v1781 = vpop.f32.mrf.mxu0
    %1782 = vdwg.mxu0
    %v1783 = vadd.f32 %v1537, %v1780
    %v1784 = vmul.f32 %v1647, %v1690
    %v1785 = vadd.f32 %v1783, %v1784
    %v1786 = vmul.f32 %v1785, 0.5
    %v1787 = vtanh.pop %v1786
    %v1788 = vadd.f32 %v1787, 1.0
    %v1789 = vmul.f32 %v1788, 0.5
    %v1790 = vmul.f32 %v1657, %v1690
    %1792 = vrot.lane.b32.xlu0 %v1790, 32
    %v1793 = vpop.permute.xlu0 %1792
    %v1795 = vadd.f32 %v1783, %v1793
    %v1796 = vmul.f32 %v1795, 0.5
    %v1797 = vtanh.pop %v1796
    %v1798 = vadd.f32 %v1797, 1.0
    %v1799 = vmul.f32 %v1798, 0.5
    %v1800 = vtanh.pop %v1783
    %v1801 = vmul.f32 %v1799, %v1683
    %1803 = vrot.lane.b32.xlu0 %v1800, 64
    %v1804 = vpop.permute.xlu0 %1803
    %v1806 = vmul.f32 %v1789, %v1804
    %1808 = vrot.lane.b32.xlu0 %v1806, 32
    %v1809 = vpop.permute.xlu0 %1808
    %v1811 = vadd.f32 %v1801, %v1809
    %1813 = vrot.lane.b32.xlu0 %v1811, 96
    %v1814 = vpop.permute.xlu0 %1813
    %v1816 = vmul.f32 %v1687, %v1814
    %1818 = vrot.lane.b32.xlu0 %v1816, 96
    %v1819 = vpop.permute.xlu0 %1818
    %v1821 = vadd.f32 %v1783, %v1819
    %v1822 = vmul.f32 %v1821, 0.5
    %v1823 = vtanh.pop %v1822
    %v1824 = vadd.f32 %v1823, 1.0
    %v1825 = vmul.f32 %v1824, 0.5
    %v1826 = vtanh.pop %v1811
    %1828 = vrot.lane.b32.xlu0 %v1826, 64
    %v1829 = vpop.permute.xlu0 %1828
    %v1831 = vmul.f32 %v1825, %v1829
    %1833 = vrot.lane.b32.xlu0 %v1831, 32
    %v1834 = vpop.permute.xlu0 %1833
    %v1835 = vsel %vm430, %v1834, 0
    %1837 = vmatprep.subr.mxu0 0.0
    %1838 = vmatpush1.msra.mxu0 0.0
    %1839 = vmatprep.subr.mxu0 0.0
    %1840 = vmatpush1.msra.mxu0 0.0
    %1841 = vmatprep.subr.mxu0 0.0
    %1842 = vmatpush1.msra.mxu0 0.0
    %1843 = vmatprep.subr.mxu0 0.0
    %1844 = vmatpush1.msra.mxu0 0.0
    %1845 = vmatprep.subr.mxu0 0.0
    %1846 = vmatpush1.msra.mxu0 0.0
    %1847 = vmatprep.subr.mxu0 0.0
    %1848 = vmatpush1.msra.mxu0 0.0
    %1849 = vmatprep.subr.mxu0 0.0
    %1850 = vmatpush1.msra.mxu0 0.0
    %1851 = vmatprep.subr.mxu0 0.0
    %1852 = vmatpush1.msra.mxu0 0.0
    %1853 = vmatprep.subr.mxu0 0.0
    %1854 = vmatpush1.msra.mxu0 0.0
    %1855 = vmatprep.subr.mxu0 0.0
    %1856 = vmatpush1.msra.mxu0 0.0
    %1857 = vmatprep.subr.mxu0 0.0
    %1858 = vmatpush1.msra.mxu0 0.0
    %1859 = vmatprep.subr.mxu0 0.0
    %1860 = vmatpush1.msra.mxu0 0.0
    %1861 = vmatprep.subr.mxu0 0.0
    %1862 = vmatpush1.msra.mxu0 %v1450
    %1863 = vmatprep.subr.mxu0 0.0
    %1864 = vmatpush1.msra.mxu0 %v1449
    %1865 = vmatprep.subr.mxu0 0.0
    %1866 = vmatpush1.msra.mxu0 %v1448
    %1867 = vmatprep.subr.mxu0 0.0
    %1868 = vmatpush1.msra.mxu0 %v1447
    %1869 = vmatprep.subr.mxu0 0.0
    %1870 = vmatpush2.msra.mxu0 0.0
    %1871 = vmatprep.subr.mxu0 0.0
    %1872 = vmatpush2.msra.mxu0 0.0
    %1873 = vmatprep.subr.mxu0 0.0
    %1874 = vmatpush2.msra.mxu0 0.0
    %1875 = vmatprep.subr.mxu0 0.0
    %1876 = vmatpush2.msra.mxu0 0.0
    %1877 = vmatprep.subr.mxu0 0.0
    %1878 = vmatpush2.msra.mxu0 0.0
    %1879 = vmatprep.subr.mxu0 0.0
    %1880 = vmatpush2.msra.mxu0 0.0
    %1881 = vmatprep.subr.mxu0 0.0
    %1882 = vmatpush2.msra.mxu0 0.0
    %1883 = vmatprep.subr.mxu0 0.0
    %1884 = vmatpush2.msra.mxu0 0.0
    %1885 = vmatprep.subr.mxu0 0.0
    %1886 = vmatpush2.msra.mxu0 0.0
    %1887 = vmatprep.subr.mxu0 0.0
    %1888 = vmatpush2.msra.mxu0 0.0
    %1889 = vmatprep.subr.mxu0 0.0
    %1890 = vmatpush2.msra.mxu0 0.0
    %1891 = vmatprep.subr.mxu0 0.0
    %1892 = vmatpush2.msra.mxu0 0.0
    %1893 = vmatprep.subr.mxu0 0.0
    %1894 = vmatpush2.msra.mxu0 0.0
    %1895 = vmatprep.subr.mxu0 0.0
    %1896 = vmatpush2.msra.mxu0 0.0
    %1897 = vmatprep.subr.mxu0 0.0
    %1898 = vmatpush2.msra.mxu0 0.0
    %1899 = vmatprep.subr.mxu0 0.0
    %1900 = vmatpush2.msra.mxu0 0.0
    %1901 = vmatprep.mubr.f32.mxu0 0.0
    %1902 = vmatmul.mubr.f32.gmra.mxu0 %v1835
    %v1903 = vpop.f32.mrf.mxu0
    %v1904 = vadd.f32 0.0, %v1903
    %v1905 = vpop.f32.mrf.mxu0
    %1906 = vdwg.mxu0
    %v1907 = vadd.f32 %v1542, %v1904
    %v1908 = vmul.f32 %v1647, %v1814
    %v1909 = vadd.f32 %v1907, %v1908
    %v1910 = vmul.f32 %v1909, 0.5
    %v1911 = vtanh.pop %v1910
    %v1912 = vadd.f32 %v1911, 1.0
    %v1913 = vmul.f32 %v1912, 0.5
    %v1914 = vmul.f32 %v1657, %v1814
    %1916 = vrot.lane.b32.xlu0 %v1914, 32
    %v1917 = vpop.permute.xlu0 %1916
    %v1919 = vadd.f32 %v1907, %v1917
    %v1920 = vmul.f32 %v1919, 0.5
    %v1921 = vtanh.pop %v1920
    %v1922 = vadd.f32 %v1921, 1.0
    %v1923 = vmul.f32 %v1922, 0.5
    %v1924 = vtanh.pop %v1907
    %v1925 = vmul.f32 %v1923, %v1811
    %1927 = vrot.lane.b32.xlu0 %v1924, 64
    %v1928 = vpop.permute.xlu0 %1927
    %v1930 = vmul.f32 %v1913, %v1928
    %1932 = vrot.lane.b32.xlu0 %v1930, 32
    %v1933 = vpop.permute.xlu0 %1932
    %v1935 = vadd.f32 %v1925, %v1933
    %1937 = vrot.lane.b32.xlu0 %v1935, 96
    %v1938 = vpop.permute.xlu0 %1937
    %v1940 = vmul.f32 %v1687, %v1938
    %1942 = vrot.lane.b32.xlu0 %v1940, 96
    %v1943 = vpop.permute.xlu0 %1942
    %v1945 = vadd.f32 %v1907, %v1943
    %v1946 = vmul.f32 %v1945, 0.5
    %v1947 = vtanh.pop %v1946
    %v1948 = vadd.f32 %v1947, 1.0
    %v1949 = vmul.f32 %v1948, 0.5
    %v1950 = vtanh.pop %v1935
    %1952 = vrot.lane.b32.xlu0 %v1950, 64
    %v1953 = vpop.permute.xlu0 %1952
    %v1955 = vmul.f32 %v1949, %v1953
    %1957 = vrot.lane.b32.xlu0 %v1955, 32
    %v1958 = vpop.permute.xlu0 %1957
    %v1959 = vsel %vm430, %v1958, 0
    %1961 = vmatprep.subr.mxu0 0.0
    %1962 = vmatpush1.msra.mxu0 0.0
    %1963 = vmatprep.subr.mxu0 0.0
    %1964 = vmatpush1.msra.mxu0 0.0
    %1965 = vmatprep.subr.mxu0 0.0
    %1966 = vmatpush1.msra.mxu0 0.0
    %1967 = vmatprep.subr.mxu0 0.0
    %1968 = vmatpush1.msra.mxu0 0.0
    %1969 = vmatprep.subr.mxu0 0.0
    %1970 = vmatpush1.msra.mxu0 0.0
    %1971 = vmatprep.subr.mxu0 0.0
    %1972 = vmatpush1.msra.mxu0 0.0
    %1973 = vmatprep.subr.mxu0 0.0
    %1974 = vmatpush1.msra.mxu0 0.0
    %1975 = vmatprep.subr.mxu0 0.0
    %1976 = vmatpush1.msra.mxu0 0.0
    %1977 = vmatprep.subr.mxu0 0.0
    %1978 = vmatpush1.msra.mxu0 0.0
    %1979 = vmatprep.subr.mxu0 0.0
    %1980 = vmatpush1.msra.mxu0 0.0
    %1981 = vmatprep.subr.mxu0 0.0
    %1982 = vmatpush1.msra.mxu0 0.0
    %1983 = vmatprep.subr.mxu0 0.0
    %1984 = vmatpush1.msra.mxu0 0.0
    %1985 = vmatprep.subr.mxu0 0.0
    %1986 = vmatpush1.msra.mxu0 %v1450
    %1987 = vmatprep.subr.mxu0 0.0
    %1988 = vmatpush1.msra.mxu0 %v1449
    %1989 = vmatprep.subr.mxu0 0.0
    %1990 = vmatpush1.msra.mxu0 %v1448
    %1991 = vmatprep.subr.mxu0 0.0
    %1992 = vmatpush1.msra.mxu0 %v1447
    %1993 = vmatprep.subr.mxu0 0.0
    %1994 = vmatpush2.msra.mxu0 0.0
    %1995 = vmatprep.subr.mxu0 0.0
    %1996 = vmatpush2.msra.mxu0 0.0
    %1997 = vmatprep.subr.mxu0 0.0
    %1998 = vmatpush2.msra.mxu0 0.0
    %1999 = vmatprep.subr.mxu0 0.0
    %2000 = vmatpush2.msra.mxu0 0.0
    %2001 = vmatprep.subr.mxu0 0.0
    %2002 = vmatpush2.msra.mxu0 0.0
    %2003 = vmatprep.subr.mxu0 0.0
    %2004 = vmatpush2.msra.mxu0 0.0
    %2005 = vmatprep.subr.mxu0 0.0
    %2006 = vmatpush2.msra.mxu0 0.0
    %2007 = vmatprep.subr.mxu0 0.0
    %2008 = vmatpush2.msra.mxu0 0.0
    %2009 = vmatprep.subr.mxu0 0.0
    %2010 = vmatpush2.msra.mxu0 0.0
    %2011 = vmatprep.subr.mxu0 0.0
    %2012 = vmatpush2.msra.mxu0 0.0
    %2013 = vmatprep.subr.mxu0 0.0
    %2014 = vmatpush2.msra.mxu0 0.0
    %2015 = vmatprep.subr.mxu0 0.0
    %2016 = vmatpush2.msra.mxu0 0.0
    %2017 = vmatprep.subr.mxu0 0.0
    %2018 = vmatpush2.msra.mxu0 0.0
    %2019 = vmatprep.subr.mxu0 0.0
    %2020 = vmatpush2.msra.mxu0 0.0
    %2021 = vmatprep.subr.mxu0 0.0
    %2022 = vmatpush2.msra.mxu0 0.0
    %2023 = vmatprep.subr.mxu0 0.0
    %2024 = vmatpush2.msra.mxu0 0.0
    %2025 = vmatprep.mubr.f32.mxu0 0.0
    %2026 = vmatmul.mubr.f32.gmra.mxu0 %v1959
    %v2027 = vpop.f32.mrf.mxu0
    %v2028 = vadd.f32 0.0, %v2027
    %v2029 = vpop.f32.mrf.mxu0
    %2030 = vdwg.mxu0
    %v2031 = vadd.f32 %v1547, %v2028
    %v2032 = vmul.f32 %v1647, %v1938
    %v2033 = vadd.f32 %v2031, %v2032
    %v2034 = vmul.f32 %v2033, 0.5
    %v2035 = vtanh.pop %v2034
    %v2036 = vadd.f32 %v2035, 1.0
    %v2037 = vmul.f32 %v2036, 0.5
    %v2038 = vmul.f32 %v1657, %v1938
    %2040 = vrot.lane.b32.xlu0 %v2038, 32
    %v2041 = vpop.permute.xlu0 %2040
    %v2043 = vadd.f32 %v2031, %v2041
    %v2044 = vmul.f32 %v2043, 0.5
    %v2045 = vtanh.pop %v2044
    %v2046 = vadd.f32 %v2045, 1.0
    %v2047 = vmul.f32 %v2046, 0.5
    %v2048 = vtanh.pop %v2031
    %v2049 = vmul.f32 %v2047, %v1935
    %2051 = vrot.lane.b32.xlu0 %v2048, 64
    %v2052 = vpop.permute.xlu0 %2051
    %v2054 = vmul.f32 %v2037, %v2052
    %2056 = vrot.lane.b32.xlu0 %v2054, 32
    %v2057 = vpop.permute.xlu0 %2056
    %v2059 = vadd.f32 %v2049, %v2057
    %2061 = vrot.lane.b32.xlu0 %v2059, 96
    %v2062 = vpop.permute.xlu0 %2061
    %v2064 = vmul.f32 %v1687, %v2062
    %2066 = vrot.lane.b32.xlu0 %v2064, 96
    %v2067 = vpop.permute.xlu0 %2066
    %v2069 = vadd.f32 %v2031, %v2067
    %v2070 = vmul.f32 %v2069, 0.5
    %v2071 = vtanh.pop %v2070
    %v2072 = vadd.f32 %v2071, 1.0
    %v2073 = vmul.f32 %v2072, 0.5
    %v2074 = vtanh.pop %v2059
    %2076 = vrot.lane.b32.xlu0 %v2074, 64
    %v2077 = vpop.permute.xlu0 %2076
    %v2079 = vmul.f32 %v2073, %v2077
    %2081 = vrot.lane.b32.xlu0 %v2079, 32
    %v2082 = vpop.permute.xlu0 %2081
    %v2083 = vsel %vm430, %v2082, 0
    %2085 = vmatprep.subr.mxu0 0.0
    %2086 = vmatpush1.msra.mxu0 0.0
    %2087 = vmatprep.subr.mxu0 0.0
    %2088 = vmatpush1.msra.mxu0 0.0
    %2089 = vmatprep.subr.mxu0 0.0
    %2090 = vmatpush1.msra.mxu0 0.0
    %2091 = vmatprep.subr.mxu0 0.0
    %2092 = vmatpush1.msra.mxu0 0.0
    %2093 = vmatprep.subr.mxu0 0.0
    %2094 = vmatpush1.msra.mxu0 0.0
    %2095 = vmatprep.subr.mxu0 0.0
    %2096 = vmatpush1.msra.mxu0 0.0
    %2097 = vmatprep.subr.mxu0 0.0
    %2098 = vmatpush1.msra.mxu0 0.0
    %2099 = vmatprep.subr.mxu0 0.0
    %2100 = vmatpush1.msra.mxu0 0.0
    %2101 = vmatprep.subr.mxu0 0.0
    %2102 = vmatpush1.msra.mxu0 0.0
    %2103 = vmatprep.subr.mxu0 0.0
    %2104 = vmatpush1.msra.mxu0 0.0
    %2105 = vmatprep.subr.mxu0 0.0
    %2106 = vmatpush1.msra.mxu0 0.0
    %2107 = vmatprep.subr.mxu0 0.0
    %2108 = vmatpush1.msra.mxu0 0.0
    %2109 = vmatprep.subr.mxu0 0.0
    %2110 = vmatpush1.msra.mxu0 %v1450
    %2111 = vmatprep.subr.mxu0 0.0
    %2112 = vmatpush1.msra.mxu0 %v1449
    %2113 = vmatprep.subr.mxu0 0.0
    %2114 = vmatpush1.msra.mxu0 %v1448
    %2115 = vmatprep.subr.mxu0 0.0
    %2116 = vmatpush1.msra.mxu0 %v1447
    %2117 = vmatprep.subr.mxu0 0.0
    %2118 = vmatpush2.msra.mxu0 0.0
    %2119 = vmatprep.subr.mxu0 0.0
    %2120 = vmatpush2.msra.mxu0 0.0
    %2121 = vmatprep.subr.mxu0 0.0
    %2122 = vmatpush2.msra.mxu0 0.0
    %2123 = vmatprep.subr.mxu0 0.0
    %2124 = vmatpush2.msra.mxu0 0.0
    %2125 = vmatprep.subr.mxu0 0.0
    %2126 = vmatpush2.msra.mxu0 0.0
    %2127 = vmatprep.subr.mxu0 0.0
    %2128 = vmatpush2.msra.mxu0 0.0
    %2129 = vmatprep.subr.mxu0 0.0
    %2130 = vmatpush2.msra.mxu0 0.0
    %2131 = vmatprep.subr.mxu0 0.0
    %2132 = vmatpush2.msra.mxu0 0.0
    %2133 = vmatprep.subr.mxu0 0.0
    %2134 = vmatpush2.msra.mxu0 0.0
    %2135 = vmatprep.subr.mxu0 0.0
    %2136 = vmatpush2.msra.mxu0 0.0
    %2137 = vmatprep.subr.mxu0 0.0
    %2138 = vmatpush2.msra.mxu0 0.0
    %2139 = vmatprep.subr.mxu0 0.0
    %2140 = vmatpush2.msra.mxu0 0.0
    %2141 = vmatprep.subr.mxu0 0.0
    %2142 = vmatpush2.msra.mxu0 0.0
    %2143 = vmatprep.subr.mxu0 0.0
    %2144 = vmatpush2.msra.mxu0 0.0
    %2145 = vmatprep.subr.mxu0 0.0
    %2146 = vmatpush2.msra.mxu0 0.0
    %2147 = vmatprep.subr.mxu0 0.0
    %2148 = vmatpush2.msra.mxu0 0.0
    %2149 = vmatprep.mubr.f32.mxu0 0.0
    %2150 = vmatmul.mubr.f32.gmra.mxu0 %v2083
    %v2151 = vpop.f32.mrf.mxu0
    %v2152 = vadd.f32 0.0, %v2151
    %v2153 = vpop.f32.mrf.mxu0
    %2154 = vdwg.mxu0
    %v2155 = vadd.f32 %v1552, %v2152
    %v2156 = vmul.f32 %v1647, %v2062
    %v2157 = vadd.f32 %v2155, %v2156
    %v2158 = vmul.f32 %v2157, 0.5
    %v2159 = vtanh.pop %v2158
    %v2160 = vadd.f32 %v2159, 1.0
    %v2161 = vmul.f32 %v2160, 0.5
    %v2162 = vmul.f32 %v1657, %v2062
    %2164 = vrot.lane.b32.xlu0 %v2162, 32
    %v2165 = vpop.permute.xlu0 %2164
    %v2167 = vadd.f32 %v2155, %v2165
    %v2168 = vmul.f32 %v2167, 0.5
    %v2169 = vtanh.pop %v2168
    %v2170 = vadd.f32 %v2169, 1.0
    %v2171 = vmul.f32 %v2170, 0.5
    %v2172 = vtanh.pop %v2155
    %v2173 = vmul.f32 %v2171, %v2059
    %2175 = vrot.lane.b32.xlu0 %v2172, 64
    %v2176 = vpop.permute.xlu0 %2175
    %v2178 = vmul.f32 %v2161, %v2176
    %2180 = vrot.lane.b32.xlu0 %v2178, 32
    %v2181 = vpop.permute.xlu0 %2180
    %v2183 = vadd.f32 %v2173, %v2181
    %2185 = vrot.lane.b32.xlu0 %v2183, 96
    %v2186 = vpop.permute.xlu0 %2185
    %v2188 = vmul.f32 %v1687, %v2186
    %2190 = vrot.lane.b32.xlu0 %v2188, 96
    %v2191 = vpop.permute.xlu0 %2190
    %v2193 = vadd.f32 %v2155, %v2191
    %v2194 = vmul.f32 %v2193, 0.5
    %v2195 = vtanh.pop %v2194
    %v2196 = vadd.f32 %v2195, 1.0
    %v2197 = vmul.f32 %v2196, 0.5
    %v2198 = vtanh.pop %v2183
    %2200 = vrot.lane.b32.xlu0 %v2198, 64
    %v2201 = vpop.permute.xlu0 %2200
    %v2203 = vmul.f32 %v2197, %v2201
    %2205 = vrot.lane.b32.xlu0 %v2203, 32
    %v2206 = vpop.permute.xlu0 %2205
    %v2207 = vsel %vm430, %v2206, 0
    %2209 = vmatprep.subr.mxu0 0.0
    %2210 = vmatpush1.msra.mxu0 0.0
    %2211 = vmatprep.subr.mxu0 0.0
    %2212 = vmatpush1.msra.mxu0 0.0
    %2213 = vmatprep.subr.mxu0 0.0
    %2214 = vmatpush1.msra.mxu0 0.0
    %2215 = vmatprep.subr.mxu0 0.0
    %2216 = vmatpush1.msra.mxu0 0.0
    %2217 = vmatprep.subr.mxu0 0.0
    %2218 = vmatpush1.msra.mxu0 0.0
    %2219 = vmatprep.subr.mxu0 0.0
    %2220 = vmatpush1.msra.mxu0 0.0
    %2221 = vmatprep.subr.mxu0 0.0
    %2222 = vmatpush1.msra.mxu0 0.0
    %2223 = vmatprep.subr.mxu0 0.0
    %2224 = vmatpush1.msra.mxu0 0.0
    %2225 = vmatprep.subr.mxu0 0.0
    %2226 = vmatpush1.msra.mxu0 0.0
    %2227 = vmatprep.subr.mxu0 0.0
    %2228 = vmatpush1.msra.mxu0 0.0
    %2229 = vmatprep.subr.mxu0 0.0
    %2230 = vmatpush1.msra.mxu0 0.0
    %2231 = vmatprep.subr.mxu0 0.0
    %2232 = vmatpush1.msra.mxu0 0.0
    %2233 = vmatprep.subr.mxu0 0.0
    %2234 = vmatpush1.msra.mxu0 %v1450
    %2235 = vmatprep.subr.mxu0 0.0
    %2236 = vmatpush1.msra.mxu0 %v1449
    %2237 = vmatprep.subr.mxu0 0.0
    %2238 = vmatpush1.msra.mxu0 %v1448
    %2239 = vmatprep.subr.mxu0 0.0
    %2240 = vmatpush1.msra.mxu0 %v1447
    %2241 = vmatprep.subr.mxu0 0.0
    %2242 = vmatpush2.msra.mxu0 0.0
    %2243 = vmatprep.subr.mxu0 0.0
    %2244 = vmatpush2.msra.mxu0 0.0
    %2245 = vmatprep.subr.mxu0 0.0
    %2246 = vmatpush2.msra.mxu0 0.0
    %2247 = vmatprep.subr.mxu0 0.0
    %2248 = vmatpush2.msra.mxu0 0.0
    %2249 = vmatprep.subr.mxu0 0.0
    %2250 = vmatpush2.msra.mxu0 0.0
    %2251 = vmatprep.subr.mxu0 0.0
    %2252 = vmatpush2.msra.mxu0 0.0
    %2253 = vmatprep.subr.mxu0 0.0
    %2254 = vmatpush2.msra.mxu0 0.0
    %2255 = vmatprep.subr.mxu0 0.0
    %2256 = vmatpush2.msra.mxu0 0.0
    %2257 = vmatprep.subr.mxu0 0.0
    %2258 = vmatpush2.msra.mxu0 0.0
    %2259 = vmatprep.subr.mxu0 0.0
    %2260 = vmatpush2.msra.mxu0 0.0
    %2261 = vmatprep.subr.mxu0 0.0
    %2262 = vmatpush2.msra.mxu0 0.0
    %2263 = vmatprep.subr.mxu0 0.0
    %2264 = vmatpush2.msra.mxu0 0.0
    %2265 = vmatprep.subr.mxu0 0.0
    %2266 = vmatpush2.msra.mxu0 0.0
    %2267 = vmatprep.subr.mxu0 0.0
    %2268 = vmatpush2.msra.mxu0 0.0
    %2269 = vmatprep.subr.mxu0 0.0
    %2270 = vmatpush2.msra.mxu0 0.0
    %2271 = vmatprep.subr.mxu0 0.0
    %2272 = vmatpush2.msra.mxu0 0.0
    %2273 = vmatprep.mubr.f32.mxu0 0.0
    %2274 = vmatmul.mubr.f32.gmra.mxu0 %v2207
    %v2275 = vpop.f32.mrf.mxu0
    %v2276 = vadd.f32 0.0, %v2275
    %v2277 = vpop.f32.mrf.mxu0
    %2278 = vdwg.mxu0
    %v2279 = vadd.f32 %v1557, %v2276
    %v2280 = vmul.f32 %v1647, %v2186
    %v2281 = vadd.f32 %v2279, %v2280
    %v2282 = vmul.f32 %v2281, 0.5
    %v2283 = vtanh.pop %v2282
    %v2284 = vadd.f32 %v2283, 1.0
    %v2285 = vmul.f32 %v2284, 0.5
    %v2286 = vmul.f32 %v1657, %v2186
    %2288 = vrot.lane.b32.xlu0 %v2286, 32
    %v2289 = vpop.permute.xlu0 %2288
    %v2291 = vadd.f32 %v2279, %v2289
    %v2292 = vmul.f32 %v2291, 0.5
    %v2293 = vtanh.pop %v2292
    %v2294 = vadd.f32 %v2293, 1.0
    %v2295 = vmul.f32 %v2294, 0.5
    %v2296 = vtanh.pop %v2279
    %v2297 = vmul.f32 %v2295, %v2183
    %2299 = vrot.lane.b32.xlu0 %v2296, 64
    %v2300 = vpop.permute.xlu0 %2299
    %v2302 = vmul.f32 %v2285, %v2300
    %2304 = vrot.lane.b32.xlu0 %v2302, 32
    %v2305 = vpop.permute.xlu0 %2304
    %v2307 = vadd.f32 %v2297, %v2305
    %2309 = vrot.lane.b32.xlu0 %v2307, 96
    %v2310 = vpop.permute.xlu0 %2309
    %v2312 = vmul.f32 %v1687, %v2310
    %2314 = vrot.lane.b32.xlu0 %v2312, 96
    %v2315 = vpop.permute.xlu0 %2314
    %v2317 = vadd.f32 %v2279, %v2315
    %v2318 = vmul.f32 %v2317, 0.5
    %v2319 = vtanh.pop %v2318
    %v2320 = vadd.f32 %v2319, 1.0
    %v2321 = vmul.f32 %v2320, 0.5
    %v2322 = vtanh.pop %v2307
    %2324 = vrot.lane.b32.xlu0 %v2322, 64
    %v2325 = vpop.permute.xlu0 %2324
    %v2327 = vmul.f32 %v2321, %v2325
    %2329 = vrot.lane.b32.xlu0 %v2327, 32
    %v2330 = vpop.permute.xlu0 %2329
    %v2331 = vsel %vm430, %v2330, 0
    %2333 = vmatprep.subr.mxu0 0.0
    %2334 = vmatpush1.msra.mxu0 0.0
    %2335 = vmatprep.subr.mxu0 0.0
    %2336 = vmatpush1.msra.mxu0 0.0
    %2337 = vmatprep.subr.mxu0 0.0
    %2338 = vmatpush1.msra.mxu0 0.0
    %2339 = vmatprep.subr.mxu0 0.0
    %2340 = vmatpush1.msra.mxu0 0.0
    %2341 = vmatprep.subr.mxu0 0.0
    %2342 = vmatpush1.msra.mxu0 0.0
    %2343 = vmatprep.subr.mxu0 0.0
    %2344 = vmatpush1.msra.mxu0 0.0
    %2345 = vmatprep.subr.mxu0 0.0
    %2346 = vmatpush1.msra.mxu0 0.0
    %2347 = vmatprep.subr.mxu0 0.0
    %2348 = vmatpush1.msra.mxu0 0.0
    %2349 = vmatprep.subr.mxu0 0.0
    %2350 = vmatpush1.msra.mxu0 0.0
    %2351 = vmatprep.subr.mxu0 0.0
    %2352 = vmatpush1.msra.mxu0 0.0
    %2353 = vmatprep.subr.mxu0 0.0
    %2354 = vmatpush1.msra.mxu0 0.0
    %2355 = vmatprep.subr.mxu0 0.0
    %2356 = vmatpush1.msra.mxu0 0.0
    %2357 = vmatprep.subr.mxu0 0.0
    %2358 = vmatpush1.msra.mxu0 %v1450
    %2359 = vmatprep.subr.mxu0 0.0
    %2360 = vmatpush1.msra.mxu0 %v1449
    %2361 = vmatprep.subr.mxu0 0.0
    %2362 = vmatpush1.msra.mxu0 %v1448
    %2363 = vmatprep.subr.mxu0 0.0
    %2364 = vmatpush1.msra.mxu0 %v1447
    %2365 = vmatprep.subr.mxu0 0.0
    %2366 = vmatpush2.msra.mxu0 0.0
    %2367 = vmatprep.subr.mxu0 0.0
    %2368 = vmatpush2.msra.mxu0 0.0
    %2369 = vmatprep.subr.mxu0 0.0
    %2370 = vmatpush2.msra.mxu0 0.0
    %2371 = vmatprep.subr.mxu0 0.0
    %2372 = vmatpush2.msra.mxu0 0.0
    %2373 = vmatprep.subr.mxu0 0.0
    %2374 = vmatpush2.msra.mxu0 0.0
    %2375 = vmatprep.subr.mxu0 0.0
    %2376 = vmatpush2.msra.mxu0 0.0
    %2377 = vmatprep.subr.mxu0 0.0
    %2378 = vmatpush2.msra.mxu0 0.0
    %2379 = vmatprep.subr.mxu0 0.0
    %2380 = vmatpush2.msra.mxu0 0.0
    %2381 = vmatprep.subr.mxu0 0.0
    %2382 = vmatpush2.msra.mxu0 0.0
    %2383 = vmatprep.subr.mxu0 0.0
    %2384 = vmatpush2.msra.mxu0 0.0
    %2385 = vmatprep.subr.mxu0 0.0
    %2386 = vmatpush2.msra.mxu0 0.0
    %2387 = vmatprep.subr.mxu0 0.0
    %2388 = vmatpush2.msra.mxu0 0.0
    %2389 = vmatprep.subr.mxu0 0.0
    %2390 = vmatpush2.msra.mxu0 0.0
    %2391 = vmatprep.subr.mxu0 0.0
    %2392 = vmatpush2.msra.mxu0 0.0
    %2393 = vmatprep.subr.mxu0 0.0
    %2394 = vmatpush2.msra.mxu0 0.0
    %2395 = vmatprep.subr.mxu0 0.0
    %2396 = vmatpush2.msra.mxu0 0.0
    %2397 = vmatprep.mubr.f32.mxu0 0.0
    %2398 = vmatmul.mubr.f32.gmra.mxu0 %v2331
    %v2399 = vpop.f32.mrf.mxu0
    %v2400 = vadd.f32 0.0, %v2399
    %v2401 = vpop.f32.mrf.mxu0
    %2402 = vdwg.mxu0
    %v2403 = vadd.f32 %v1562, %v2400
    %v2404 = vmul.f32 %v1647, %v2310
    %v2405 = vadd.f32 %v2403, %v2404
    %v2406 = vmul.f32 %v2405, 0.5
    %v2407 = vtanh.pop %v2406
    %v2408 = vadd.f32 %v2407, 1.0
    %v2409 = vmul.f32 %v2408, 0.5
    %v2410 = vmul.f32 %v1657, %v2310
    %2412 = vrot.lane.b32.xlu0 %v2410, 32
    %v2413 = vpop.permute.xlu0 %2412
    %v2415 = vadd.f32 %v2403, %v2413
    %v2416 = vmul.f32 %v2415, 0.5
    %v2417 = vtanh.pop %v2416
    %v2418 = vadd.f32 %v2417, 1.0
    %v2419 = vmul.f32 %v2418, 0.5
    %v2420 = vtanh.pop %v2403
    %v2421 = vmul.f32 %v2419, %v2307
    %2423 = vrot.lane.b32.xlu0 %v2420, 64
    %v2424 = vpop.permute.xlu0 %2423
    %v2426 = vmul.f32 %v2409, %v2424
    %2428 = vrot.lane.b32.xlu0 %v2426, 32
    %v2429 = vpop.permute.xlu0 %2428
    %v2431 = vadd.f32 %v2421, %v2429
    %2433 = vrot.lane.b32.xlu0 %v2431, 96
    %v2434 = vpop.permute.xlu0 %2433
    %v2436 = vmul.f32 %v1687, %v2434
    %2438 = vrot.lane.b32.xlu0 %v2436, 96
    %v2439 = vpop.permute.xlu0 %2438
    %v2441 = vadd.f32 %v2403, %v2439
    %v2442 = vmul.f32 %v2441, 0.5
    %v2443 = vtanh.pop %v2442
    %v2444 = vadd.f32 %v2443, 1.0
    %v2445 = vmul.f32 %v2444, 0.5
    %v2446 = vtanh.pop %v2431
    %2448 = vrot.lane.b32.xlu0 %v2446, 64
    %v2449 = vpop.permute.xlu0 %2448
    %v2451 = vmul.f32 %v2445, %v2449
    %2453 = vrot.lane.b32.xlu0 %v2451, 32
    %v2454 = vpop.permute.xlu0 %2453
    %v2455 = vsel %vm430, %v2454, 0
    %2457 = vmatprep.subr.mxu0 0.0
    %2458 = vmatpush1.msra.mxu0 0.0
    %2459 = vmatprep.subr.mxu0 0.0
    %2460 = vmatpush1.msra.mxu0 0.0
    %2461 = vmatprep.subr.mxu0 0.0
    %2462 = vmatpush1.msra.mxu0 0.0
    %2463 = vmatprep.subr.mxu0 0.0
    %2464 = vmatpush1.msra.mxu0 0.0
    %2465 = vmatprep.subr.mxu0 0.0
    %2466 = vmatpush1.msra.mxu0 0.0
    %2467 = vmatprep.subr.mxu0 0.0
    %2468 = vmatpush1.msra.mxu0 0.0
    %2469 = vmatprep.subr.mxu0 0.0
    %2470 = vmatpush1.msra.mxu0 0.0
    %2471 = vmatprep.subr.mxu0 0.0
    %2472 = vmatpush1.msra.mxu0 0.0
    %2473 = vmatprep.subr.mxu0 0.0
    %2474 = vmatpush1.msra.mxu0 0.0
    %2475 = vmatprep.subr.mxu0 0.0
    %2476 = vmatpush1.msra.mxu0 0.0
    %2477 = vmatprep.subr.mxu0 0.0
    %2478 = vmatpush1.msra.mxu0 0.0
    %2479 = vmatprep.subr.mxu0 0.0
    %2480 = vmatpush1.msra.mxu0 0.0
    %2481 = vmatprep.subr.mxu0 0.0
    %2482 = vmatpush1.msra.mxu0 %v1450
    %2483 = vmatprep.subr.mxu0 0.0
    %2484 = vmatpush1.msra.mxu0 %v1449
    %2485 = vmatprep.subr.mxu0 0.0
    %2486 = vmatpush1.msra.mxu0 %v1448
    %2487 = vmatprep.subr.mxu0 0.0
    %2488 = vmatpush1.msra.mxu0 %v1447
    %2489 = vmatprep.subr.mxu0 0.0
    %2490 = vmatpush2.msra.mxu0 0.0
    %2491 = vmatprep.subr.mxu0 0.0
    %2492 = vmatpush2.msra.mxu0 0.0
    %2493 = vmatprep.subr.mxu0 0.0
    %2494 = vmatpush2.msra.mxu0 0.0
    %2495 = vmatprep.subr.mxu0 0.0
    %2496 = vmatpush2.msra.mxu0 0.0
    %2497 = vmatprep.subr.mxu0 0.0
    %2498 = vmatpush2.msra.mxu0 0.0
    %2499 = vmatprep.subr.mxu0 0.0
    %2500 = vmatpush2.msra.mxu0 0.0
    %2501 = vmatprep.subr.mxu0 0.0
    %2502 = vmatpush2.msra.mxu0 0.0
    %2503 = vmatprep.subr.mxu0 0.0
    %2504 = vmatpush2.msra.mxu0 0.0
    %2505 = vmatprep.subr.mxu0 0.0
    %2506 = vmatpush2.msra.mxu0 0.0
    %2507 = vmatprep.subr.mxu0 0.0
    %2508 = vmatpush2.msra.mxu0 0.0
    %2509 = vmatprep.subr.mxu0 0.0
    %2510 = vmatpush2.msra.mxu0 0.0
    %2511 = vmatprep.subr.mxu0 0.0
    %2512 = vmatpush2.msra.mxu0 0.0
    %2513 = vmatprep.subr.mxu0 0.0
    %2514 = vmatpush2.msra.mxu0 0.0
    %2515 = vmatprep.subr.mxu0 0.0
    %2516 = vmatpush2.msra.mxu0 0.0
    %2517 = vmatprep.subr.mxu0 0.0
    %2518 = vmatpush2.msra.mxu0 0.0
    %2519 = vmatprep.subr.mxu0 0.0
    %2520 = vmatpush2.msra.mxu0 0.0
    %2521 = vmatprep.mubr.f32.mxu0 0.0
    %2522 = vmatmul.mubr.f32.gmra.mxu0 %v2455
    %v2523 = vpop.f32.mrf.mxu0
    %v2524 = vadd.f32 0.0, %v2523
    %v2525 = vpop.f32.mrf.mxu0
    %2526 = vdwg.mxu0
    %v2527 = vadd.f32 %v1567, %v2524
    %v2528 = vmul.f32 %v1647, %v2434
    %v2529 = vadd.f32 %v2527, %v2528
    %v2530 = vmul.f32 %v2529, 0.5
    %v2531 = vtanh.pop %v2530
    %v2532 = vadd.f32 %v2531, 1.0
    %v2533 = vmul.f32 %v2532, 0.5
    %v2534 = vmul.f32 %v1657, %v2434
    %2536 = vrot.lane.b32.xlu0 %v2534, 32
    %v2537 = vpop.permute.xlu0 %2536
    %v2539 = vadd.f32 %v2527, %v2537
    %v2540 = vmul.f32 %v2539, 0.5
    %v2541 = vtanh.pop %v2540
    %v2542 = vadd.f32 %v2541, 1.0
    %v2543 = vmul.f32 %v2542, 0.5
    %v2544 = vtanh.pop %v2527
    %v2545 = vmul.f32 %v2543, %v2431
    %2547 = vrot.lane.b32.xlu0 %v2544, 64
    %v2548 = vpop.permute.xlu0 %2547
    %v2550 = vmul.f32 %v2533, %v2548
    %2552 = vrot.lane.b32.xlu0 %v2550, 32
    %v2553 = vpop.permute.xlu0 %2552
    %v2555 = vadd.f32 %v2545, %v2553
    %2557 = vrot.lane.b32.xlu0 %v2555, 96
    %v2558 = vpop.permute.xlu0 %2557
    %v2560 = vmul.f32 %v1687, %v2558
    %2562 = vrot.lane.b32.xlu0 %v2560, 96
    %v2563 = vpop.permute.xlu0 %2562
    %v2565 = vadd.f32 %v2527, %v2563
    %v2566 = vmul.f32 %v2565, 0.5
    %v2567 = vtanh.pop %v2566
    %v2568 = vadd.f32 %v2567, 1.0
    %v2569 = vmul.f32 %v2568, 0.5
    %v2570 = vtanh.pop %v2555
    %2572 = vrot.lane.b32.xlu0 %v2570, 64
    %v2573 = vpop.permute.xlu0 %2572
    %v2575 = vmul.f32 %v2569, %v2573
    %2577 = vrot.lane.b32.xlu0 %v2575, 32
    %v2578 = vpop.permute.xlu0 %2577
    %2580 = vst.msk [vmem:[%s1451] sm:$0xff] %vm430, %v2578
    %2581 = vst.msk [vmem:[%s1453] sm:$0xff] %vm430, %v2558
    %2583 = vrot.lane.b32.xlu0 %v1831, 64
    %v2584 = vpop.permute.xlu0 %2583
    %2586 = vrot.lane.b32.xlu0 %v1955, 96
    %v2587 = vpop.permute.xlu0 %2586
    %2590 = vrot.lane.b32.xlu0 %v2327, 64
    %v2591 = vpop.permute.xlu0 %2590
    %2593 = vrot.lane.b32.xlu0 %v2451, 96
    %v2594 = vpop.permute.xlu0 %2593
    %v2596 = vsel %vm430, %v1710, %v2584
    %vm2597 = vcmask 523264
    %v2598 = vsel %vm2597, %v2596, %v2587
    %vm2599 = vcmask 785408
    %v2600 = vsel %vm2599, %v2598, %v2079
    %v2601 = vsel %vm430, %v2206, %v2591
    %v2602 = vsel %vm2597, %v2601, %v2594
    %v2603 = vsel %vm2599, %v2602, %v2575
    %2604 = vst [vmem:[#allocation16] sm:$0xff] %v2600
    %2605 = vst [vmem:[#allocation16 + $0x8] sm:$0xff] %v2603
    // Predicated region
    $region74: #{tpu_custom_call.1} parent=1 // pred_check
      _
    $region75: #{tpu_custom_call.1} parent=1 // pred_check_branch
      %2607 = sbr.rel (0) target = $region77
    $region76: #{tpu_custom_call.1} parent=1 // pred_region
      %s2609 = ssub.s32 256, 256
      %2610 = vsyncadd [#allocation4], %s2609
      %s2612 = sshll.u32 [#allocation16], 4
      %s2613 = int_to_ptr.vmem [resolvable:$true] %s2612
      %2615 = dma.vmem_to_hbm [thread:$0]  %s2613, 256, %s9, [#allocation4]
    $region77: #{tpu_custom_call.1} parent=1 // pred_fallthru
      _
    // Predicated region
    $region78: #{tpu_custom_call.1} parent=1 // pred_check
      _
    $region79: #{tpu_custom_call.1} parent=1 // pred_check_branch
      %2617 = sbr.rel (0) target = $region81
    $region80: #{tpu_custom_call.1} parent=1 // pred_region
      %s2619 = ssub.s32 256, 256
      %2620 = vsyncadd [#allocation18], %s2619
      %s2621 = sshll.u32 [#allocation17], 4
      %s2622 = int_to_ptr.vmem [resolvable:$true] %s2621
      %2627 = dma.vmem_to_hbm [thread:$0]  %s2622, 256, %s10, [#allocation18], 128, 128, 8
    $region81: #{tpu_custom_call.1} parent=1 // pred_fallthru
      _
    // Predicated region
    $region82: #{tpu_custom_call.1} parent=1 // pred_check
      _
    $region83: #{tpu_custom_call.1} parent=1 // pred_check_branch
      %2629 = sbr.rel (0) target = $region85
    $region84: #{tpu_custom_call.1} parent=1 // pred_region
      %s2631 = ssub.s32 256, 256
      %2632 = vsyncadd [#allocation18], %s2631
      %s2633 = sshll.u32 [#allocation19], 4
      %s2634 = int_to_ptr.vmem [resolvable:$true] %s2633
      %2639 = dma.vmem_to_hbm [thread:$0]  %s2634, 256, %s11, [#allocation18], 128, 128, 8
    $region85: #{tpu_custom_call.1} parent=1 // pred_fallthru
      _
    // Predicated region
    $region86: #{tpu_custom_call.1} parent=1 // pred_check
      _
    $region87: #{tpu_custom_call.1} parent=1 // pred_check_branch
      %2641 = sbr.rel (0) target = $region89
    $region88: #{tpu_custom_call.1} parent=1 // pred_region
      %2642 = dma.done [#allocation4], 256
    $region89: #{tpu_custom_call.1} parent=1 // pred_fallthru
      _
    // Predicated region
    $region90: #{tpu_custom_call.1} parent=1 // pred_check
      _
    $region91: #{tpu_custom_call.1} parent=1 // pred_check_branch
      %2644 = sbr.rel (0) target = $region93
    $region92: #{tpu_custom_call.1} parent=1 // pred_region
      %2645 = dma.done [#allocation18], 256
    $region93: #{tpu_custom_call.1} parent=1 // pred_fallthru
      _
    // Predicated region
    $region94: #{tpu_custom_call.1} parent=1 // pred_check
      _
    $region95: #{tpu_custom_call.1} parent=1 // pred_check_branch
      %2647 = sbr.rel (0) target = $region97
    $region96: #{tpu_custom_call.1} parent=1 // pred_region
      %2648 = dma.done [#allocation18], 256
    $region97: #{tpu_custom_call.1} parent=1 // pred_fallthru
      _
    %2649 = vsyncpa [#allocation3], 1
    %2650 = vsyncpa [#allocation6], 1
    %2651 = vsyncpa [#allocation9], 1
    %2652 = vsyncpa [#allocation12], 1
    %2653 = vsyncpa [#allocation15], 1
    %2654 = vsyncpa [#allocation4], 1
    %2655 = vsyncpa [#allocation18], 1

</llo_original>
